<compile_context>
chip_gen: v7x
topology: tpu7x:2x2x1
jax: 0.10.0
libtpu: 0.0.40
codegen_flags: <defaults>
</compile_context>

<pallas_src>
import jax
import jax.numpy as jnp
from jax import lax
from jax.experimental import pallas as pl
from jax.experimental.pallas import tpu as pltpu


def _output_block_kernel(x_ref, w_ref, b_ref, o_ref, xpad_ref):
    """ReflectionPad2d(1) + Conv3x3(no pad) + Tanh for one batch element.

    x_ref:    (1, Cin, H, W)      VMEM   one batch element (NCHW slice)
    w_ref:    (Cout*Cin*3*3,)     SMEM   OIHW conv weights, flattened
    b_ref:    (Cout,)             SMEM   bias (zeros when use_bias=False)
    o_ref:    (1, Cout, H*W)      VMEM   lane-dense NCHW-flattened output
    xpad_ref: (Cin, H+2, W+2)     VMEM   scratch: reflection-padded input
    """
    _, Cin, H, W = x_ref.shape
    Cout = o_ref.shape[1]
    HW = H * W

    x = x_ref[0]  # (Cin, H, W)

    # ---- Reflection pad by 1 (nn.ReflectionPad2d(1)) into the VMEM scratch.
    # Every element of the scratch is overwritten each grid step.
    xpad_ref[:, 1:H + 1, 1:W + 1] = x                              # interior
    xpad_ref[:, 0:1, 1:W + 1] = x[:, 1:2, :]                       # top    <- row 1
    xpad_ref[:, H + 1:H + 2, 1:W + 1] = x[:, H - 2:H - 1, :]       # bottom <- row H-2
    # Columns after rows so the corners reflect in both dims (matches PyTorch).
    xpad_ref[:, :, 0:1] = xpad_ref[:, :, 2:3]                      # left   <- col 1 of x
    xpad_ref[:, :, W + 1:W + 2] = xpad_ref[:, :, W - 1:W]          # right  <- col W-2 of x

    # ---- Load the 9 shifted tap planes once, flattened lane-dense (1, H*W).
    # taps[dy*3+dx][ci] has shape (1, HW); reused for every output channel.
    taps = []
    for dy in range(3):
        for dx in range(3):
            t = xpad_ref[:, dy:dy + H, dx:dx + W].reshape(Cin, HW)
            taps.append([t[ci:ci + 1, :] for ci in range(Cin)])

    # ---- Conv as VPU broadcast-FMAs (scalar SMEM weight x (1, HW) slab),
    # then Tanh (EUP) and a lane-dense store per output channel.
    for co in range(Cout):
        acc = jnp.zeros((1, HW), jnp.float32) + b_ref[co]
        for dy in range(3):
            for dx in range(3):
                tap = taps[dy * 3 + dx]
                for ci in range(Cin):
                    wv = w_ref[((co * Cin + ci) * 3 + dy) * 3 + dx]
                    acc = acc + wv * tap[ci]
        o_ref[:, co:co + 1, :] = jnp.tanh(acc).reshape(1, 1, HW)


def output_block_forward(x_nchw, w_oihw, bias=None):
    """Forward pass of _OutputBlock. Input/output are NCHW like PyTorch.

    x_nchw: (N, Cin, H, W)
    w_oihw: (Cout, Cin, 3, 3)   (PyTorch Conv2d weight layout)
    bias:   (Cout,) or None     (None == use_bias=False, the module default)
    """
    # TODO(synk): only kernel_size=3 (the module default) is implemented; other
    # odd kernel sizes would need a generalized in-kernel reflection pad.
    N, Cin, H, W = x_nchw.shape
    Cout = w_oihw.shape[0]
    assert w_oihw.shape == (Cout, Cin, 3, 3), w_oihw.shape
    HW = H * W

    w_flat = w_oihw.reshape(-1).astype(jnp.float32)
    b = (jnp.zeros((Cout,), jnp.float32) if bias is None
         else bias.astype(jnp.float32))

    out_flat = pl.pallas_call(
        _output_block_kernel,
        out_shape=jax.ShapeDtypeStruct((N, Cout, HW), jnp.float32),
        grid=(N,),
        in_specs=[
            pl.BlockSpec((1, Cin, H, W), lambda n: (n, 0, 0, 0)),
            pl.BlockSpec(memory_space=pltpu.MemorySpace.SMEM),   # weights
            pl.BlockSpec(memory_space=pltpu.MemorySpace.SMEM),   # bias
        ],
        out_specs=pl.BlockSpec((1, Cout, HW), lambda n: (n, 0, 0)),
        scratch_shapes=[pltpu.VMEM((Cin, H + 2, W + 2), jnp.float32)],
        compiler_params=pltpu.CompilerParams(
            dimension_semantics=("parallel",)),
    )(x_nchw.astype(jnp.float32), w_flat, b)

    return out_flat.reshape(N, Cout, H, W)  # free reshape, already NCHW order


# ----------------------------- pure-JAX reference ----------------------------

def output_block_reference(x_nchw, w_oihw, bias=None):
    xp = jnp.pad(x_nchw, ((0, 0), (0, 0), (1, 1), (1, 1)), mode="reflect")
    y = lax.conv_general_dilated(
        xp, w_oihw, window_strides=(1, 1), padding="VALID",
        dimension_numbers=("NCHW", "OIHW", "NCHW"))
    if bias is not None:
        y = y + bias.reshape(1, -1, 1, 1)
    return jnp.tanh(y)


# --------------------------------- main ---------------------------------------

if __name__ == "__main__":
    # Small shapes consistent with the module: input_nc=4, output_nc=3, 16x16.
    N, Cin, Cout, H, W = 2, 4, 3, 16, 16

    key = jax.random.PRNGKey(0)
    k_x, k_w = jax.random.split(key)

    x = jax.random.normal(k_x, (N, Cin, H, W), jnp.float32)
    w = 0.3 * jax.random.normal(k_w, (Cout, Cin, 3, 3), jnp.float32)
    # use_bias=False is the module default -> no bias term.

    out = jax.block_until_ready(output_block_forward(x, w))
    ref = jax.block_until_ready(output_block_reference(x, w))

    assert out.shape == (N, Cout, H, W), out.shape
    assert jnp.allclose(out, ref, rtol=1e-4, atol=1e-4), (
        float(jnp.max(jnp.abs(out - ref))))

    print("KERNEL_OK")
</pallas_src>

<mosaic_0001>
module attributes {stable_mosaic.version = 11 : i64} {
  func.func @_output_block_kernel(%arg0: i32, %arg1: memref<1x4x16x16xf32, #tpu.memory_space<vmem>>, %arg2: memref<108xf32, #tpu.memory_space<smem>>, %arg3: memref<3xf32, #tpu.memory_space<smem>>, %arg4: memref<1x3x256xf32, #tpu.memory_space<vmem>>, %arg5: memref<4x18x18xf32, #tpu.memory_space<vmem>>) attributes {dimension_semantics = [#tpu.dimension_semantics<parallel>], iteration_bounds = array<i64: 2>, scalar_prefetch = 0 : i64, scratch_operands = 1 : i64, tpu.core_type = #tpu.core_type<tc>, window_params = [{transform_indices = @transform_0, window_bounds = array<i64: 1, 4, 16, 16>}, {transform_indices = @transform_1, window_bounds = array<i64: 108>}, {transform_indices = @transform_2, window_bounds = array<i64: 3>}, {transform_indices = @transform_3, window_bounds = array<i64: 1, 3, 256>}]} {
    %c0 = arith.constant 0 : index
    %c0_0 = arith.constant 0 : index
    %c0_1 = arith.constant 0 : index
    %c0_2 = arith.constant 0 : index
    %0 = vector.load %arg1[%c0, %c0_0, %c0_1, %c0_2] : memref<1x4x16x16xf32, #tpu.memory_space<vmem>>, vector<1x4x16x16xf32>
    %1 = vector.shape_cast %0 : vector<1x4x16x16xf32> to vector<4x16x16xf32>
    %c0_3 = arith.constant 0 : index
    %c1 = arith.constant 1 : index
    %c1_4 = arith.constant 1 : index
    %2 = vector.load %arg5[%c0_3, %c1, %c1_4] : memref<4x18x18xf32, #tpu.memory_space<vmem>>, vector<4x16x16xf32>
    tpu.vector_store %arg5[%c0_3, %c1, %c1_4], %1 {strides = array<i32>} : memref<4x18x18xf32, #tpu.memory_space<vmem>>, vector<4x16x16xf32>,
    %3 = vector.extract_strided_slice %1 {offsets = [0, 1, 0], sizes = [4, 1, 16], strides = [1, 1, 1]} : vector<4x16x16xf32> to vector<4x1x16xf32>
    %c0_5 = arith.constant 0 : index
    %c0_6 = arith.constant 0 : index
    %c1_7 = arith.constant 1 : index
    %4 = vector.load %arg5[%c0_5, %c0_6, %c1_7] : memref<4x18x18xf32, #tpu.memory_space<vmem>>, vector<4x1x16xf32>
    tpu.vector_store %arg5[%c0_5, %c0_6, %c1_7], %3 {strides = array<i32>} : memref<4x18x18xf32, #tpu.memory_space<vmem>>, vector<4x1x16xf32>,
    %5 = vector.extract_strided_slice %1 {offsets = [0, 14, 0], sizes = [4, 1, 16], strides = [1, 1, 1]} : vector<4x16x16xf32> to vector<4x1x16xf32>
    %c0_8 = arith.constant 0 : index
    %c17 = arith.constant 17 : index
    %c1_9 = arith.constant 1 : index
    %6 = vector.load %arg5[%c0_8, %c17, %c1_9] : memref<4x18x18xf32, #tpu.memory_space<vmem>>, vector<4x1x16xf32>
    tpu.vector_store %arg5[%c0_8, %c17, %c1_9], %5 {strides = array<i32>} : memref<4x18x18xf32, #tpu.memory_space<vmem>>, vector<4x1x16xf32>,
    %c0_10 = arith.constant 0 : index
    %c0_11 = arith.constant 0 : index
    %c2 = arith.constant 2 : index
    %7 = vector.load %arg5[%c0_10, %c0_11, %c2] : memref<4x18x18xf32, #tpu.memory_space<vmem>>, vector<4x18x1xf32>
    %c0_12 = arith.constant 0 : index
    %c0_13 = arith.constant 0 : index
    %c0_14 = arith.constant 0 : index
    %8 = vector.load %arg5[%c0_12, %c0_13, %c0_14] : memref<4x18x18xf32, #tpu.memory_space<vmem>>, vector<4x18x1xf32>
    tpu.vector_store %arg5[%c0_12, %c0_13, %c0_14], %7 {strides = array<i32>} : memref<4x18x18xf32, #tpu.memory_space<vmem>>, vector<4x18x1xf32>,
    %c0_15 = arith.constant 0 : index
    %c0_16 = arith.constant 0 : index
    %c15 = arith.constant 15 : index
    %9 = vector.load %arg5[%c0_15, %c0_16, %c15] : memref<4x18x18xf32, #tpu.memory_space<vmem>>, vector<4x18x1xf32>
    %c0_17 = arith.constant 0 : index
    %c0_18 = arith.constant 0 : index
    %c17_19 = arith.constant 17 : index
    %10 = vector.load %arg5[%c0_17, %c0_18, %c17_19] : memref<4x18x18xf32, #tpu.memory_space<vmem>>, vector<4x18x1xf32>
    tpu.vector_store %arg5[%c0_17, %c0_18, %c17_19], %9 {strides = array<i32>} : memref<4x18x18xf32, #tpu.memory_space<vmem>>, vector<4x18x1xf32>,
    %c0_20 = arith.constant 0 : index
    %c0_21 = arith.constant 0 : index
    %c0_22 = arith.constant 0 : index
    %11 = vector.load %arg5[%c0_20, %c0_21, %c0_22] : memref<4x18x18xf32, #tpu.memory_space<vmem>>, vector<4x16x16xf32>
    %12 = vector.shape_cast %11 : vector<4x16x16xf32> to vector<4x256xf32>
    %13 = vector.extract_strided_slice %12 {offsets = [0, 0], sizes = [1, 256], strides = [1, 1]} : vector<4x256xf32> to vector<1x256xf32>
    %14 = vector.extract_strided_slice %12 {offsets = [1, 0], sizes = [1, 256], strides = [1, 1]} : vector<4x256xf32> to vector<1x256xf32>
    %15 = vector.extract_strided_slice %12 {offsets = [2, 0], sizes = [1, 256], strides = [1, 1]} : vector<4x256xf32> to vector<1x256xf32>
    %16 = vector.extract_strided_slice %12 {offsets = [3, 0], sizes = [1, 256], strides = [1, 1]} : vector<4x256xf32> to vector<1x256xf32>
    %c0_23 = arith.constant 0 : index
    %c0_24 = arith.constant 0 : index
    %c1_25 = arith.constant 1 : index
    %17 = vector.load %arg5[%c0_23, %c0_24, %c1_25] : memref<4x18x18xf32, #tpu.memory_space<vmem>>, vector<4x16x16xf32>
    %18 = vector.shape_cast %17 : vector<4x16x16xf32> to vector<4x256xf32>
    %19 = vector.extract_strided_slice %18 {offsets = [0, 0], sizes = [1, 256], strides = [1, 1]} : vector<4x256xf32> to vector<1x256xf32>
    %20 = vector.extract_strided_slice %18 {offsets = [1, 0], sizes = [1, 256], strides = [1, 1]} : vector<4x256xf32> to vector<1x256xf32>
    %21 = vector.extract_strided_slice %18 {offsets = [2, 0], sizes = [1, 256], strides = [1, 1]} : vector<4x256xf32> to vector<1x256xf32>
    %22 = vector.extract_strided_slice %18 {offsets = [3, 0], sizes = [1, 256], strides = [1, 1]} : vector<4x256xf32> to vector<1x256xf32>
    %c0_26 = arith.constant 0 : index
    %c0_27 = arith.constant 0 : index
    %c2_28 = arith.constant 2 : index
    %23 = vector.load %arg5[%c0_26, %c0_27, %c2_28] : memref<4x18x18xf32, #tpu.memory_space<vmem>>, vector<4x16x16xf32>
    %24 = vector.shape_cast %23 : vector<4x16x16xf32> to vector<4x256xf32>
    %25 = vector.extract_strided_slice %24 {offsets = [0, 0], sizes = [1, 256], strides = [1, 1]} : vector<4x256xf32> to vector<1x256xf32>
    %26 = vector.extract_strided_slice %24 {offsets = [1, 0], sizes = [1, 256], strides = [1, 1]} : vector<4x256xf32> to vector<1x256xf32>
    %27 = vector.extract_strided_slice %24 {offsets = [2, 0], sizes = [1, 256], strides = [1, 1]} : vector<4x256xf32> to vector<1x256xf32>
    %28 = vector.extract_strided_slice %24 {offsets = [3, 0], sizes = [1, 256], strides = [1, 1]} : vector<4x256xf32> to vector<1x256xf32>
    %c0_29 = arith.constant 0 : index
    %c1_30 = arith.constant 1 : index
    %c0_31 = arith.constant 0 : index
    %29 = vector.load %arg5[%c0_29, %c1_30, %c0_31] : memref<4x18x18xf32, #tpu.memory_space<vmem>>, vector<4x16x16xf32>
    %30 = vector.shape_cast %29 : vector<4x16x16xf32> to vector<4x256xf32>
    %31 = vector.extract_strided_slice %30 {offsets = [0, 0], sizes = [1, 256], strides = [1, 1]} : vector<4x256xf32> to vector<1x256xf32>
    %32 = vector.extract_strided_slice %30 {offsets = [1, 0], sizes = [1, 256], strides = [1, 1]} : vector<4x256xf32> to vector<1x256xf32>
    %33 = vector.extract_strided_slice %30 {offsets = [2, 0], sizes = [1, 256], strides = [1, 1]} : vector<4x256xf32> to vector<1x256xf32>
    %34 = vector.extract_strided_slice %30 {offsets = [3, 0], sizes = [1, 256], strides = [1, 1]} : vector<4x256xf32> to vector<1x256xf32>
    %c0_32 = arith.constant 0 : index
    %c1_33 = arith.constant 1 : index
    %c1_34 = arith.constant 1 : index
    %35 = vector.load %arg5[%c0_32, %c1_33, %c1_34] : memref<4x18x18xf32, #tpu.memory_space<vmem>>, vector<4x16x16xf32>
    %36 = vector.shape_cast %35 : vector<4x16x16xf32> to vector<4x256xf32>
    %37 = vector.extract_strided_slice %36 {offsets = [0, 0], sizes = [1, 256], strides = [1, 1]} : vector<4x256xf32> to vector<1x256xf32>
    %38 = vector.extract_strided_slice %36 {offsets = [1, 0], sizes = [1, 256], strides = [1, 1]} : vector<4x256xf32> to vector<1x256xf32>
    %39 = vector.extract_strided_slice %36 {offsets = [2, 0], sizes = [1, 256], strides = [1, 1]} : vector<4x256xf32> to vector<1x256xf32>
    %40 = vector.extract_strided_slice %36 {offsets = [3, 0], sizes = [1, 256], strides = [1, 1]} : vector<4x256xf32> to vector<1x256xf32>
    %c0_35 = arith.constant 0 : index
    %c1_36 = arith.constant 1 : index
    %c2_37 = arith.constant 2 : index
    %41 = vector.load %arg5[%c0_35, %c1_36, %c2_37] : memref<4x18x18xf32, #tpu.memory_space<vmem>>, vector<4x16x16xf32>
    %42 = vector.shape_cast %41 : vector<4x16x16xf32> to vector<4x256xf32>
    %43 = vector.extract_strided_slice %42 {offsets = [0, 0], sizes = [1, 256], strides = [1, 1]} : vector<4x256xf32> to vector<1x256xf32>
    %44 = vector.extract_strided_slice %42 {offsets = [1, 0], sizes = [1, 256], strides = [1, 1]} : vector<4x256xf32> to vector<1x256xf32>
    %45 = vector.extract_strided_slice %42 {offsets = [2, 0], sizes = [1, 256], strides = [1, 1]} : vector<4x256xf32> to vector<1x256xf32>
    %46 = vector.extract_strided_slice %42 {offsets = [3, 0], sizes = [1, 256], strides = [1, 1]} : vector<4x256xf32> to vector<1x256xf32>
    %c0_38 = arith.constant 0 : index
    %c2_39 = arith.constant 2 : index
    %c0_40 = arith.constant 0 : index
    %47 = vector.load %arg5[%c0_38, %c2_39, %c0_40] : memref<4x18x18xf32, #tpu.memory_space<vmem>>, vector<4x16x16xf32>
    %48 = vector.shape_cast %47 : vector<4x16x16xf32> to vector<4x256xf32>
    %49 = vector.extract_strided_slice %48 {offsets = [0, 0], sizes = [1, 256], strides = [1, 1]} : vector<4x256xf32> to vector<1x256xf32>
    %50 = vector.extract_strided_slice %48 {offsets = [1, 0], sizes = [1, 256], strides = [1, 1]} : vector<4x256xf32> to vector<1x256xf32>
    %51 = vector.extract_strided_slice %48 {offsets = [2, 0], sizes = [1, 256], strides = [1, 1]} : vector<4x256xf32> to vector<1x256xf32>
    %52 = vector.extract_strided_slice %48 {offsets = [3, 0], sizes = [1, 256], strides = [1, 1]} : vector<4x256xf32> to vector<1x256xf32>
    %c0_41 = arith.constant 0 : index
    %c2_42 = arith.constant 2 : index
    %c1_43 = arith.constant 1 : index
    %53 = vector.load %arg5[%c0_41, %c2_42, %c1_43] : memref<4x18x18xf32, #tpu.memory_space<vmem>>, vector<4x16x16xf32>
    %54 = vector.shape_cast %53 : vector<4x16x16xf32> to vector<4x256xf32>
    %55 = vector.extract_strided_slice %54 {offsets = [0, 0], sizes = [1, 256], strides = [1, 1]} : vector<4x256xf32> to vector<1x256xf32>
    %56 = vector.extract_strided_slice %54 {offsets = [1, 0], sizes = [1, 256], strides = [1, 1]} : vector<4x256xf32> to vector<1x256xf32>
    %57 = vector.extract_strided_slice %54 {offsets = [2, 0], sizes = [1, 256], strides = [1, 1]} : vector<4x256xf32> to vector<1x256xf32>
    %58 = vector.extract_strided_slice %54 {offsets = [3, 0], sizes = [1, 256], strides = [1, 1]} : vector<4x256xf32> to vector<1x256xf32>
    %c0_44 = arith.constant 0 : index
    %c2_45 = arith.constant 2 : index
    %c2_46 = arith.constant 2 : index
    %59 = vector.load %arg5[%c0_44, %c2_45, %c2_46] : memref<4x18x18xf32, #tpu.memory_space<vmem>>, vector<4x16x16xf32>
    %60 = vector.shape_cast %59 : vector<4x16x16xf32> to vector<4x256xf32>
    %61 = vector.extract_strided_slice %60 {offsets = [0, 0], sizes = [1, 256], strides = [1, 1]} : vector<4x256xf32> to vector<1x256xf32>
    %62 = vector.extract_strided_slice %60 {offsets = [1, 0], sizes = [1, 256], strides = [1, 1]} : vector<4x256xf32> to vector<1x256xf32>
    %63 = vector.extract_strided_slice %60 {offsets = [2, 0], sizes = [1, 256], strides = [1, 1]} : vector<4x256xf32> to vector<1x256xf32>
    %64 = vector.extract_strided_slice %60 {offsets = [3, 0], sizes = [1, 256], strides = [1, 1]} : vector<4x256xf32> to vector<1x256xf32>
    %cst = arith.constant 0.000000e+00 : f32
    %65 = vector.broadcast %cst : f32 to vector<1x256xf32>
    %c0_47 = arith.constant 0 : index
    %66 = memref.load %arg3[%c0_47] : memref<3xf32, #tpu.memory_space<smem>>
    %67 = vector.broadcast %66 : f32 to vector<1x256xf32>
    %68 = arith.addf %65, %67 : vector<1x256xf32>
    %c0_48 = arith.constant 0 : index
    %69 = memref.load %arg2[%c0_48] : memref<108xf32, #tpu.memory_space<smem>>
    %70 = vector.broadcast %69 : f32 to vector<1x256xf32>
    %71 = arith.mulf %70, %13 : vector<1x256xf32>
    %72 = arith.addf %68, %71 : vector<1x256xf32>
    %c9 = arith.constant 9 : index
    %73 = memref.load %arg2[%c9] : memref<108xf32, #tpu.memory_space<smem>>
    %74 = vector.broadcast %73 : f32 to vector<1x256xf32>
    %75 = arith.mulf %74, %14 : vector<1x256xf32>
    %76 = arith.addf %72, %75 : vector<1x256xf32>
    %c18 = arith.constant 18 : index
    %77 = memref.load %arg2[%c18] : memref<108xf32, #tpu.memory_space<smem>>
    %78 = vector.broadcast %77 : f32 to vector<1x256xf32>
    %79 = arith.mulf %78, %15 : vector<1x256xf32>
    %80 = arith.addf %76, %79 : vector<1x256xf32>
    %c27 = arith.constant 27 : index
    %81 = memref.load %arg2[%c27] : memref<108xf32, #tpu.memory_space<smem>>
    %82 = vector.broadcast %81 : f32 to vector<1x256xf32>
    %83 = arith.mulf %82, %16 : vector<1x256xf32>
    %84 = arith.addf %80, %83 : vector<1x256xf32>
    %c1_49 = arith.constant 1 : index
    %85 = memref.load %arg2[%c1_49] : memref<108xf32, #tpu.memory_space<smem>>
    %86 = vector.broadcast %85 : f32 to vector<1x256xf32>
    %87 = arith.mulf %86, %19 : vector<1x256xf32>
    %88 = arith.addf %84, %87 : vector<1x256xf32>
    %c10 = arith.constant 10 : index
    %89 = memref.load %arg2[%c10] : memref<108xf32, #tpu.memory_space<smem>>
    %90 = vector.broadcast %89 : f32 to vector<1x256xf32>
    %91 = arith.mulf %90, %20 : vector<1x256xf32>
    %92 = arith.addf %88, %91 : vector<1x256xf32>
    %c19 = arith.constant 19 : index
    %93 = memref.load %arg2[%c19] : memref<108xf32, #tpu.memory_space<smem>>
    %94 = vector.broadcast %93 : f32 to vector<1x256xf32>
    %95 = arith.mulf %94, %21 : vector<1x256xf32>
    %96 = arith.addf %92, %95 : vector<1x256xf32>
    %c28 = arith.constant 28 : index
    %97 = memref.load %arg2[%c28] : memref<108xf32, #tpu.memory_space<smem>>
    %98 = vector.broadcast %97 : f32 to vector<1x256xf32>
    %99 = arith.mulf %98, %22 : vector<1x256xf32>
    %100 = arith.addf %96, %99 : vector<1x256xf32>
    %c2_50 = arith.constant 2 : index
    %101 = memref.load %arg2[%c2_50] : memref<108xf32, #tpu.memory_space<smem>>
    %102 = vector.broadcast %101 : f32 to vector<1x256xf32>
    %103 = arith.mulf %102, %25 : vector<1x256xf32>
    %104 = arith.addf %100, %103 : vector<1x256xf32>
    %c11 = arith.constant 11 : index
    %105 = memref.load %arg2[%c11] : memref<108xf32, #tpu.memory_space<smem>>
    %106 = vector.broadcast %105 : f32 to vector<1x256xf32>
    %107 = arith.mulf %106, %26 : vector<1x256xf32>
    %108 = arith.addf %104, %107 : vector<1x256xf32>
    %c20 = arith.constant 20 : index
    %109 = memref.load %arg2[%c20] : memref<108xf32, #tpu.memory_space<smem>>
    %110 = vector.broadcast %109 : f32 to vector<1x256xf32>
    %111 = arith.mulf %110, %27 : vector<1x256xf32>
    %112 = arith.addf %108, %111 : vector<1x256xf32>
    %c29 = arith.constant 29 : index
    %113 = memref.load %arg2[%c29] : memref<108xf32, #tpu.memory_space<smem>>
    %114 = vector.broadcast %113 : f32 to vector<1x256xf32>
    %115 = arith.mulf %114, %28 : vector<1x256xf32>
    %116 = arith.addf %112, %115 : vector<1x256xf32>
    %c3 = arith.constant 3 : index
    %117 = memref.load %arg2[%c3] : memref<108xf32, #tpu.memory_space<smem>>
    %118 = vector.broadcast %117 : f32 to vector<1x256xf32>
    %119 = arith.mulf %118, %31 : vector<1x256xf32>
    %120 = arith.addf %116, %119 : vector<1x256xf32>
    %c12 = arith.constant 12 : index
    %121 = memref.load %arg2[%c12] : memref<108xf32, #tpu.memory_space<smem>>
    %122 = vector.broadcast %121 : f32 to vector<1x256xf32>
    %123 = arith.mulf %122, %32 : vector<1x256xf32>
    %124 = arith.addf %120, %123 : vector<1x256xf32>
    %c21 = arith.constant 21 : index
    %125 = memref.load %arg2[%c21] : memref<108xf32, #tpu.memory_space<smem>>
    %126 = vector.broadcast %125 : f32 to vector<1x256xf32>
    %127 = arith.mulf %126, %33 : vector<1x256xf32>
    %128 = arith.addf %124, %127 : vector<1x256xf32>
    %c30 = arith.constant 30 : index
    %129 = memref.load %arg2[%c30] : memref<108xf32, #tpu.memory_space<smem>>
    %130 = vector.broadcast %129 : f32 to vector<1x256xf32>
    %131 = arith.mulf %130, %34 : vector<1x256xf32>
    %132 = arith.addf %128, %131 : vector<1x256xf32>
    %c4 = arith.constant 4 : index
    %133 = memref.load %arg2[%c4] : memref<108xf32, #tpu.memory_space<smem>>
    %134 = vector.broadcast %133 : f32 to vector<1x256xf32>
    %135 = arith.mulf %134, %37 : vector<1x256xf32>
    %136 = arith.addf %132, %135 : vector<1x256xf32>
    %c13 = arith.constant 13 : index
    %137 = memref.load %arg2[%c13] : memref<108xf32, #tpu.memory_space<smem>>
    %138 = vector.broadcast %137 : f32 to vector<1x256xf32>
    %139 = arith.mulf %138, %38 : vector<1x256xf32>
    %140 = arith.addf %136, %139 : vector<1x256xf32>
    %c22 = arith.constant 22 : index
    %141 = memref.load %arg2[%c22] : memref<108xf32, #tpu.memory_space<smem>>
    %142 = vector.broadcast %141 : f32 to vector<1x256xf32>
    %143 = arith.mulf %142, %39 : vector<1x256xf32>
    %144 = arith.addf %140, %143 : vector<1x256xf32>
    %c31 = arith.constant 31 : index
    %145 = memref.load %arg2[%c31] : memref<108xf32, #tpu.memory_space<smem>>
    %146 = vector.broadcast %145 : f32 to vector<1x256xf32>
    %147 = arith.mulf %146, %40 : vector<1x256xf32>
    %148 = arith.addf %144, %147 : vector<1x256xf32>
    %c5 = arith.constant 5 : index
    %149 = memref.load %arg2[%c5] : memref<108xf32, #tpu.memory_space<smem>>
    %150 = vector.broadcast %149 : f32 to vector<1x256xf32>
    %151 = arith.mulf %150, %43 : vector<1x256xf32>
    %152 = arith.addf %148, %151 : vector<1x256xf32>
    %c14 = arith.constant 14 : index
    %153 = memref.load %arg2[%c14] : memref<108xf32, #tpu.memory_space<smem>>
    %154 = vector.broadcast %153 : f32 to vector<1x256xf32>
    %155 = arith.mulf %154, %44 : vector<1x256xf32>
    %156 = arith.addf %152, %155 : vector<1x256xf32>
    %c23 = arith.constant 23 : index
    %157 = memref.load %arg2[%c23] : memref<108xf32, #tpu.memory_space<smem>>
    %158 = vector.broadcast %157 : f32 to vector<1x256xf32>
    %159 = arith.mulf %158, %45 : vector<1x256xf32>
    %160 = arith.addf %156, %159 : vector<1x256xf32>
    %c32 = arith.constant 32 : index
    %161 = memref.load %arg2[%c32] : memref<108xf32, #tpu.memory_space<smem>>
    %162 = vector.broadcast %161 : f32 to vector<1x256xf32>
    %163 = arith.mulf %162, %46 : vector<1x256xf32>
    %164 = arith.addf %160, %163 : vector<1x256xf32>
    %c6 = arith.constant 6 : index
    %165 = memref.load %arg2[%c6] : memref<108xf32, #tpu.memory_space<smem>>
    %166 = vector.broadcast %165 : f32 to vector<1x256xf32>
    %167 = arith.mulf %166, %49 : vector<1x256xf32>
    %168 = arith.addf %164, %167 : vector<1x256xf32>
    %c15_51 = arith.constant 15 : index
    %169 = memref.load %arg2[%c15_51] : memref<108xf32, #tpu.memory_space<smem>>
    %170 = vector.broadcast %169 : f32 to vector<1x256xf32>
    %171 = arith.mulf %170, %50 : vector<1x256xf32>
    %172 = arith.addf %168, %171 : vector<1x256xf32>
    %c24 = arith.constant 24 : index
    %173 = memref.load %arg2[%c24] : memref<108xf32, #tpu.memory_space<smem>>
    %174 = vector.broadcast %173 : f32 to vector<1x256xf32>
    %175 = arith.mulf %174, %51 : vector<1x256xf32>
    %176 = arith.addf %172, %175 : vector<1x256xf32>
    %c33 = arith.constant 33 : index
    %177 = memref.load %arg2[%c33] : memref<108xf32, #tpu.memory_space<smem>>
    %178 = vector.broadcast %177 : f32 to vector<1x256xf32>
    %179 = arith.mulf %178, %52 : vector<1x256xf32>
    %180 = arith.addf %176, %179 : vector<1x256xf32>
    %c7 = arith.constant 7 : index
    %181 = memref.load %arg2[%c7] : memref<108xf32, #tpu.memory_space<smem>>
    %182 = vector.broadcast %181 : f32 to vector<1x256xf32>
    %183 = arith.mulf %182, %55 : vector<1x256xf32>
    %184 = arith.addf %180, %183 : vector<1x256xf32>
    %c16 = arith.constant 16 : index
    %185 = memref.load %arg2[%c16] : memref<108xf32, #tpu.memory_space<smem>>
    %186 = vector.broadcast %185 : f32 to vector<1x256xf32>
    %187 = arith.mulf %186, %56 : vector<1x256xf32>
    %188 = arith.addf %184, %187 : vector<1x256xf32>
    %c25 = arith.constant 25 : index
    %189 = memref.load %arg2[%c25] : memref<108xf32, #tpu.memory_space<smem>>
    %190 = vector.broadcast %189 : f32 to vector<1x256xf32>
    %191 = arith.mulf %190, %57 : vector<1x256xf32>
    %192 = arith.addf %188, %191 : vector<1x256xf32>
    %c34 = arith.constant 34 : index
    %193 = memref.load %arg2[%c34] : memref<108xf32, #tpu.memory_space<smem>>
    %194 = vector.broadcast %193 : f32 to vector<1x256xf32>
    %195 = arith.mulf %194, %58 : vector<1x256xf32>
    %196 = arith.addf %192, %195 : vector<1x256xf32>
    %c8 = arith.constant 8 : index
    %197 = memref.load %arg2[%c8] : memref<108xf32, #tpu.memory_space<smem>>
    %198 = vector.broadcast %197 : f32 to vector<1x256xf32>
    %199 = arith.mulf %198, %61 : vector<1x256xf32>
    %200 = arith.addf %196, %199 : vector<1x256xf32>
    %c17_52 = arith.constant 17 : index
    %201 = memref.load %arg2[%c17_52] : memref<108xf32, #tpu.memory_space<smem>>
    %202 = vector.broadcast %201 : f32 to vector<1x256xf32>
    %203 = arith.mulf %202, %62 : vector<1x256xf32>
    %204 = arith.addf %200, %203 : vector<1x256xf32>
    %c26 = arith.constant 26 : index
    %205 = memref.load %arg2[%c26] : memref<108xf32, #tpu.memory_space<smem>>
    %206 = vector.broadcast %205 : f32 to vector<1x256xf32>
    %207 = arith.mulf %206, %63 : vector<1x256xf32>
    %208 = arith.addf %204, %207 : vector<1x256xf32>
    %c35 = arith.constant 35 : index
    %209 = memref.load %arg2[%c35] : memref<108xf32, #tpu.memory_space<smem>>
    %210 = vector.broadcast %209 : f32 to vector<1x256xf32>
    %211 = arith.mulf %210, %64 : vector<1x256xf32>
    %212 = arith.addf %208, %211 : vector<1x256xf32>
    %213 = math.tanh %212 : vector<1x256xf32>
    %214 = vector.shape_cast %213 : vector<1x256xf32> to vector<1x1x256xf32>
    %c0_53 = arith.constant 0 : index
    %c0_54 = arith.constant 0 : index
    %c0_55 = arith.constant 0 : index
    %215 = vector.load %arg4[%c0_53, %c0_54, %c0_55] : memref<1x3x256xf32, #tpu.memory_space<vmem>>, vector<1x1x256xf32>
    tpu.vector_store %arg4[%c0_53, %c0_54, %c0_55], %214 {strides = array<i32>} : memref<1x3x256xf32, #tpu.memory_space<vmem>>, vector<1x1x256xf32>,
    %cst_56 = arith.constant 0.000000e+00 : f32
    %216 = vector.broadcast %cst_56 : f32 to vector<1x256xf32>
    %c1_57 = arith.constant 1 : index
    %217 = memref.load %arg3[%c1_57] : memref<3xf32, #tpu.memory_space<smem>>
    %218 = vector.broadcast %217 : f32 to vector<1x256xf32>
    %219 = arith.addf %216, %218 : vector<1x256xf32>
    %c36 = arith.constant 36 : index
    %220 = memref.load %arg2[%c36] : memref<108xf32, #tpu.memory_space<smem>>
    %221 = vector.broadcast %220 : f32 to vector<1x256xf32>
    %222 = arith.mulf %221, %13 : vector<1x256xf32>
    %223 = arith.addf %219, %222 : vector<1x256xf32>
    %c45 = arith.constant 45 : index
    %224 = memref.load %arg2[%c45] : memref<108xf32, #tpu.memory_space<smem>>
    %225 = vector.broadcast %224 : f32 to vector<1x256xf32>
    %226 = arith.mulf %225, %14 : vector<1x256xf32>
    %227 = arith.addf %223, %226 : vector<1x256xf32>
    %c54 = arith.constant 54 : index
    %228 = memref.load %arg2[%c54] : memref<108xf32, #tpu.memory_space<smem>>
    %229 = vector.broadcast %228 : f32 to vector<1x256xf32>
    %230 = arith.mulf %229, %15 : vector<1x256xf32>
    %231 = arith.addf %227, %230 : vector<1x256xf32>
    %c63 = arith.constant 63 : index
    %232 = memref.load %arg2[%c63] : memref<108xf32, #tpu.memory_space<smem>>
    %233 = vector.broadcast %232 : f32 to vector<1x256xf32>
    %234 = arith.mulf %233, %16 : vector<1x256xf32>
    %235 = arith.addf %231, %234 : vector<1x256xf32>
    %c37 = arith.constant 37 : index
    %236 = memref.load %arg2[%c37] : memref<108xf32, #tpu.memory_space<smem>>
    %237 = vector.broadcast %236 : f32 to vector<1x256xf32>
    %238 = arith.mulf %237, %19 : vector<1x256xf32>
    %239 = arith.addf %235, %238 : vector<1x256xf32>
    %c46 = arith.constant 46 : index
    %240 = memref.load %arg2[%c46] : memref<108xf32, #tpu.memory_space<smem>>
    %241 = vector.broadcast %240 : f32 to vector<1x256xf32>
    %242 = arith.mulf %241, %20 : vector<1x256xf32>
    %243 = arith.addf %239, %242 : vector<1x256xf32>
    %c55 = arith.constant 55 : index
    %244 = memref.load %arg2[%c55] : memref<108xf32, #tpu.memory_space<smem>>
    %245 = vector.broadcast %244 : f32 to vector<1x256xf32>
    %246 = arith.mulf %245, %21 : vector<1x256xf32>
    %247 = arith.addf %243, %246 : vector<1x256xf32>
    %c64 = arith.constant 64 : index
    %248 = memref.load %arg2[%c64] : memref<108xf32, #tpu.memory_space<smem>>
    %249 = vector.broadcast %248 : f32 to vector<1x256xf32>
    %250 = arith.mulf %249, %22 : vector<1x256xf32>
    %251 = arith.addf %247, %250 : vector<1x256xf32>
    %c38 = arith.constant 38 : index
    %252 = memref.load %arg2[%c38] : memref<108xf32, #tpu.memory_space<smem>>
    %253 = vector.broadcast %252 : f32 to vector<1x256xf32>
    %254 = arith.mulf %253, %25 : vector<1x256xf32>
    %255 = arith.addf %251, %254 : vector<1x256xf32>
    %c47 = arith.constant 47 : index
    %256 = memref.load %arg2[%c47] : memref<108xf32, #tpu.memory_space<smem>>
    %257 = vector.broadcast %256 : f32 to vector<1x256xf32>
    %258 = arith.mulf %257, %26 : vector<1x256xf32>
    %259 = arith.addf %255, %258 : vector<1x256xf32>
    %c56 = arith.constant 56 : index
    %260 = memref.load %arg2[%c56] : memref<108xf32, #tpu.memory_space<smem>>
    %261 = vector.broadcast %260 : f32 to vector<1x256xf32>
    %262 = arith.mulf %261, %27 : vector<1x256xf32>
    %263 = arith.addf %259, %262 : vector<1x256xf32>
    %c65 = arith.constant 65 : index
    %264 = memref.load %arg2[%c65] : memref<108xf32, #tpu.memory_space<smem>>
    %265 = vector.broadcast %264 : f32 to vector<1x256xf32>
    %266 = arith.mulf %265, %28 : vector<1x256xf32>
    %267 = arith.addf %263, %266 : vector<1x256xf32>
    %c39 = arith.constant 39 : index
    %268 = memref.load %arg2[%c39] : memref<108xf32, #tpu.memory_space<smem>>
    %269 = vector.broadcast %268 : f32 to vector<1x256xf32>
    %270 = arith.mulf %269, %31 : vector<1x256xf32>
    %271 = arith.addf %267, %270 : vector<1x256xf32>
    %c48 = arith.constant 48 : index
    %272 = memref.load %arg2[%c48] : memref<108xf32, #tpu.memory_space<smem>>
    %273 = vector.broadcast %272 : f32 to vector<1x256xf32>
    %274 = arith.mulf %273, %32 : vector<1x256xf32>
    %275 = arith.addf %271, %274 : vector<1x256xf32>
    %c57 = arith.constant 57 : index
    %276 = memref.load %arg2[%c57] : memref<108xf32, #tpu.memory_space<smem>>
    %277 = vector.broadcast %276 : f32 to vector<1x256xf32>
    %278 = arith.mulf %277, %33 : vector<1x256xf32>
    %279 = arith.addf %275, %278 : vector<1x256xf32>
    %c66 = arith.constant 66 : index
    %280 = memref.load %arg2[%c66] : memref<108xf32, #tpu.memory_space<smem>>
    %281 = vector.broadcast %280 : f32 to vector<1x256xf32>
    %282 = arith.mulf %281, %34 : vector<1x256xf32>
    %283 = arith.addf %279, %282 : vector<1x256xf32>
    %c40 = arith.constant 40 : index
    %284 = memref.load %arg2[%c40] : memref<108xf32, #tpu.memory_space<smem>>
    %285 = vector.broadcast %284 : f32 to vector<1x256xf32>
    %286 = arith.mulf %285, %37 : vector<1x256xf32>
    %287 = arith.addf %283, %286 : vector<1x256xf32>
    %c49 = arith.constant 49 : index
    %288 = memref.load %arg2[%c49] : memref<108xf32, #tpu.memory_space<smem>>
    %289 = vector.broadcast %288 : f32 to vector<1x256xf32>
    %290 = arith.mulf %289, %38 : vector<1x256xf32>
    %291 = arith.addf %287, %290 : vector<1x256xf32>
    %c58 = arith.constant 58 : index
    %292 = memref.load %arg2[%c58] : memref<108xf32, #tpu.memory_space<smem>>
    %293 = vector.broadcast %292 : f32 to vector<1x256xf32>
    %294 = arith.mulf %293, %39 : vector<1x256xf32>
    %295 = arith.addf %291, %294 : vector<1x256xf32>
    %c67 = arith.constant 67 : index
    %296 = memref.load %arg2[%c67] : memref<108xf32, #tpu.memory_space<smem>>
    %297 = vector.broadcast %296 : f32 to vector<1x256xf32>
    %298 = arith.mulf %297, %40 : vector<1x256xf32>
    %299 = arith.addf %295, %298 : vector<1x256xf32>
    %c41 = arith.constant 41 : index
    %300 = memref.load %arg2[%c41] : memref<108xf32, #tpu.memory_space<smem>>
    %301 = vector.broadcast %300 : f32 to vector<1x256xf32>
    %302 = arith.mulf %301, %43 : vector<1x256xf32>
    %303 = arith.addf %299, %302 : vector<1x256xf32>
    %c50 = arith.constant 50 : index
    %304 = memref.load %arg2[%c50] : memref<108xf32, #tpu.memory_space<smem>>
    %305 = vector.broadcast %304 : f32 to vector<1x256xf32>
    %306 = arith.mulf %305, %44 : vector<1x256xf32>
    %307 = arith.addf %303, %306 : vector<1x256xf32>
    %c59 = arith.constant 59 : index
    %308 = memref.load %arg2[%c59] : memref<108xf32, #tpu.memory_space<smem>>
    %309 = vector.broadcast %308 : f32 to vector<1x256xf32>
    %310 = arith.mulf %309, %45 : vector<1x256xf32>
    %311 = arith.addf %307, %310 : vector<1x256xf32>
    %c68 = arith.constant 68 : index
    %312 = memref.load %arg2[%c68] : memref<108xf32, #tpu.memory_space<smem>>
    %313 = vector.broadcast %312 : f32 to vector<1x256xf32>
    %314 = arith.mulf %313, %46 : vector<1x256xf32>
    %315 = arith.addf %311, %314 : vector<1x256xf32>
    %c42 = arith.constant 42 : index
    %316 = memref.load %arg2[%c42] : memref<108xf32, #tpu.memory_space<smem>>
    %317 = vector.broadcast %316 : f32 to vector<1x256xf32>
    %318 = arith.mulf %317, %49 : vector<1x256xf32>
    %319 = arith.addf %315, %318 : vector<1x256xf32>
    %c51 = arith.constant 51 : index
    %320 = memref.load %arg2[%c51] : memref<108xf32, #tpu.memory_space<smem>>
    %321 = vector.broadcast %320 : f32 to vector<1x256xf32>
    %322 = arith.mulf %321, %50 : vector<1x256xf32>
    %323 = arith.addf %319, %322 : vector<1x256xf32>
    %c60 = arith.constant 60 : index
    %324 = memref.load %arg2[%c60] : memref<108xf32, #tpu.memory_space<smem>>
    %325 = vector.broadcast %324 : f32 to vector<1x256xf32>
    %326 = arith.mulf %325, %51 : vector<1x256xf32>
    %327 = arith.addf %323, %326 : vector<1x256xf32>
    %c69 = arith.constant 69 : index
    %328 = memref.load %arg2[%c69] : memref<108xf32, #tpu.memory_space<smem>>
    %329 = vector.broadcast %328 : f32 to vector<1x256xf32>
    %330 = arith.mulf %329, %52 : vector<1x256xf32>
    %331 = arith.addf %327, %330 : vector<1x256xf32>
    %c43 = arith.constant 43 : index
    %332 = memref.load %arg2[%c43] : memref<108xf32, #tpu.memory_space<smem>>
    %333 = vector.broadcast %332 : f32 to vector<1x256xf32>
    %334 = arith.mulf %333, %55 : vector<1x256xf32>
    %335 = arith.addf %331, %334 : vector<1x256xf32>
    %c52 = arith.constant 52 : index
    %336 = memref.load %arg2[%c52] : memref<108xf32, #tpu.memory_space<smem>>
    %337 = vector.broadcast %336 : f32 to vector<1x256xf32>
    %338 = arith.mulf %337, %56 : vector<1x256xf32>
    %339 = arith.addf %335, %338 : vector<1x256xf32>
    %c61 = arith.constant 61 : index
    %340 = memref.load %arg2[%c61] : memref<108xf32, #tpu.memory_space<smem>>
    %341 = vector.broadcast %340 : f32 to vector<1x256xf32>
    %342 = arith.mulf %341, %57 : vector<1x256xf32>
    %343 = arith.addf %339, %342 : vector<1x256xf32>
    %c70 = arith.constant 70 : index
    %344 = memref.load %arg2[%c70] : memref<108xf32, #tpu.memory_space<smem>>
    %345 = vector.broadcast %344 : f32 to vector<1x256xf32>
    %346 = arith.mulf %345, %58 : vector<1x256xf32>
    %347 = arith.addf %343, %346 : vector<1x256xf32>
    %c44 = arith.constant 44 : index
    %348 = memref.load %arg2[%c44] : memref<108xf32, #tpu.memory_space<smem>>
    %349 = vector.broadcast %348 : f32 to vector<1x256xf32>
    %350 = arith.mulf %349, %61 : vector<1x256xf32>
    %351 = arith.addf %347, %350 : vector<1x256xf32>
    %c53 = arith.constant 53 : index
    %352 = memref.load %arg2[%c53] : memref<108xf32, #tpu.memory_space<smem>>
    %353 = vector.broadcast %352 : f32 to vector<1x256xf32>
    %354 = arith.mulf %353, %62 : vector<1x256xf32>
    %355 = arith.addf %351, %354 : vector<1x256xf32>
    %c62 = arith.constant 62 : index
    %356 = memref.load %arg2[%c62] : memref<108xf32, #tpu.memory_space<smem>>
    %357 = vector.broadcast %356 : f32 to vector<1x256xf32>
    %358 = arith.mulf %357, %63 : vector<1x256xf32>
    %359 = arith.addf %355, %358 : vector<1x256xf32>
    %c71 = arith.constant 71 : index
    %360 = memref.load %arg2[%c71] : memref<108xf32, #tpu.memory_space<smem>>
    %361 = vector.broadcast %360 : f32 to vector<1x256xf32>
    %362 = arith.mulf %361, %64 : vector<1x256xf32>
    %363 = arith.addf %359, %362 : vector<1x256xf32>
    %364 = math.tanh %363 : vector<1x256xf32>
    %365 = vector.shape_cast %364 : vector<1x256xf32> to vector<1x1x256xf32>
    %c0_58 = arith.constant 0 : index
    %c1_59 = arith.constant 1 : index
    %c0_60 = arith.constant 0 : index
    %366 = vector.load %arg4[%c0_58, %c1_59, %c0_60] : memref<1x3x256xf32, #tpu.memory_space<vmem>>, vector<1x1x256xf32>
    tpu.vector_store %arg4[%c0_58, %c1_59, %c0_60], %365 {strides = array<i32>} : memref<1x3x256xf32, #tpu.memory_space<vmem>>, vector<1x1x256xf32>,
    %cst_61 = arith.constant 0.000000e+00 : f32
    %367 = vector.broadcast %cst_61 : f32 to vector<1x256xf32>
    %c2_62 = arith.constant 2 : index
    %368 = memref.load %arg3[%c2_62] : memref<3xf32, #tpu.memory_space<smem>>
    %369 = vector.broadcast %368 : f32 to vector<1x256xf32>
    %370 = arith.addf %367, %369 : vector<1x256xf32>
    %c72 = arith.constant 72 : index
    %371 = memref.load %arg2[%c72] : memref<108xf32, #tpu.memory_space<smem>>
    %372 = vector.broadcast %371 : f32 to vector<1x256xf32>
    %373 = arith.mulf %372, %13 : vector<1x256xf32>
    %374 = arith.addf %370, %373 : vector<1x256xf32>
    %c81 = arith.constant 81 : index
    %375 = memref.load %arg2[%c81] : memref<108xf32, #tpu.memory_space<smem>>
    %376 = vector.broadcast %375 : f32 to vector<1x256xf32>
    %377 = arith.mulf %376, %14 : vector<1x256xf32>
    %378 = arith.addf %374, %377 : vector<1x256xf32>
    %c90 = arith.constant 90 : index
    %379 = memref.load %arg2[%c90] : memref<108xf32, #tpu.memory_space<smem>>
    %380 = vector.broadcast %379 : f32 to vector<1x256xf32>
    %381 = arith.mulf %380, %15 : vector<1x256xf32>
    %382 = arith.addf %378, %381 : vector<1x256xf32>
    %c99 = arith.constant 99 : index
    %383 = memref.load %arg2[%c99] : memref<108xf32, #tpu.memory_space<smem>>
    %384 = vector.broadcast %383 : f32 to vector<1x256xf32>
    %385 = arith.mulf %384, %16 : vector<1x256xf32>
    %386 = arith.addf %382, %385 : vector<1x256xf32>
    %c73 = arith.constant 73 : index
    %387 = memref.load %arg2[%c73] : memref<108xf32, #tpu.memory_space<smem>>
    %388 = vector.broadcast %387 : f32 to vector<1x256xf32>
    %389 = arith.mulf %388, %19 : vector<1x256xf32>
    %390 = arith.addf %386, %389 : vector<1x256xf32>
    %c82 = arith.constant 82 : index
    %391 = memref.load %arg2[%c82] : memref<108xf32, #tpu.memory_space<smem>>
    %392 = vector.broadcast %391 : f32 to vector<1x256xf32>
    %393 = arith.mulf %392, %20 : vector<1x256xf32>
    %394 = arith.addf %390, %393 : vector<1x256xf32>
    %c91 = arith.constant 91 : index
    %395 = memref.load %arg2[%c91] : memref<108xf32, #tpu.memory_space<smem>>
    %396 = vector.broadcast %395 : f32 to vector<1x256xf32>
    %397 = arith.mulf %396, %21 : vector<1x256xf32>
    %398 = arith.addf %394, %397 : vector<1x256xf32>
    %c100 = arith.constant 100 : index
    %399 = memref.load %arg2[%c100] : memref<108xf32, #tpu.memory_space<smem>>
    %400 = vector.broadcast %399 : f32 to vector<1x256xf32>
    %401 = arith.mulf %400, %22 : vector<1x256xf32>
    %402 = arith.addf %398, %401 : vector<1x256xf32>
    %c74 = arith.constant 74 : index
    %403 = memref.load %arg2[%c74] : memref<108xf32, #tpu.memory_space<smem>>
    %404 = vector.broadcast %403 : f32 to vector<1x256xf32>
    %405 = arith.mulf %404, %25 : vector<1x256xf32>
    %406 = arith.addf %402, %405 : vector<1x256xf32>
    %c83 = arith.constant 83 : index
    %407 = memref.load %arg2[%c83] : memref<108xf32, #tpu.memory_space<smem>>
    %408 = vector.broadcast %407 : f32 to vector<1x256xf32>
    %409 = arith.mulf %408, %26 : vector<1x256xf32>
    %410 = arith.addf %406, %409 : vector<1x256xf32>
    %c92 = arith.constant 92 : index
    %411 = memref.load %arg2[%c92] : memref<108xf32, #tpu.memory_space<smem>>
    %412 = vector.broadcast %411 : f32 to vector<1x256xf32>
    %413 = arith.mulf %412, %27 : vector<1x256xf32>
    %414 = arith.addf %410, %413 : vector<1x256xf32>
    %c101 = arith.constant 101 : index
    %415 = memref.load %arg2[%c101] : memref<108xf32, #tpu.memory_space<smem>>
    %416 = vector.broadcast %415 : f32 to vector<1x256xf32>
    %417 = arith.mulf %416, %28 : vector<1x256xf32>
    %418 = arith.addf %414, %417 : vector<1x256xf32>
    %c75 = arith.constant 75 : index
    %419 = memref.load %arg2[%c75] : memref<108xf32, #tpu.memory_space<smem>>
    %420 = vector.broadcast %419 : f32 to vector<1x256xf32>
    %421 = arith.mulf %420, %31 : vector<1x256xf32>
    %422 = arith.addf %418, %421 : vector<1x256xf32>
    %c84 = arith.constant 84 : index
    %423 = memref.load %arg2[%c84] : memref<108xf32, #tpu.memory_space<smem>>
    %424 = vector.broadcast %423 : f32 to vector<1x256xf32>
    %425 = arith.mulf %424, %32 : vector<1x256xf32>
    %426 = arith.addf %422, %425 : vector<1x256xf32>
    %c93 = arith.constant 93 : index
    %427 = memref.load %arg2[%c93] : memref<108xf32, #tpu.memory_space<smem>>
    %428 = vector.broadcast %427 : f32 to vector<1x256xf32>
    %429 = arith.mulf %428, %33 : vector<1x256xf32>
    %430 = arith.addf %426, %429 : vector<1x256xf32>
    %c102 = arith.constant 102 : index
    %431 = memref.load %arg2[%c102] : memref<108xf32, #tpu.memory_space<smem>>
    %432 = vector.broadcast %431 : f32 to vector<1x256xf32>
    %433 = arith.mulf %432, %34 : vector<1x256xf32>
    %434 = arith.addf %430, %433 : vector<1x256xf32>
    %c76 = arith.constant 76 : index
    %435 = memref.load %arg2[%c76] : memref<108xf32, #tpu.memory_space<smem>>
    %436 = vector.broadcast %435 : f32 to vector<1x256xf32>
    %437 = arith.mulf %436, %37 : vector<1x256xf32>
    %438 = arith.addf %434, %437 : vector<1x256xf32>
    %c85 = arith.constant 85 : index
    %439 = memref.load %arg2[%c85] : memref<108xf32, #tpu.memory_space<smem>>
    %440 = vector.broadcast %439 : f32 to vector<1x256xf32>
    %441 = arith.mulf %440, %38 : vector<1x256xf32>
    %442 = arith.addf %438, %441 : vector<1x256xf32>
    %c94 = arith.constant 94 : index
    %443 = memref.load %arg2[%c94] : memref<108xf32, #tpu.memory_space<smem>>
    %444 = vector.broadcast %443 : f32 to vector<1x256xf32>
    %445 = arith.mulf %444, %39 : vector<1x256xf32>
    %446 = arith.addf %442, %445 : vector<1x256xf32>
    %c103 = arith.constant 103 : index
    %447 = memref.load %arg2[%c103] : memref<108xf32, #tpu.memory_space<smem>>
    %448 = vector.broadcast %447 : f32 to vector<1x256xf32>
    %449 = arith.mulf %448, %40 : vector<1x256xf32>
    %450 = arith.addf %446, %449 : vector<1x256xf32>
    %c77 = arith.constant 77 : index
    %451 = memref.load %arg2[%c77] : memref<108xf32, #tpu.memory_space<smem>>
    %452 = vector.broadcast %451 : f32 to vector<1x256xf32>
    %453 = arith.mulf %452, %43 : vector<1x256xf32>
    %454 = arith.addf %450, %453 : vector<1x256xf32>
    %c86 = arith.constant 86 : index
    %455 = memref.load %arg2[%c86] : memref<108xf32, #tpu.memory_space<smem>>
    %456 = vector.broadcast %455 : f32 to vector<1x256xf32>
    %457 = arith.mulf %456, %44 : vector<1x256xf32>
    %458 = arith.addf %454, %457 : vector<1x256xf32>
    %c95 = arith.constant 95 : index
    %459 = memref.load %arg2[%c95] : memref<108xf32, #tpu.memory_space<smem>>
    %460 = vector.broadcast %459 : f32 to vector<1x256xf32>
    %461 = arith.mulf %460, %45 : vector<1x256xf32>
    %462 = arith.addf %458, %461 : vector<1x256xf32>
    %c104 = arith.constant 104 : index
    %463 = memref.load %arg2[%c104] : memref<108xf32, #tpu.memory_space<smem>>
    %464 = vector.broadcast %463 : f32 to vector<1x256xf32>
    %465 = arith.mulf %464, %46 : vector<1x256xf32>
    %466 = arith.addf %462, %465 : vector<1x256xf32>
    %c78 = arith.constant 78 : index
    %467 = memref.load %arg2[%c78] : memref<108xf32, #tpu.memory_space<smem>>
    %468 = vector.broadcast %467 : f32 to vector<1x256xf32>
    %469 = arith.mulf %468, %49 : vector<1x256xf32>
    %470 = arith.addf %466, %469 : vector<1x256xf32>
    %c87 = arith.constant 87 : index
    %471 = memref.load %arg2[%c87] : memref<108xf32, #tpu.memory_space<smem>>
    %472 = vector.broadcast %471 : f32 to vector<1x256xf32>
    %473 = arith.mulf %472, %50 : vector<1x256xf32>
    %474 = arith.addf %470, %473 : vector<1x256xf32>
    %c96 = arith.constant 96 : index
    %475 = memref.load %arg2[%c96] : memref<108xf32, #tpu.memory_space<smem>>
    %476 = vector.broadcast %475 : f32 to vector<1x256xf32>
    %477 = arith.mulf %476, %51 : vector<1x256xf32>
    %478 = arith.addf %474, %477 : vector<1x256xf32>
    %c105 = arith.constant 105 : index
    %479 = memref.load %arg2[%c105] : memref<108xf32, #tpu.memory_space<smem>>
    %480 = vector.broadcast %479 : f32 to vector<1x256xf32>
    %481 = arith.mulf %480, %52 : vector<1x256xf32>
    %482 = arith.addf %478, %481 : vector<1x256xf32>
    %c79 = arith.constant 79 : index
    %483 = memref.load %arg2[%c79] : memref<108xf32, #tpu.memory_space<smem>>
    %484 = vector.broadcast %483 : f32 to vector<1x256xf32>
    %485 = arith.mulf %484, %55 : vector<1x256xf32>
    %486 = arith.addf %482, %485 : vector<1x256xf32>
    %c88 = arith.constant 88 : index
    %487 = memref.load %arg2[%c88] : memref<108xf32, #tpu.memory_space<smem>>
    %488 = vector.broadcast %487 : f32 to vector<1x256xf32>
    %489 = arith.mulf %488, %56 : vector<1x256xf32>
    %490 = arith.addf %486, %489 : vector<1x256xf32>
    %c97 = arith.constant 97 : index
    %491 = memref.load %arg2[%c97] : memref<108xf32, #tpu.memory_space<smem>>
    %492 = vector.broadcast %491 : f32 to vector<1x256xf32>
    %493 = arith.mulf %492, %57 : vector<1x256xf32>
    %494 = arith.addf %490, %493 : vector<1x256xf32>
    %c106 = arith.constant 106 : index
    %495 = memref.load %arg2[%c106] : memref<108xf32, #tpu.memory_space<smem>>
    %496 = vector.broadcast %495 : f32 to vector<1x256xf32>
    %497 = arith.mulf %496, %58 : vector<1x256xf32>
    %498 = arith.addf %494, %497 : vector<1x256xf32>
    %c80 = arith.constant 80 : index
    %499 = memref.load %arg2[%c80] : memref<108xf32, #tpu.memory_space<smem>>
    %500 = vector.broadcast %499 : f32 to vector<1x256xf32>
    %501 = arith.mulf %500, %61 : vector<1x256xf32>
    %502 = arith.addf %498, %501 : vector<1x256xf32>
    %c89 = arith.constant 89 : index
    %503 = memref.load %arg2[%c89] : memref<108xf32, #tpu.memory_space<smem>>
    %504 = vector.broadcast %503 : f32 to vector<1x256xf32>
    %505 = arith.mulf %504, %62 : vector<1x256xf32>
    %506 = arith.addf %502, %505 : vector<1x256xf32>
    %c98 = arith.constant 98 : index
    %507 = memref.load %arg2[%c98] : memref<108xf32, #tpu.memory_space<smem>>
    %508 = vector.broadcast %507 : f32 to vector<1x256xf32>
    %509 = arith.mulf %508, %63 : vector<1x256xf32>
    %510 = arith.addf %506, %509 : vector<1x256xf32>
    %c107 = arith.constant 107 : index
    %511 = memref.load %arg2[%c107] : memref<108xf32, #tpu.memory_space<smem>>
    %512 = vector.broadcast %511 : f32 to vector<1x256xf32>
    %513 = arith.mulf %512, %64 : vector<1x256xf32>
    %514 = arith.addf %510, %513 : vector<1x256xf32>
    %515 = math.tanh %514 : vector<1x256xf32>
    %516 = vector.shape_cast %515 : vector<1x256xf32> to vector<1x1x256xf32>
    %c0_63 = arith.constant 0 : index
    %c2_64 = arith.constant 2 : index
    %c0_65 = arith.constant 0 : index
    %517 = vector.load %arg4[%c0_63, %c2_64, %c0_65] : memref<1x3x256xf32, #tpu.memory_space<vmem>>, vector<1x1x256xf32>
    tpu.vector_store %arg4[%c0_63, %c2_64, %c0_65], %516 {strides = array<i32>} : memref<1x3x256xf32, #tpu.memory_space<vmem>>, vector<1x1x256xf32>,
    return
  }
  func.func @transform_0(%arg0: i32) -> (i32, i32, i32, i32) {
    %c0_i32 = arith.constant 0 : i32
    %c0_i32_0 = arith.constant 0 : i32
    %c0_i32_1 = arith.constant 0 : i32
    %c0_i32_2 = arith.constant 0 : i32
    return %arg0, %c0_i32, %c0_i32_0, %c0_i32_1 : i32, i32, i32, i32
  }
  func.func @transform_1(%arg0: i32) -> i32 {
    %c0_i32 = arith.constant 0 : i32
    %c0_i32_0 = arith.constant 0 : i32
    return %c0_i32 : i32
  }
  func.func @transform_2(%arg0: i32) -> i32 {
    %c0_i32 = arith.constant 0 : i32
    %c0_i32_0 = arith.constant 0 : i32
    return %c0_i32 : i32
  }
  func.func @transform_3(%arg0: i32) -> (i32, i32, i32) {
    %c0_i32 = arith.constant 0 : i32
    %c0_i32_0 = arith.constant 0 : i32
    %c0_i32_1 = arith.constant 0 : i32
    return %arg0, %c0_i32, %c0_i32_0 : i32, i32, i32
  }
}

</mosaic_0001>

<llo_original>
// kernel: tpu_custom_call.1
$region0: #{tpu_custom_call.1}
  #allocation0 [shape = 'u32[]', space=smem, size = 0x4, offset = 0x4, fixed_abs, tag = 'smem constant byte address 0x4 - core index']
  #allocation1 [shape = 'u32[144,128]{1,0:T(1,128)}', space=vmem, size = 0x12000, scoped, tag = 'internal scratch']
  #allocation2 [shape = 'f32[4,18,18]{2,1,0:T(8,128)}', space=vmem, size = 0xc000, scoped, tag = 'scratch operand']
  %s0 = inlined_call_operand.hbm [shape: f32[2,4,16,16], index: 0, kind: input, shape index: {}]
  %s1 = inlined_call_operand.vmem [shape: f32[108], index: 1, kind: input, shape index: {}]
  %s2 = inlined_call_operand.vmem [shape: f32[3], index: 2, kind: input, shape index: {}]
  %s3 = inlined_call_operand.vmem [shape: f32[2,3,256], index: 3, kind: output, shape index: {}]
  %s4 = sld [smem:[#allocation0]]
  $region57: #{tpu_custom_call.1} parent=0
    _
  %s6 = ssub.s32 1, %s4
  %s7 = scalar_select 0, %s6, %s4
  $region1: #{tpu_custom_call.1} parent=0
    #allocation3 [shape = 'u8[65536]{0}', space=vmem, size = 0x10000, scoped, tag = 'input window, operand 0']
    #allocation4 [shape = 's32[2]{0}', space=sflag, size = 0x8, scoped, tag = 'scoped memory for tpu_custom_call.1']
    #allocation5 [shape = 's32[2]{0}', space=sflag, size = 0x8, scoped, tag = 'scoped memory for tpu_custom_call.1']
    #allocation6 [shape = 'u8[512]{0}', space=smem, size = 0x200, scoped, tag = 'input window, operand 1, single buffered']
    #allocation7 [shape = 'u8[512]{0}', space=smem, size = 0x200, scoped, tag = 'input window, operand 2, single buffered']
    #allocation8 [shape = 's32[1]{0}', space=sflag, size = 0x4, scoped, tag = 'scoped memory for tpu_custom_call.1']
    %8 = vsyncpa [#allocation4], 0
    %s9 = scalar_lea.sflag [#allocation4], 1
    %10 = vsyncpa %s9, 0
    %11 = vsyncpa [#allocation5], 0
    %12 = vsyncpa [#allocation8], 0
    loop: start=0, step=1, limit=4
    $region2: #{tpu_custom_call.1} parent=1 // loop_pre_header
      _
    $region3: #{tpu_custom_call.1} parent=1 // loop_header
      %s14 = sphi 0, %s18
      %p15 = scmp.ge.s32.totalorder %s14, 4
      %s24 = sphi 0, %s26
      %s27 = sphi 0, %s24
      %s28 = sphi 0, %s27
      %s44 = sphi 0, %s28
      %s48 = sphi 0, %s48
      %s50 = sphi 0, %s48
      %s51 = sphi 0, %s50
      %s65 = sphi 0, %s51
      %s69 = sphi 0, %s69
      %s71 = sphi 0, %s69
      %s72 = sphi 0, %s71
      %s86 = sphi 0, %s72
      %s92 = sphi 0, %s94
      %s95 = sphi 0, %s92
      %s96 = sphi 0, %s95
      %s112 = sphi 0, %s96
    $region4: #{tpu_custom_call.1} parent=1 // loop_header_branch
      %17 = sbr.rel (%p15) target = $region8
    $region5: #{tpu_custom_call.1} parent=1 // loop_body
      %s19 = ssub.s32 %s14, 1
      %s20 = ssub.s32 %s14, 2
      %s21 = sadd.s32 %s14, 1
      %s22 = ssub.s32 %s14, %s21
      %p23 = scmp.eq.s32.totalorder %s22, 0
      %s25 = sadd.s32 %s24, 1
      %s26 = scalar_select %p23, %s24, %s25
      %p29 = pneg %p23
      %p30 = scmp.eq.s32.totalorder %s14, 1
      %p31 = por %p29, %p30
      %p32 = scmp.ne.s32.totalorder %s24, %s27
      %p33 = scmp.eq.s32.totalorder %s14, 0
      %p34 = por %p32, %p33
      %p35 = scmp.ne.s32.totalorder %s24, %s27
      %p36 = scmp.eq.s32.totalorder %s19, 1
      %p37 = por %p35, %p36
      %p38 = scmp.ne.s32.totalorder %s27, %s28
      %p39 = scmp.eq.s32.totalorder %s19, 0
      %p40 = por %p38, %p39
      %p41 = scmp.ne.s32.totalorder %s27, %s28
      %p42 = scmp.eq.s32.totalorder %s20, 1
      %p43 = por %p41, %p42
      %p45 = scmp.ne.s32.totalorder %s28, %s44
      %p46 = scmp.eq.s32.totalorder %s20, 0
      %p47 = por %p45, %p46
      %s49 = sadd.s32 %s48, 1
      %p52 = scmp.eq.s32.totalorder %s14, 1
      %p53 = scmp.ne.s32.totalorder %s48, %s50
      %p54 = scmp.eq.s32.totalorder %s14, 0
      %p55 = por %p53, %p54
      %p56 = scmp.ne.s32.totalorder %s48, %s50
      %p57 = scmp.eq.s32.totalorder %s19, 1
      %p58 = por %p56, %p57
      %p59 = scmp.ne.s32.totalorder %s50, %s51
      %p60 = scmp.eq.s32.totalorder %s19, 0
      %p61 = por %p59, %p60
      %p62 = scmp.ne.s32.totalorder %s50, %s51
      %p63 = scmp.eq.s32.totalorder %s20, 1
      %p64 = por %p62, %p63
      %p66 = scmp.ne.s32.totalorder %s51, %s65
      %p67 = scmp.eq.s32.totalorder %s20, 0
      %p68 = por %p66, %p67
      %s70 = sadd.s32 %s69, 1
      %p73 = scmp.eq.s32.totalorder %s14, 1
      %p74 = scmp.ne.s32.totalorder %s69, %s71
      %p75 = scmp.eq.s32.totalorder %s14, 0
      %p76 = por %p74, %p75
      %p77 = scmp.ne.s32.totalorder %s69, %s71
      %p78 = scmp.eq.s32.totalorder %s19, 1
      %p79 = por %p77, %p78
      %p80 = scmp.ne.s32.totalorder %s71, %s72
      %p81 = scmp.eq.s32.totalorder %s19, 0
      %p82 = por %p80, %p81
      %p83 = scmp.ne.s32.totalorder %s71, %s72
      %p84 = scmp.eq.s32.totalorder %s20, 1
      %p85 = por %p83, %p84
      %p87 = scmp.ne.s32.totalorder %s72, %s86
      %p88 = scmp.eq.s32.totalorder %s20, 0
      %p89 = por %p87, %p88
      %s90 = ssub.s32 %s14, %s21
      %p91 = scmp.eq.s32.totalorder %s90, 0
      %s93 = sadd.s32 %s92, 1
      %s94 = scalar_select %p91, %s92, %s93
      %p97 = pneg %p91
      %p98 = scmp.eq.s32.totalorder %s14, 1
      %p99 = por %p97, %p98
      %p100 = scmp.ne.s32.totalorder %s92, %s95
      %p101 = scmp.eq.s32.totalorder %s14, 0
      %p102 = por %p100, %p101
      %p103 = scmp.ne.s32.totalorder %s92, %s95
      %p104 = scmp.eq.s32.totalorder %s19, 1
      %p105 = por %p103, %p104
      %p106 = scmp.ne.s32.totalorder %s95, %s96
      %p107 = scmp.eq.s32.totalorder %s19, 0
      %p108 = por %p106, %p107
      %p109 = scmp.ne.s32.totalorder %s95, %s96
      %p110 = scmp.eq.s32.totalorder %s20, 1
      %p111 = por %p109, %p110
      %p113 = scmp.ne.s32.totalorder %s96, %s112
      %p114 = scmp.eq.s32.totalorder %s20, 0
      %p115 = por %p113, %p114
      %p116 = scmp.le.s32.totalorder 1, %s14
      %p117 = scmp.lt.s32.totalorder %s14, 3
      %p118 = pnand %p116, %p117
      %p119 = pneg %p118
      // Predicated region
      $region9: #{tpu_custom_call.1} parent=5 // pred_check
        _
      $region10: #{tpu_custom_call.1} parent=5 // pred_check_branch
        %121 = sbr.rel (%p118) target = $region12
      $region11: #{tpu_custom_call.1} parent=5 // pred_region
        %s122 = ssub.s32 %s14, 1
        // Predicated region
        $region13: #{tpu_custom_call.1} parent=11 // pred_check
          %p123 = pneg %p61
        $region14: #{tpu_custom_call.1} parent=11 // pred_check_branch
          %125 = sbr.rel (%p123) target = $region16
        $region15: #{tpu_custom_call.1} parent=11 // pred_region
          %s127 = ssub.s32 16, 16
          %128 = vsyncadd [#allocation5], %s127
          %s130 = sshll.u32 %s1, 4
          %s131 = int_to_ptr.vmem [resolvable:$true] %s130
          %133 = dma.vmem_to_smem %s131, 16, [#allocation6], [#allocation5]
        $region16: #{tpu_custom_call.1} parent=11 // pred_fallthru
          _
        // Predicated region
        $region17: #{tpu_custom_call.1} parent=11 // pred_check
          %p134 = pneg %p82
        $region18: #{tpu_custom_call.1} parent=11 // pred_check_branch
          %136 = sbr.rel (%p134) target = $region20
        $region19: #{tpu_custom_call.1} parent=11 // pred_region
          %s138 = ssub.s32 16, 16
          %139 = vsyncadd [#allocation8], %s138
          %s141 = sshll.u32 %s2, 4
          %s142 = int_to_ptr.vmem [resolvable:$true] %s141
          %144 = dma.vmem_to_smem %s142, 16, [#allocation7], [#allocation8]
        $region20: #{tpu_custom_call.1} parent=11 // pred_fallthru
          _
      $region12: #{tpu_custom_call.1} parent=5 // pred_fallthru
        _
      %p145 = scmp.lt.s32.totalorder %s14, 2
      // Predicated region
      $region21: #{tpu_custom_call.1} parent=5 // pred_check
        %p146 = pneg %p145
      $region22: #{tpu_custom_call.1} parent=5 // pred_check_branch
        %148 = sbr.rel (%p146) target = $region24
      $region23: #{tpu_custom_call.1} parent=5 // pred_region
        // Predicated region
        $region25: #{tpu_custom_call.1} parent=23 // pred_check
          %p149 = pneg %p34
        $region26: #{tpu_custom_call.1} parent=23 // pred_check_branch
          %151 = sbr.rel (%p149) target = $region28
        $region27: #{tpu_custom_call.1} parent=23 // pred_region
          %s152 = sand.u32 %s24, 1
          %s153 = scalar_lea.sflag [#allocation4], %s152
          %s154 = sand.u32 %s24, 1
          %s155 = smul.addr %s154, 64
          %s156 = scalar_lea.vmem [#allocation3], %s155
          %s158 = ssub.s32 1024, 1024
          %159 = vsyncadd %s153, %s158
          %s160 = smul.addr %s14, 8
          %s161 = smul.addr %s160, 128
          %s162 = scalar_lea.hbm %s0, %s161
          %s163 = sshll.u32 %s156, 4
          %s164 = int_to_ptr.vmem [resolvable:$true] %s163
          %169 = dma.hbm_to_vmem [thread:$0]  %s162, 1024, %s164, %s153, 128, 128, 8
        $region28: #{tpu_custom_call.1} parent=23 // pred_fallthru
          _
      $region24: #{tpu_custom_call.1} parent=5 // pred_fallthru
        _
      %p170 = scmp.le.s32.totalorder 1, %s14
      %p171 = scmp.lt.s32.totalorder %s14, 3
      %p172 = pnand %p170, %p171
      %p173 = pneg %p172
      // Predicated region
      $region29: #{tpu_custom_call.1} parent=5 // pred_check
        _
      $region30: #{tpu_custom_call.1} parent=5 // pred_check_branch
        %175 = sbr.rel (%p172) target = $region32
      $region31: #{tpu_custom_call.1} parent=5 // pred_region
        %s176 = ssub.s32 %s14, 1
        %s177 = sand.u32 %s27, 1
        %s178 = scalar_lea.sflag [#allocation4], %s177
        %s179 = sand.u32 %s27, 1
        %s180 = smul.addr %s179, 64
        %s181 = scalar_lea.vmem [#allocation3], %s180
        // Predicated region
        $region33: #{tpu_custom_call.1} parent=31 // pred_check
          %p182 = pneg %p40
        $region34: #{tpu_custom_call.1} parent=31 // pred_check_branch
          %184 = sbr.rel (%p182) target = $region36
        $region35: #{tpu_custom_call.1} parent=31 // pred_region
          %185 = dma.done %s178, 1024
        $region36: #{tpu_custom_call.1} parent=31 // pred_fallthru
          _
        // Predicated region
        $region37: #{tpu_custom_call.1} parent=31 // pred_check
          %p186 = pneg %p61
        $region38: #{tpu_custom_call.1} parent=31 // pred_check_branch
          %188 = sbr.rel (%p186) target = $region40
        $region39: #{tpu_custom_call.1} parent=31 // pred_region
          %189 = dma.done [#allocation5], 16
        $region40: #{tpu_custom_call.1} parent=31 // pred_fallthru
          _
        // Predicated region
        $region41: #{tpu_custom_call.1} parent=31 // pred_check
          %p190 = pneg %p82
        $region42: #{tpu_custom_call.1} parent=31 // pred_check_branch
          %192 = sbr.rel (%p190) target = $region44
        $region43: #{tpu_custom_call.1} parent=31 // pred_region
          %193 = dma.done [#allocation8], 16
        $region44: #{tpu_custom_call.1} parent=31 // pred_fallthru
          _
        %194 = sfence
        %s195 = sand.u32 %s27, 1
        %s196 = scalar_lea.sflag [#allocation4], %s195
        %s197 = sand.u32 %s27, 1
        %s198 = smul.addr %s197, 64
        %s199 = scalar_lea.vmem [#allocation3], %s198
        %p200 = pneg %p40
        %p201 = pneg %p37
        %p202 = pneg %p61
        %p203 = pneg %p58
        %p204 = pneg %p82
        %p205 = pneg %p79
        %p206 = pneg %p108
        %p207 = pneg %p105
        %p208 = scmp.lt.s32.totalorder %s19, 1
        %s209 = scalar_select %p208, %s19, 1
        %s210 = smul.addr %s209, 2
        %s211 = smul.addr %s210, 4
        %s212 = scalar_lea.vmem %s3, %s211
        %p213 = scmp.lt.s32.totalorder %s19, 1
        %s214 = scalar_select %p213, %s19, 1
        %s215 = smul.addr %s214, 2
        %s216 = smul.addr %s215, 4
        %s217 = scalar_lea.vmem %s3, %s216
        %v218 = vld [vmem:[%s181] sm:$0xff]
        %v219 = vld [vmem:[%s181 + $0x8] sm:$0xff]
        %v220 = vld [vmem:[%s181 + $0x10] sm:$0xff]
        %v221 = vld [vmem:[%s181 + $0x18] sm:$0xff]
        %v222 = vld [vmem:[%s181 + $0x20] sm:$0xff]
        %v223 = vld [vmem:[%s181 + $0x28] sm:$0xff]
        %v224 = vld [vmem:[%s181 + $0x30] sm:$0xff]
        %v225 = vld [vmem:[%s181 + $0x38] sm:$0xff]
        %234 = vrot.lane.b32.xlu0 %v218, 1
        %v235 = vpop.permute.xlu0 %234
        %236 = vrot.lane.b32.xlu0 %v219, 1
        %v237 = vpop.permute.xlu0 %236
        %238 = vrot.lane.b32.xlu0 %v220, 1
        %v239 = vpop.permute.xlu0 %238
        %240 = vrot.lane.b32.xlu0 %v221, 1
        %v241 = vpop.permute.xlu0 %240
        %242 = vrot.lane.b32.xlu0 %v222, 1
        %v243 = vpop.permute.xlu0 %242
        %244 = vrot.lane.b32.xlu0 %v223, 1
        %v245 = vpop.permute.xlu0 %244
        %246 = vrot.lane.b32.xlu0 %v224, 1
        %v247 = vpop.permute.xlu0 %246
        %248 = vrot.lane.b32.xlu0 %v225, 1
        %v249 = vpop.permute.xlu0 %248
        %vm258 = vcmask 138248
        %259 = vst.msk [vmem:[#allocation2 + $0x1] sm:$0xff] %vm258, %v235
        %260 = vst.msk [vmem:[#allocation2 + $0x9] sm:$0xff] %vm258, %v237
        %261 = vst.msk [vmem:[#allocation2 + $0x19] sm:$0xff] %vm258, %v239
        %262 = vst.msk [vmem:[#allocation2 + $0x21] sm:$0xff] %vm258, %v241
        %263 = vst.msk [vmem:[#allocation2 + $0x31] sm:$0xff] %vm258, %v243
        %264 = vst.msk [vmem:[#allocation2 + $0x39] sm:$0xff] %vm258, %v245
        %265 = vst.msk [vmem:[#allocation2 + $0x49] sm:$0xff] %vm258, %v247
        %266 = vst.msk [vmem:[#allocation2 + $0x51] sm:$0xff] %vm258, %v249
        %vm267 = vcmask 132105
        %268 = vst.msk [vmem:[#allocation2 - $0x1] sm:$0x2] %vm267, %v235
        %269 = vst.msk [vmem:[#allocation2 + $0x17] sm:$0x2] %vm267, %v239
        %270 = vst.msk [vmem:[#allocation2 + $0x2f] sm:$0x2] %vm267, %v243
        %271 = vst.msk [vmem:[#allocation2 + $0x47] sm:$0x2] %vm267, %v247
        %vm272 = vcmask 137230
        %273 = vst.msk [vmem:[#allocation2 + $0xb] sm:$0x40] %vm272, %v237
        %274 = vst.msk [vmem:[#allocation2 + $0x23] sm:$0x40] %vm272, %v241
        %275 = vst.msk [vmem:[#allocation2 + $0x3b] sm:$0x40] %vm272, %v245
        %276 = vst.msk [vmem:[#allocation2 + $0x53] sm:$0x40] %vm272, %v249
        %v277 = vld [vmem:[#allocation2] sm:$0xff]
        %v278 = vld [vmem:[#allocation2 + $0x8] sm:$0xff]
        %v279 = vld [vmem:[#allocation2 + $0x10] sm:$0x3]
        %v280 = vld [vmem:[#allocation2 + $0x18] sm:$0xff]
        %v281 = vld [vmem:[#allocation2 + $0x20] sm:$0xff]
        %v282 = vld [vmem:[#allocation2 + $0x28] sm:$0x3]
        %v283 = vld [vmem:[#allocation2 + $0x30] sm:$0xff]
        %v284 = vld [vmem:[#allocation2 + $0x38] sm:$0xff]
        %v285 = vld [vmem:[#allocation2 + $0x40] sm:$0x3]
        %v286 = vld [vmem:[#allocation2 + $0x48] sm:$0xff]
        %v287 = vld [vmem:[#allocation2 + $0x50] sm:$0xff]
        %v288 = vld [vmem:[#allocation2 + $0x58] sm:$0x3]
        %301 = vrot.lane.b32.xlu0 %v277, 126
        %v302 = vpop.permute.xlu0 %301
        %303 = vrot.lane.b32.xlu0 %v278, 126
        %v304 = vpop.permute.xlu0 %303
        %305 = vrot.lane.b32.xlu0 %v279, 126
        %v306 = vpop.permute.xlu0 %305
        %307 = vrot.lane.b32.xlu0 %v280, 126
        %v308 = vpop.permute.xlu0 %307
        %309 = vrot.lane.b32.xlu0 %v281, 126
        %v310 = vpop.permute.xlu0 %309
        %311 = vrot.lane.b32.xlu0 %v282, 126
        %v312 = vpop.permute.xlu0 %311
        %313 = vrot.lane.b32.xlu0 %v283, 126
        %v314 = vpop.permute.xlu0 %313
        %315 = vrot.lane.b32.xlu0 %v284, 126
        %v316 = vpop.permute.xlu0 %315
        %317 = vrot.lane.b32.xlu0 %v285, 126
        %v318 = vpop.permute.xlu0 %317
        %319 = vrot.lane.b32.xlu0 %v286, 126
        %v320 = vpop.permute.xlu0 %319
        %321 = vrot.lane.b32.xlu0 %v287, 126
        %v322 = vpop.permute.xlu0 %321
        %323 = vrot.lane.b32.xlu0 %v288, 126
        %v324 = vpop.permute.xlu0 %323
        %vm337 = vcmask 7168
        %338 = vst.msk [vmem:[#allocation2] sm:$0xff] %vm337, %v302
        %339 = vst.msk [vmem:[#allocation2 + $0x8] sm:$0xff] %vm337, %v304
        %vm340 = vcmask 1024
        %341 = vst.msk [vmem:[#allocation2 + $0x10] sm:$0x3] %vm340, %v306
        %342 = vst.msk [vmem:[#allocation2 + $0x18] sm:$0xff] %vm337, %v308
        %343 = vst.msk [vmem:[#allocation2 + $0x20] sm:$0xff] %vm337, %v310
        %344 = vst.msk [vmem:[#allocation2 + $0x28] sm:$0x3] %vm340, %v312
        %345 = vst.msk [vmem:[#allocation2 + $0x30] sm:$0xff] %vm337, %v314
        %346 = vst.msk [vmem:[#allocation2 + $0x38] sm:$0xff] %vm337, %v316
        %347 = vst.msk [vmem:[#allocation2 + $0x40] sm:$0x3] %vm340, %v318
        %348 = vst.msk [vmem:[#allocation2 + $0x48] sm:$0xff] %vm337, %v320
        %349 = vst.msk [vmem:[#allocation2 + $0x50] sm:$0xff] %vm337, %v322
        %350 = vst.msk [vmem:[#allocation2 + $0x58] sm:$0x3] %vm340, %v324
        %v351 = vld [vmem:[#allocation2] sm:$0xff]
        %v352 = vld [vmem:[#allocation2 + $0x8] sm:$0xff]
        %v353 = vld [vmem:[#allocation2 + $0x10] sm:$0x3]
        %v354 = vld [vmem:[#allocation2 + $0x18] sm:$0xff]
        %v355 = vld [vmem:[#allocation2 + $0x20] sm:$0xff]
        %v356 = vld [vmem:[#allocation2 + $0x28] sm:$0x3]
        %v357 = vld [vmem:[#allocation2 + $0x30] sm:$0xff]
        %v358 = vld [vmem:[#allocation2 + $0x38] sm:$0xff]
        %v359 = vld [vmem:[#allocation2 + $0x40] sm:$0x3]
        %v360 = vld [vmem:[#allocation2 + $0x48] sm:$0xff]
        %v361 = vld [vmem:[#allocation2 + $0x50] sm:$0xff]
        %v362 = vld [vmem:[#allocation2 + $0x58] sm:$0x3]
        %375 = vrot.lane.b32.xlu0 %v351, 2
        %v376 = vpop.permute.xlu0 %375
        %377 = vrot.lane.b32.xlu0 %v352, 2
        %v378 = vpop.permute.xlu0 %377
        %379 = vrot.lane.b32.xlu0 %v353, 2
        %v380 = vpop.permute.xlu0 %379
        %381 = vrot.lane.b32.xlu0 %v354, 2
        %v382 = vpop.permute.xlu0 %381
        %383 = vrot.lane.b32.xlu0 %v355, 2
        %v384 = vpop.permute.xlu0 %383
        %385 = vrot.lane.b32.xlu0 %v356, 2
        %v386 = vpop.permute.xlu0 %385
        %387 = vrot.lane.b32.xlu0 %v357, 2
        %v388 = vpop.permute.xlu0 %387
        %389 = vrot.lane.b32.xlu0 %v358, 2
        %v390 = vpop.permute.xlu0 %389
        %391 = vrot.lane.b32.xlu0 %v359, 2
        %v392 = vpop.permute.xlu0 %391
        %393 = vrot.lane.b32.xlu0 %v360, 2
        %v394 = vpop.permute.xlu0 %393
        %395 = vrot.lane.b32.xlu0 %v361, 2
        %v396 = vpop.permute.xlu0 %395
        %397 = vrot.lane.b32.xlu0 %v362, 2
        %v398 = vpop.permute.xlu0 %397
        %vm411 = vcmask 146568
        %412 = vst.msk [vmem:[#allocation2] sm:$0xff] %vm411, %v376
        %413 = vst.msk [vmem:[#allocation2 + $0x8] sm:$0xff] %vm411, %v378
        %vm414 = vcmask 140424
        %415 = vst.msk [vmem:[#allocation2 + $0x10] sm:$0x3] %vm414, %v380
        %416 = vst.msk [vmem:[#allocation2 + $0x18] sm:$0xff] %vm411, %v382
        %417 = vst.msk [vmem:[#allocation2 + $0x20] sm:$0xff] %vm411, %v384
        %418 = vst.msk [vmem:[#allocation2 + $0x28] sm:$0x3] %vm414, %v386
        %419 = vst.msk [vmem:[#allocation2 + $0x30] sm:$0xff] %vm411, %v388
        %420 = vst.msk [vmem:[#allocation2 + $0x38] sm:$0xff] %vm411, %v390
        %421 = vst.msk [vmem:[#allocation2 + $0x40] sm:$0x3] %vm414, %v392
        %422 = vst.msk [vmem:[#allocation2 + $0x48] sm:$0xff] %vm411, %v394
        %423 = vst.msk [vmem:[#allocation2 + $0x50] sm:$0xff] %vm411, %v396
        %424 = vst.msk [vmem:[#allocation2 + $0x58] sm:$0x3] %vm414, %v398
        %v425 = vld [vmem:[#allocation2] sm:$0xff]
        %v426 = vld [vmem:[#allocation2 + $0x8] sm:$0xff]
        %v427 = vld [vmem:[#allocation2 + $0x18] sm:$0xff]
        %v428 = vld [vmem:[#allocation2 + $0x20] sm:$0xff]
        %v429 = vld [vmem:[#allocation2 + $0x30] sm:$0xff]
        %v430 = vld [vmem:[#allocation2 + $0x38] sm:$0xff]
        %v431 = vld [vmem:[#allocation2 + $0x48] sm:$0xff]
        %v432 = vld [vmem:[#allocation2 + $0x50] sm:$0xff]
        %v433 = vcombine.low %v425, %v429
        %v434 = vcombine.high %v425, %v429
        %v436 = vunpack.c.l.s4 1983009808
        %v437 = vunpack.c.0.s8 %v436
        %v438 = vlaneseq
        %v439 = vshrl.u32 %v438, 7
        %v440 = vsub.s32 %v437, %v439
        %v441 = vrot.slane %v433, %v440
        %v443 = vunpack.c.l.s4 1983009808
        %v444 = vunpack.c.0.s8 %v443
        %v445 = vlaneseq
        %v446 = vshrl.u32 %v445, 7
        %v447 = vsub.s32 %v444, %v446
        %v448 = vrot.slane %v434, %v447
        %v449 = vcombine.low %v427, %v431
        %v450 = vcombine.high %v427, %v431
        %v452 = vunpack.c.l.s4 1983009808
        %v453 = vunpack.c.0.s8 %v452
        %v454 = vlaneseq
        %v455 = vshrl.u32 %v454, 7
        %v456 = vsub.s32 %v453, %v455
        %v457 = vrot.slane %v449, %v456
        %v459 = vunpack.c.l.s4 1983009808
        %v460 = vunpack.c.0.s8 %v459
        %v461 = vlaneseq
        %v462 = vshrl.u32 %v461, 7
        %v463 = vsub.s32 %v460, %v462
        %v464 = vrot.slane %v450, %v463
        %v465 = vcombine.low %v441, %v457
        %v466 = vcombine.high %v441, %v457
        %v468 = vunpack.c.l.s4 1934713408
        %v469 = vunpack.c.0.s8 %v468
        %v470 = vlaneseq
        %v471 = vshrl.u32 %v470, 7
        %v472 = vsub.s32 %v469, %v471
        %v473 = vrot.slane %v465, %v472
        %v475 = vunpack.c.l.s4 1934713408
        %v476 = vunpack.c.0.s8 %v475
        %v477 = vlaneseq
        %v478 = vshrl.u32 %v477, 7
        %v479 = vsub.s32 %v476, %v478
        %v480 = vrot.slane %v466, %v479
        %v481 = vcombine.low %v448, %v464
        %v482 = vcombine.high %v448, %v464
        %v484 = vunpack.c.l.s4 1934713408
        %v485 = vunpack.c.0.s8 %v484
        %v486 = vlaneseq
        %v487 = vshrl.u32 %v486, 7
        %v488 = vsub.s32 %v485, %v487
        %v489 = vrot.slane %v481, %v488
        %v491 = vunpack.c.l.s4 1934713408
        %v492 = vunpack.c.0.s8 %v491
        %v493 = vlaneseq
        %v494 = vshrl.u32 %v493, 7
        %v495 = vsub.s32 %v492, %v494
        %v496 = vrot.slane %v482, %v495
        %v497 = vcombine.high %v473, 0.0
        %v498 = vcombine.high %v480, 0.0
        %v499 = vcombine.high %v489, 0.0
        %v500 = vcombine.high %v496, 0.0
        %v501 = vcombine.low %v426, %v430
        %v502 = vcombine.high %v426, %v430
        %v504 = vunpack.c.l.s4 1983009808
        %v505 = vunpack.c.0.s8 %v504
        %v506 = vlaneseq
        %v507 = vshrl.u32 %v506, 7
        %v508 = vsub.s32 %v505, %v507
        %v509 = vrot.slane %v501, %v508
        %v511 = vunpack.c.l.s4 1983009808
        %v512 = vunpack.c.0.s8 %v511
        %v513 = vlaneseq
        %v514 = vshrl.u32 %v513, 7
        %v515 = vsub.s32 %v512, %v514
        %v516 = vrot.slane %v502, %v515
        %v517 = vcombine.low %v428, %v432
        %v518 = vcombine.high %v428, %v432
        %v520 = vunpack.c.l.s4 1983009808
        %v521 = vunpack.c.0.s8 %v520
        %v522 = vlaneseq
        %v523 = vshrl.u32 %v522, 7
        %v524 = vsub.s32 %v521, %v523
        %v525 = vrot.slane %v517, %v524
        %v527 = vunpack.c.l.s4 1983009808
        %v528 = vunpack.c.0.s8 %v527
        %v529 = vlaneseq
        %v530 = vshrl.u32 %v529, 7
        %v531 = vsub.s32 %v528, %v530
        %v532 = vrot.slane %v518, %v531
        %v533 = vcombine.low %v509, %v525
        %v534 = vcombine.high %v509, %v525
        %v536 = vunpack.c.l.s4 1934713408
        %v537 = vunpack.c.0.s8 %v536
        %v538 = vlaneseq
        %v539 = vshrl.u32 %v538, 7
        %v540 = vsub.s32 %v537, %v539
        %v541 = vrot.slane %v533, %v540
        %v543 = vunpack.c.l.s4 1934713408
        %v544 = vunpack.c.0.s8 %v543
        %v545 = vlaneseq
        %v546 = vshrl.u32 %v545, 7
        %v547 = vsub.s32 %v544, %v546
        %v548 = vrot.slane %v534, %v547
        %v549 = vcombine.low %v516, %v532
        %v550 = vcombine.high %v516, %v532
        %v552 = vunpack.c.l.s4 1934713408
        %v553 = vunpack.c.0.s8 %v552
        %v554 = vlaneseq
        %v555 = vshrl.u32 %v554, 7
        %v556 = vsub.s32 %v553, %v555
        %v557 = vrot.slane %v549, %v556
        %v559 = vunpack.c.l.s4 1934713408
        %v560 = vunpack.c.0.s8 %v559
        %v561 = vlaneseq
        %v562 = vshrl.u32 %v561, 7
        %v563 = vsub.s32 %v560, %v562
        %v564 = vrot.slane %v550, %v563
        %v565 = vcombine.high %v541, 0.0
        %v566 = vcombine.high %v548, 0.0
        %v567 = vcombine.high %v557, 0.0
        %v568 = vcombine.high %v564, 0.0
        %570 = vrot.lane.b32.xlu0 %v497, 16
        %v571 = vpop.permute.xlu0 %570
        %574 = vrot.lane.b32.xlu0 %v480, 32
        %v575 = vpop.permute.xlu0 %574
        %578 = vrot.lane.b32.xlu0 %v498, 48
        %v579 = vpop.permute.xlu0 %578
        %582 = vrot.lane.b32.xlu0 %v489, 64
        %v583 = vpop.permute.xlu0 %582
        %586 = vrot.lane.b32.xlu0 %v499, 80
        %v587 = vpop.permute.xlu0 %586
        %590 = vrot.lane.b32.xlu0 %v496, 96
        %v591 = vpop.permute.xlu0 %590
        %594 = vrot.lane.b32.xlu0 %v500, 112
        %v595 = vpop.permute.xlu0 %594
        %598 = vrot.lane.b32.xlu0 %v565, 16
        %v599 = vpop.permute.xlu0 %598
        %602 = vrot.lane.b32.xlu0 %v548, 32
        %v603 = vpop.permute.xlu0 %602
        %606 = vrot.lane.b32.xlu0 %v566, 48
        %v607 = vpop.permute.xlu0 %606
        %610 = vrot.lane.b32.xlu0 %v557, 64
        %v611 = vpop.permute.xlu0 %610
        %614 = vrot.lane.b32.xlu0 %v567, 80
        %v615 = vpop.permute.xlu0 %614
        %618 = vrot.lane.b32.xlu0 %v564, 96
        %v619 = vpop.permute.xlu0 %618
        %622 = vrot.lane.b32.xlu0 %v568, 112
        %v623 = vpop.permute.xlu0 %622
        %vm625 = vcmask 130048
        %v626 = vsel %vm625, %v473, %v571
        %vm627 = vcmask 261120
        %v628 = vsel %vm627, %v626, %v575
        %vm629 = vcmask 392192
        %v630 = vsel %vm629, %v628, %v579
        %vm631 = vcmask 523264
        %v632 = vsel %vm631, %v630, %v583
        %vm633 = vcmask 654336
        %v634 = vsel %vm633, %v632, %v587
        %vm635 = vcmask 785408
        %v636 = vsel %vm635, %v634, %v591
        %vm637 = vcmask 916480
        %v638 = vsel %vm637, %v636, %v595
        %v639 = vsel %vm625, %v541, %v599
        %v640 = vsel %vm627, %v639, %v603
        %v641 = vsel %vm629, %v640, %v607
        %v642 = vsel %vm631, %v641, %v611
        %v643 = vsel %vm633, %v642, %v615
        %v644 = vsel %vm635, %v643, %v619
        %v645 = vsel %vm637, %v644, %v623
        %654 = vrot.lane.b32.xlu0 %v425, 127
        %v655 = vpop.permute.xlu0 %654
        %656 = vrot.lane.b32.xlu0 %v426, 127
        %v657 = vpop.permute.xlu0 %656
        %658 = vrot.lane.b32.xlu0 %v427, 127
        %v659 = vpop.permute.xlu0 %658
        %660 = vrot.lane.b32.xlu0 %v428, 127
        %v661 = vpop.permute.xlu0 %660
        %662 = vrot.lane.b32.xlu0 %v429, 127
        %v663 = vpop.permute.xlu0 %662
        %664 = vrot.lane.b32.xlu0 %v430, 127
        %v665 = vpop.permute.xlu0 %664
        %666 = vrot.lane.b32.xlu0 %v431, 127
        %v667 = vpop.permute.xlu0 %666
        %668 = vrot.lane.b32.xlu0 %v432, 127
        %v669 = vpop.permute.xlu0 %668
        %v678 = vcombine.low %v655, %v663
        %v679 = vcombine.high %v655, %v663
        %v681 = vunpack.c.l.s4 1983009808
        %v682 = vunpack.c.0.s8 %v681
        %v683 = vlaneseq
        %v684 = vshrl.u32 %v683, 7
        %v685 = vsub.s32 %v682, %v684
        %v686 = vrot.slane %v678, %v685
        %v688 = vunpack.c.l.s4 1983009808
        %v689 = vunpack.c.0.s8 %v688
        %v690 = vlaneseq
        %v691 = vshrl.u32 %v690, 7
        %v692 = vsub.s32 %v689, %v691
        %v693 = vrot.slane %v679, %v692
        %v694 = vcombine.low %v659, %v667
        %v695 = vcombine.high %v659, %v667
        %v697 = vunpack.c.l.s4 1983009808
        %v698 = vunpack.c.0.s8 %v697
        %v699 = vlaneseq
        %v700 = vshrl.u32 %v699, 7
        %v701 = vsub.s32 %v698, %v700
        %v702 = vrot.slane %v694, %v701
        %v704 = vunpack.c.l.s4 1983009808
        %v705 = vunpack.c.0.s8 %v704
        %v706 = vlaneseq
        %v707 = vshrl.u32 %v706, 7
        %v708 = vsub.s32 %v705, %v707
        %v709 = vrot.slane %v695, %v708
        %v710 = vcombine.low %v686, %v702
        %v711 = vcombine.high %v686, %v702
        %v713 = vunpack.c.l.s4 1934713408
        %v714 = vunpack.c.0.s8 %v713
        %v715 = vlaneseq
        %v716 = vshrl.u32 %v715, 7
        %v717 = vsub.s32 %v714, %v716
        %v718 = vrot.slane %v710, %v717
        %v720 = vunpack.c.l.s4 1934713408
        %v721 = vunpack.c.0.s8 %v720
        %v722 = vlaneseq
        %v723 = vshrl.u32 %v722, 7
        %v724 = vsub.s32 %v721, %v723
        %v725 = vrot.slane %v711, %v724
        %v726 = vcombine.low %v693, %v709
        %v727 = vcombine.high %v693, %v709
        %v729 = vunpack.c.l.s4 1934713408
        %v730 = vunpack.c.0.s8 %v729
        %v731 = vlaneseq
        %v732 = vshrl.u32 %v731, 7
        %v733 = vsub.s32 %v730, %v732
        %v734 = vrot.slane %v726, %v733
        %v736 = vunpack.c.l.s4 1934713408
        %v737 = vunpack.c.0.s8 %v736
        %v738 = vlaneseq
        %v739 = vshrl.u32 %v738, 7
        %v740 = vsub.s32 %v737, %v739
        %v741 = vrot.slane %v727, %v740
        %v742 = vcombine.high %v718, 0.0
        %v743 = vcombine.high %v725, 0.0
        %v744 = vcombine.high %v734, 0.0
        %v745 = vcombine.high %v741, 0.0
        %v746 = vcombine.low %v657, %v665
        %v747 = vcombine.high %v657, %v665
        %v749 = vunpack.c.l.s4 1983009808
        %v750 = vunpack.c.0.s8 %v749
        %v751 = vlaneseq
        %v752 = vshrl.u32 %v751, 7
        %v753 = vsub.s32 %v750, %v752
        %v754 = vrot.slane %v746, %v753
        %v756 = vunpack.c.l.s4 1983009808
        %v757 = vunpack.c.0.s8 %v756
        %v758 = vlaneseq
        %v759 = vshrl.u32 %v758, 7
        %v760 = vsub.s32 %v757, %v759
        %v761 = vrot.slane %v747, %v760
        %v762 = vcombine.low %v661, %v669
        %v763 = vcombine.high %v661, %v669
        %v765 = vunpack.c.l.s4 1983009808
        %v766 = vunpack.c.0.s8 %v765
        %v767 = vlaneseq
        %v768 = vshrl.u32 %v767, 7
        %v769 = vsub.s32 %v766, %v768
        %v770 = vrot.slane %v762, %v769
        %v772 = vunpack.c.l.s4 1983009808
        %v773 = vunpack.c.0.s8 %v772
        %v774 = vlaneseq
        %v775 = vshrl.u32 %v774, 7
        %v776 = vsub.s32 %v773, %v775
        %v777 = vrot.slane %v763, %v776
        %v778 = vcombine.low %v754, %v770
        %v779 = vcombine.high %v754, %v770
        %v781 = vunpack.c.l.s4 1934713408
        %v782 = vunpack.c.0.s8 %v781
        %v783 = vlaneseq
        %v784 = vshrl.u32 %v783, 7
        %v785 = vsub.s32 %v782, %v784
        %v786 = vrot.slane %v778, %v785
        %v788 = vunpack.c.l.s4 1934713408
        %v789 = vunpack.c.0.s8 %v788
        %v790 = vlaneseq
        %v791 = vshrl.u32 %v790, 7
        %v792 = vsub.s32 %v789, %v791
        %v793 = vrot.slane %v779, %v792
        %v794 = vcombine.low %v761, %v777
        %v795 = vcombine.high %v761, %v777
        %v797 = vunpack.c.l.s4 1934713408
        %v798 = vunpack.c.0.s8 %v797
        %v799 = vlaneseq
        %v800 = vshrl.u32 %v799, 7
        %v801 = vsub.s32 %v798, %v800
        %v802 = vrot.slane %v794, %v801
        %v804 = vunpack.c.l.s4 1934713408
        %v805 = vunpack.c.0.s8 %v804
        %v806 = vlaneseq
        %v807 = vshrl.u32 %v806, 7
        %v808 = vsub.s32 %v805, %v807
        %v809 = vrot.slane %v795, %v808
        %v810 = vcombine.high %v786, 0.0
        %v811 = vcombine.high %v793, 0.0
        %v812 = vcombine.high %v802, 0.0
        %v813 = vcombine.high %v809, 0.0
        %815 = vrot.lane.b32.xlu0 %v742, 16
        %v816 = vpop.permute.xlu0 %815
        %819 = vrot.lane.b32.xlu0 %v725, 32
        %v820 = vpop.permute.xlu0 %819
        %823 = vrot.lane.b32.xlu0 %v743, 48
        %v824 = vpop.permute.xlu0 %823
        %827 = vrot.lane.b32.xlu0 %v734, 64
        %v828 = vpop.permute.xlu0 %827
        %831 = vrot.lane.b32.xlu0 %v744, 80
        %v832 = vpop.permute.xlu0 %831
        %835 = vrot.lane.b32.xlu0 %v741, 96
        %v836 = vpop.permute.xlu0 %835
        %839 = vrot.lane.b32.xlu0 %v745, 112
        %v840 = vpop.permute.xlu0 %839
        %843 = vrot.lane.b32.xlu0 %v810, 16
        %v844 = vpop.permute.xlu0 %843
        %847 = vrot.lane.b32.xlu0 %v793, 32
        %v848 = vpop.permute.xlu0 %847
        %851 = vrot.lane.b32.xlu0 %v811, 48
        %v852 = vpop.permute.xlu0 %851
        %855 = vrot.lane.b32.xlu0 %v802, 64
        %v856 = vpop.permute.xlu0 %855
        %859 = vrot.lane.b32.xlu0 %v812, 80
        %v860 = vpop.permute.xlu0 %859
        %863 = vrot.lane.b32.xlu0 %v809, 96
        %v864 = vpop.permute.xlu0 %863
        %867 = vrot.lane.b32.xlu0 %v813, 112
        %v868 = vpop.permute.xlu0 %867
        %v870 = vsel %vm625, %v718, %v816
        %v871 = vsel %vm627, %v870, %v820
        %v872 = vsel %vm629, %v871, %v824
        %v873 = vsel %vm631, %v872, %v828
        %v874 = vsel %vm633, %v873, %v832
        %v875 = vsel %vm635, %v874, %v836
        %v876 = vsel %vm637, %v875, %v840
        %v877 = vsel %vm625, %v786, %v844
        %v878 = vsel %vm627, %v877, %v848
        %v879 = vsel %vm629, %v878, %v852
        %v880 = vsel %vm631, %v879, %v856
        %v881 = vsel %vm633, %v880, %v860
        %v882 = vsel %vm635, %v881, %v864
        %v883 = vsel %vm637, %v882, %v868
        %884 = vrot.lane.b32.xlu0 %v425, 126
        %v885 = vpop.permute.xlu0 %884
        %886 = vrot.lane.b32.xlu0 %v426, 126
        %v887 = vpop.permute.xlu0 %886
        %888 = vrot.lane.b32.xlu0 %v427, 126
        %v889 = vpop.permute.xlu0 %888
        %890 = vrot.lane.b32.xlu0 %v428, 126
        %v891 = vpop.permute.xlu0 %890
        %892 = vrot.lane.b32.xlu0 %v429, 126
        %v893 = vpop.permute.xlu0 %892
        %894 = vrot.lane.b32.xlu0 %v430, 126
        %v895 = vpop.permute.xlu0 %894
        %896 = vrot.lane.b32.xlu0 %v431, 126
        %v897 = vpop.permute.xlu0 %896
        %898 = vrot.lane.b32.xlu0 %v432, 126
        %v899 = vpop.permute.xlu0 %898
        %v908 = vcombine.low %v885, %v893
        %v909 = vcombine.high %v885, %v893
        %v911 = vunpack.c.l.s4 1983009808
        %v912 = vunpack.c.0.s8 %v911
        %v913 = vlaneseq
        %v914 = vshrl.u32 %v913, 7
        %v915 = vsub.s32 %v912, %v914
        %v916 = vrot.slane %v908, %v915
        %v918 = vunpack.c.l.s4 1983009808
        %v919 = vunpack.c.0.s8 %v918
        %v920 = vlaneseq
        %v921 = vshrl.u32 %v920, 7
        %v922 = vsub.s32 %v919, %v921
        %v923 = vrot.slane %v909, %v922
        %v924 = vcombine.low %v889, %v897
        %v925 = vcombine.high %v889, %v897
        %v927 = vunpack.c.l.s4 1983009808
        %v928 = vunpack.c.0.s8 %v927
        %v929 = vlaneseq
        %v930 = vshrl.u32 %v929, 7
        %v931 = vsub.s32 %v928, %v930
        %v932 = vrot.slane %v924, %v931
        %v934 = vunpack.c.l.s4 1983009808
        %v935 = vunpack.c.0.s8 %v934
        %v936 = vlaneseq
        %v937 = vshrl.u32 %v936, 7
        %v938 = vsub.s32 %v935, %v937
        %v939 = vrot.slane %v925, %v938
        %v940 = vcombine.low %v916, %v932
        %v941 = vcombine.high %v916, %v932
        %v943 = vunpack.c.l.s4 1934713408
        %v944 = vunpack.c.0.s8 %v943
        %v945 = vlaneseq
        %v946 = vshrl.u32 %v945, 7
        %v947 = vsub.s32 %v944, %v946
        %v948 = vrot.slane %v940, %v947
        %v950 = vunpack.c.l.s4 1934713408
        %v951 = vunpack.c.0.s8 %v950
        %v952 = vlaneseq
        %v953 = vshrl.u32 %v952, 7
        %v954 = vsub.s32 %v951, %v953
        %v955 = vrot.slane %v941, %v954
        %v956 = vcombine.low %v923, %v939
        %v957 = vcombine.high %v923, %v939
        %v959 = vunpack.c.l.s4 1934713408
        %v960 = vunpack.c.0.s8 %v959
        %v961 = vlaneseq
        %v962 = vshrl.u32 %v961, 7
        %v963 = vsub.s32 %v960, %v962
        %v964 = vrot.slane %v956, %v963
        %v966 = vunpack.c.l.s4 1934713408
        %v967 = vunpack.c.0.s8 %v966
        %v968 = vlaneseq
        %v969 = vshrl.u32 %v968, 7
        %v970 = vsub.s32 %v967, %v969
        %v971 = vrot.slane %v957, %v970
        %v972 = vcombine.high %v948, 0.0
        %v973 = vcombine.high %v955, 0.0
        %v974 = vcombine.high %v964, 0.0
        %v975 = vcombine.high %v971, 0.0
        %v976 = vcombine.low %v887, %v895
        %v977 = vcombine.high %v887, %v895
        %v979 = vunpack.c.l.s4 1983009808
        %v980 = vunpack.c.0.s8 %v979
        %v981 = vlaneseq
        %v982 = vshrl.u32 %v981, 7
        %v983 = vsub.s32 %v980, %v982
        %v984 = vrot.slane %v976, %v983
        %v986 = vunpack.c.l.s4 1983009808
        %v987 = vunpack.c.0.s8 %v986
        %v988 = vlaneseq
        %v989 = vshrl.u32 %v988, 7
        %v990 = vsub.s32 %v987, %v989
        %v991 = vrot.slane %v977, %v990
        %v992 = vcombine.low %v891, %v899
        %v993 = vcombine.high %v891, %v899
        %v995 = vunpack.c.l.s4 1983009808
        %v996 = vunpack.c.0.s8 %v995
        %v997 = vlaneseq
        %v998 = vshrl.u32 %v997, 7
        %v999 = vsub.s32 %v996, %v998
        %v1000 = vrot.slane %v992, %v999
        %v1002 = vunpack.c.l.s4 1983009808
        %v1003 = vunpack.c.0.s8 %v1002
        %v1004 = vlaneseq
        %v1005 = vshrl.u32 %v1004, 7
        %v1006 = vsub.s32 %v1003, %v1005
        %v1007 = vrot.slane %v993, %v1006
        %v1008 = vcombine.low %v984, %v1000
        %v1009 = vcombine.high %v984, %v1000
        %v1011 = vunpack.c.l.s4 1934713408
        %v1012 = vunpack.c.0.s8 %v1011
        %v1013 = vlaneseq
        %v1014 = vshrl.u32 %v1013, 7
        %v1015 = vsub.s32 %v1012, %v1014
        %v1016 = vrot.slane %v1008, %v1015
        %v1018 = vunpack.c.l.s4 1934713408
        %v1019 = vunpack.c.0.s8 %v1018
        %v1020 = vlaneseq
        %v1021 = vshrl.u32 %v1020, 7
        %v1022 = vsub.s32 %v1019, %v1021
        %v1023 = vrot.slane %v1009, %v1022
        %v1024 = vcombine.low %v991, %v1007
        %v1025 = vcombine.high %v991, %v1007
        %v1027 = vunpack.c.l.s4 1934713408
        %v1028 = vunpack.c.0.s8 %v1027
        %v1029 = vlaneseq
        %v1030 = vshrl.u32 %v1029, 7
        %v1031 = vsub.s32 %v1028, %v1030
        %v1032 = vrot.slane %v1024, %v1031
        %v1034 = vunpack.c.l.s4 1934713408
        %v1035 = vunpack.c.0.s8 %v1034
        %v1036 = vlaneseq
        %v1037 = vshrl.u32 %v1036, 7
        %v1038 = vsub.s32 %v1035, %v1037
        %v1039 = vrot.slane %v1025, %v1038
        %v1040 = vcombine.high %v1016, 0.0
        %v1041 = vcombine.high %v1023, 0.0
        %v1042 = vcombine.high %v1032, 0.0
        %v1043 = vcombine.high %v1039, 0.0
        %1045 = vrot.lane.b32.xlu0 %v972, 16
        %v1046 = vpop.permute.xlu0 %1045
        %1049 = vrot.lane.b32.xlu0 %v955, 32
        %v1050 = vpop.permute.xlu0 %1049
        %1053 = vrot.lane.b32.xlu0 %v973, 48
        %v1054 = vpop.permute.xlu0 %1053
        %1057 = vrot.lane.b32.xlu0 %v964, 64
        %v1058 = vpop.permute.xlu0 %1057
        %1061 = vrot.lane.b32.xlu0 %v974, 80
        %v1062 = vpop.permute.xlu0 %1061
        %1065 = vrot.lane.b32.xlu0 %v971, 96
        %v1066 = vpop.permute.xlu0 %1065
        %1069 = vrot.lane.b32.xlu0 %v975, 112
        %v1070 = vpop.permute.xlu0 %1069
        %1073 = vrot.lane.b32.xlu0 %v1040, 16
        %v1074 = vpop.permute.xlu0 %1073
        %1077 = vrot.lane.b32.xlu0 %v1023, 32
        %v1078 = vpop.permute.xlu0 %1077
        %1081 = vrot.lane.b32.xlu0 %v1041, 48
        %v1082 = vpop.permute.xlu0 %1081
        %1085 = vrot.lane.b32.xlu0 %v1032, 64
        %v1086 = vpop.permute.xlu0 %1085
        %1089 = vrot.lane.b32.xlu0 %v1042, 80
        %v1090 = vpop.permute.xlu0 %1089
        %1093 = vrot.lane.b32.xlu0 %v1039, 96
        %v1094 = vpop.permute.xlu0 %1093
        %1097 = vrot.lane.b32.xlu0 %v1043, 112
        %v1098 = vpop.permute.xlu0 %1097
        %v1100 = vsel %vm625, %v948, %v1046
        %v1101 = vsel %vm627, %v1100, %v1050
        %v1102 = vsel %vm629, %v1101, %v1054
        %v1103 = vsel %vm631, %v1102, %v1058
        %v1104 = vsel %vm633, %v1103, %v1062
        %v1105 = vsel %vm635, %v1104, %v1066
        %v1106 = vsel %vm637, %v1105, %v1070
        %v1107 = vsel %vm625, %v1016, %v1074
        %v1108 = vsel %vm627, %v1107, %v1078
        %v1109 = vsel %vm629, %v1108, %v1082
        %v1110 = vsel %vm631, %v1109, %v1086
        %v1111 = vsel %vm633, %v1110, %v1090
        %v1112 = vsel %vm635, %v1111, %v1094
        %v1113 = vsel %vm637, %v1112, %v1098
        %v1114 = vld [vmem:[#allocation2 + $0x1] sm:$0xff]
        %v1115 = vld [vmem:[#allocation2 + $0x9] sm:$0xff]
        %v1116 = vld [vmem:[#allocation2 + $0x19] sm:$0xff]
        %v1117 = vld [vmem:[#allocation2 + $0x21] sm:$0xff]
        %v1118 = vld [vmem:[#allocation2 + $0x31] sm:$0xff]
        %v1119 = vld [vmem:[#allocation2 + $0x39] sm:$0xff]
        %v1120 = vld [vmem:[#allocation2 + $0x49] sm:$0xff]
        %v1121 = vld [vmem:[#allocation2 + $0x51] sm:$0xff]
        %v1122 = vcombine.low %v1114, %v1118
        %v1123 = vcombine.high %v1114, %v1118
        %v1125 = vunpack.c.l.s4 1983009808
        %v1126 = vunpack.c.0.s8 %v1125
        %v1127 = vlaneseq
        %v1128 = vshrl.u32 %v1127, 7
        %v1129 = vsub.s32 %v1126, %v1128
        %v1130 = vrot.slane %v1122, %v1129
        %v1132 = vunpack.c.l.s4 1983009808
        %v1133 = vunpack.c.0.s8 %v1132
        %v1134 = vlaneseq
        %v1135 = vshrl.u32 %v1134, 7
        %v1136 = vsub.s32 %v1133, %v1135
        %v1137 = vrot.slane %v1123, %v1136
        %v1138 = vcombine.low %v1116, %v1120
        %v1139 = vcombine.high %v1116, %v1120
        %v1141 = vunpack.c.l.s4 1983009808
        %v1142 = vunpack.c.0.s8 %v1141
        %v1143 = vlaneseq
        %v1144 = vshrl.u32 %v1143, 7
        %v1145 = vsub.s32 %v1142, %v1144
        %v1146 = vrot.slane %v1138, %v1145
        %v1148 = vunpack.c.l.s4 1983009808
        %v1149 = vunpack.c.0.s8 %v1148
        %v1150 = vlaneseq
        %v1151 = vshrl.u32 %v1150, 7
        %v1152 = vsub.s32 %v1149, %v1151
        %v1153 = vrot.slane %v1139, %v1152
        %v1154 = vcombine.low %v1130, %v1146
        %v1155 = vcombine.high %v1130, %v1146
        %v1157 = vunpack.c.l.s4 1934713408
        %v1158 = vunpack.c.0.s8 %v1157
        %v1159 = vlaneseq
        %v1160 = vshrl.u32 %v1159, 7
        %v1161 = vsub.s32 %v1158, %v1160
        %v1162 = vrot.slane %v1154, %v1161
        %v1164 = vunpack.c.l.s4 1934713408
        %v1165 = vunpack.c.0.s8 %v1164
        %v1166 = vlaneseq
        %v1167 = vshrl.u32 %v1166, 7
        %v1168 = vsub.s32 %v1165, %v1167
        %v1169 = vrot.slane %v1155, %v1168
        %v1170 = vcombine.low %v1137, %v1153
        %v1171 = vcombine.high %v1137, %v1153
        %v1173 = vunpack.c.l.s4 1934713408
        %v1174 = vunpack.c.0.s8 %v1173
        %v1175 = vlaneseq
        %v1176 = vshrl.u32 %v1175, 7
        %v1177 = vsub.s32 %v1174, %v1176
        %v1178 = vrot.slane %v1170, %v1177
        %v1180 = vunpack.c.l.s4 1934713408
        %v1181 = vunpack.c.0.s8 %v1180
        %v1182 = vlaneseq
        %v1183 = vshrl.u32 %v1182, 7
        %v1184 = vsub.s32 %v1181, %v1183
        %v1185 = vrot.slane %v1171, %v1184
        %v1186 = vcombine.high %v1162, 0.0
        %v1187 = vcombine.high %v1169, 0.0
        %v1188 = vcombine.high %v1178, 0.0
        %v1189 = vcombine.high %v1185, 0.0
        %v1190 = vcombine.low %v1115, %v1119
        %v1191 = vcombine.high %v1115, %v1119
        %v1193 = vunpack.c.l.s4 1983009808
        %v1194 = vunpack.c.0.s8 %v1193
        %v1195 = vlaneseq
        %v1196 = vshrl.u32 %v1195, 7
        %v1197 = vsub.s32 %v1194, %v1196
        %v1198 = vrot.slane %v1190, %v1197
        %v1200 = vunpack.c.l.s4 1983009808
        %v1201 = vunpack.c.0.s8 %v1200
        %v1202 = vlaneseq
        %v1203 = vshrl.u32 %v1202, 7
        %v1204 = vsub.s32 %v1201, %v1203
        %v1205 = vrot.slane %v1191, %v1204
        %v1206 = vcombine.low %v1117, %v1121
        %v1207 = vcombine.high %v1117, %v1121
        %v1209 = vunpack.c.l.s4 1983009808
        %v1210 = vunpack.c.0.s8 %v1209
        %v1211 = vlaneseq
        %v1212 = vshrl.u32 %v1211, 7
        %v1213 = vsub.s32 %v1210, %v1212
        %v1214 = vrot.slane %v1206, %v1213
        %v1216 = vunpack.c.l.s4 1983009808
        %v1217 = vunpack.c.0.s8 %v1216
        %v1218 = vlaneseq
        %v1219 = vshrl.u32 %v1218, 7
        %v1220 = vsub.s32 %v1217, %v1219
        %v1221 = vrot.slane %v1207, %v1220
        %v1222 = vcombine.low %v1198, %v1214
        %v1223 = vcombine.high %v1198, %v1214
        %v1225 = vunpack.c.l.s4 1934713408
        %v1226 = vunpack.c.0.s8 %v1225
        %v1227 = vlaneseq
        %v1228 = vshrl.u32 %v1227, 7
        %v1229 = vsub.s32 %v1226, %v1228
        %v1230 = vrot.slane %v1222, %v1229
        %v1232 = vunpack.c.l.s4 1934713408
        %v1233 = vunpack.c.0.s8 %v1232
        %v1234 = vlaneseq
        %v1235 = vshrl.u32 %v1234, 7
        %v1236 = vsub.s32 %v1233, %v1235
        %v1237 = vrot.slane %v1223, %v1236
        %v1238 = vcombine.low %v1205, %v1221
        %v1239 = vcombine.high %v1205, %v1221
        %v1241 = vunpack.c.l.s4 1934713408
        %v1242 = vunpack.c.0.s8 %v1241
        %v1243 = vlaneseq
        %v1244 = vshrl.u32 %v1243, 7
        %v1245 = vsub.s32 %v1242, %v1244
        %v1246 = vrot.slane %v1238, %v1245
        %v1248 = vunpack.c.l.s4 1934713408
        %v1249 = vunpack.c.0.s8 %v1248
        %v1250 = vlaneseq
        %v1251 = vshrl.u32 %v1250, 7
        %v1252 = vsub.s32 %v1249, %v1251
        %v1253 = vrot.slane %v1239, %v1252
        %v1254 = vcombine.high %v1230, 0.0
        %v1255 = vcombine.high %v1237, 0.0
        %v1256 = vcombine.high %v1246, 0.0
        %v1257 = vcombine.high %v1253, 0.0
        %1259 = vrot.lane.b32.xlu0 %v1186, 16
        %v1260 = vpop.permute.xlu0 %1259
        %1263 = vrot.lane.b32.xlu0 %v1169, 32
        %v1264 = vpop.permute.xlu0 %1263
        %1267 = vrot.lane.b32.xlu0 %v1187, 48
        %v1268 = vpop.permute.xlu0 %1267
        %1271 = vrot.lane.b32.xlu0 %v1178, 64
        %v1272 = vpop.permute.xlu0 %1271
        %1275 = vrot.lane.b32.xlu0 %v1188, 80
        %v1276 = vpop.permute.xlu0 %1275
        %1279 = vrot.lane.b32.xlu0 %v1185, 96
        %v1280 = vpop.permute.xlu0 %1279
        %1283 = vrot.lane.b32.xlu0 %v1189, 112
        %v1284 = vpop.permute.xlu0 %1283
        %1287 = vrot.lane.b32.xlu0 %v1254, 16
        %v1288 = vpop.permute.xlu0 %1287
        %1291 = vrot.lane.b32.xlu0 %v1237, 32
        %v1292 = vpop.permute.xlu0 %1291
        %1295 = vrot.lane.b32.xlu0 %v1255, 48
        %v1296 = vpop.permute.xlu0 %1295
        %1299 = vrot.lane.b32.xlu0 %v1246, 64
        %v1300 = vpop.permute.xlu0 %1299
        %1303 = vrot.lane.b32.xlu0 %v1256, 80
        %v1304 = vpop.permute.xlu0 %1303
        %1307 = vrot.lane.b32.xlu0 %v1253, 96
        %v1308 = vpop.permute.xlu0 %1307
        %1311 = vrot.lane.b32.xlu0 %v1257, 112
        %v1312 = vpop.permute.xlu0 %1311
        %v1314 = vsel %vm625, %v1162, %v1260
        %v1315 = vsel %vm627, %v1314, %v1264
        %v1316 = vsel %vm629, %v1315, %v1268
        %v1317 = vsel %vm631, %v1316, %v1272
        %v1318 = vsel %vm633, %v1317, %v1276
        %v1319 = vsel %vm635, %v1318, %v1280
        %v1320 = vsel %vm637, %v1319, %v1284
        %v1321 = vsel %vm625, %v1230, %v1288
        %v1322 = vsel %vm627, %v1321, %v1292
        %v1323 = vsel %vm629, %v1322, %v1296
        %v1324 = vsel %vm631, %v1323, %v1300
        %v1325 = vsel %vm633, %v1324, %v1304
        %v1326 = vsel %vm635, %v1325, %v1308
        %v1327 = vsel %vm637, %v1326, %v1312
        %1336 = vrot.lane.b32.xlu0 %v1114, 127
        %v1337 = vpop.permute.xlu0 %1336
        %1338 = vrot.lane.b32.xlu0 %v1115, 127
        %v1339 = vpop.permute.xlu0 %1338
        %1340 = vrot.lane.b32.xlu0 %v1116, 127
        %v1341 = vpop.permute.xlu0 %1340
        %1342 = vrot.lane.b32.xlu0 %v1117, 127
        %v1343 = vpop.permute.xlu0 %1342
        %1344 = vrot.lane.b32.xlu0 %v1118, 127
        %v1345 = vpop.permute.xlu0 %1344
        %1346 = vrot.lane.b32.xlu0 %v1119, 127
        %v1347 = vpop.permute.xlu0 %1346
        %1348 = vrot.lane.b32.xlu0 %v1120, 127
        %v1349 = vpop.permute.xlu0 %1348
        %1350 = vrot.lane.b32.xlu0 %v1121, 127
        %v1351 = vpop.permute.xlu0 %1350
        %v1360 = vcombine.low %v1337, %v1345
        %v1361 = vcombine.high %v1337, %v1345
        %v1363 = vunpack.c.l.s4 1983009808
        %v1364 = vunpack.c.0.s8 %v1363
        %v1365 = vlaneseq
        %v1366 = vshrl.u32 %v1365, 7
        %v1367 = vsub.s32 %v1364, %v1366
        %v1368 = vrot.slane %v1360, %v1367
        %v1370 = vunpack.c.l.s4 1983009808
        %v1371 = vunpack.c.0.s8 %v1370
        %v1372 = vlaneseq
        %v1373 = vshrl.u32 %v1372, 7
        %v1374 = vsub.s32 %v1371, %v1373
        %v1375 = vrot.slane %v1361, %v1374
        %v1376 = vcombine.low %v1341, %v1349
        %v1377 = vcombine.high %v1341, %v1349
        %v1379 = vunpack.c.l.s4 1983009808
        %v1380 = vunpack.c.0.s8 %v1379
        %v1381 = vlaneseq
        %v1382 = vshrl.u32 %v1381, 7
        %v1383 = vsub.s32 %v1380, %v1382
        %v1384 = vrot.slane %v1376, %v1383
        %v1386 = vunpack.c.l.s4 1983009808
        %v1387 = vunpack.c.0.s8 %v1386
        %v1388 = vlaneseq
        %v1389 = vshrl.u32 %v1388, 7
        %v1390 = vsub.s32 %v1387, %v1389
        %v1391 = vrot.slane %v1377, %v1390
        %v1392 = vcombine.low %v1368, %v1384
        %v1393 = vcombine.high %v1368, %v1384
        %v1395 = vunpack.c.l.s4 1934713408
        %v1396 = vunpack.c.0.s8 %v1395
        %v1397 = vlaneseq
        %v1398 = vshrl.u32 %v1397, 7
        %v1399 = vsub.s32 %v1396, %v1398
        %v1400 = vrot.slane %v1392, %v1399
        %v1402 = vunpack.c.l.s4 1934713408
        %v1403 = vunpack.c.0.s8 %v1402
        %v1404 = vlaneseq
        %v1405 = vshrl.u32 %v1404, 7
        %v1406 = vsub.s32 %v1403, %v1405
        %v1407 = vrot.slane %v1393, %v1406
        %v1408 = vcombine.low %v1375, %v1391
        %v1409 = vcombine.high %v1375, %v1391
        %v1411 = vunpack.c.l.s4 1934713408
        %v1412 = vunpack.c.0.s8 %v1411
        %v1413 = vlaneseq
        %v1414 = vshrl.u32 %v1413, 7
        %v1415 = vsub.s32 %v1412, %v1414
        %v1416 = vrot.slane %v1408, %v1415
        %v1418 = vunpack.c.l.s4 1934713408
        %v1419 = vunpack.c.0.s8 %v1418
        %v1420 = vlaneseq
        %v1421 = vshrl.u32 %v1420, 7
        %v1422 = vsub.s32 %v1419, %v1421
        %v1423 = vrot.slane %v1409, %v1422
        %v1424 = vcombine.high %v1400, 0.0
        %v1425 = vcombine.high %v1407, 0.0
        %v1426 = vcombine.high %v1416, 0.0
        %v1427 = vcombine.high %v1423, 0.0
        %v1428 = vcombine.low %v1339, %v1347
        %v1429 = vcombine.high %v1339, %v1347
        %v1431 = vunpack.c.l.s4 1983009808
        %v1432 = vunpack.c.0.s8 %v1431
        %v1433 = vlaneseq
        %v1434 = vshrl.u32 %v1433, 7
        %v1435 = vsub.s32 %v1432, %v1434
        %v1436 = vrot.slane %v1428, %v1435
        %v1438 = vunpack.c.l.s4 1983009808
        %v1439 = vunpack.c.0.s8 %v1438
        %v1440 = vlaneseq
        %v1441 = vshrl.u32 %v1440, 7
        %v1442 = vsub.s32 %v1439, %v1441
        %v1443 = vrot.slane %v1429, %v1442
        %v1444 = vcombine.low %v1343, %v1351
        %v1445 = vcombine.high %v1343, %v1351
        %v1447 = vunpack.c.l.s4 1983009808
        %v1448 = vunpack.c.0.s8 %v1447
        %v1449 = vlaneseq
        %v1450 = vshrl.u32 %v1449, 7
        %v1451 = vsub.s32 %v1448, %v1450
        %v1452 = vrot.slane %v1444, %v1451
        %v1454 = vunpack.c.l.s4 1983009808
        %v1455 = vunpack.c.0.s8 %v1454
        %v1456 = vlaneseq
        %v1457 = vshrl.u32 %v1456, 7
        %v1458 = vsub.s32 %v1455, %v1457
        %v1459 = vrot.slane %v1445, %v1458
        %v1460 = vcombine.low %v1436, %v1452
        %v1461 = vcombine.high %v1436, %v1452
        %v1463 = vunpack.c.l.s4 1934713408
        %v1464 = vunpack.c.0.s8 %v1463
        %v1465 = vlaneseq
        %v1466 = vshrl.u32 %v1465, 7
        %v1467 = vsub.s32 %v1464, %v1466
        %v1468 = vrot.slane %v1460, %v1467
        %v1470 = vunpack.c.l.s4 1934713408
        %v1471 = vunpack.c.0.s8 %v1470
        %v1472 = vlaneseq
        %v1473 = vshrl.u32 %v1472, 7
        %v1474 = vsub.s32 %v1471, %v1473
        %v1475 = vrot.slane %v1461, %v1474
        %v1476 = vcombine.low %v1443, %v1459
        %v1477 = vcombine.high %v1443, %v1459
        %v1479 = vunpack.c.l.s4 1934713408
        %v1480 = vunpack.c.0.s8 %v1479
        %v1481 = vlaneseq
        %v1482 = vshrl.u32 %v1481, 7
        %v1483 = vsub.s32 %v1480, %v1482
        %v1484 = vrot.slane %v1476, %v1483
        %v1486 = vunpack.c.l.s4 1934713408
        %v1487 = vunpack.c.0.s8 %v1486
        %v1488 = vlaneseq
        %v1489 = vshrl.u32 %v1488, 7
        %v1490 = vsub.s32 %v1487, %v1489
        %v1491 = vrot.slane %v1477, %v1490
        %v1492 = vcombine.high %v1468, 0.0
        %v1493 = vcombine.high %v1475, 0.0
        %v1494 = vcombine.high %v1484, 0.0
        %v1495 = vcombine.high %v1491, 0.0
        %1497 = vrot.lane.b32.xlu0 %v1424, 16
        %v1498 = vpop.permute.xlu0 %1497
        %1501 = vrot.lane.b32.xlu0 %v1407, 32
        %v1502 = vpop.permute.xlu0 %1501
        %1505 = vrot.lane.b32.xlu0 %v1425, 48
        %v1506 = vpop.permute.xlu0 %1505
        %1509 = vrot.lane.b32.xlu0 %v1416, 64
        %v1510 = vpop.permute.xlu0 %1509
        %1513 = vrot.lane.b32.xlu0 %v1426, 80
        %v1514 = vpop.permute.xlu0 %1513
        %1517 = vrot.lane.b32.xlu0 %v1423, 96
        %v1518 = vpop.permute.xlu0 %1517
        %1521 = vrot.lane.b32.xlu0 %v1427, 112
        %v1522 = vpop.permute.xlu0 %1521
        %1525 = vrot.lane.b32.xlu0 %v1492, 16
        %v1526 = vpop.permute.xlu0 %1525
        %1529 = vrot.lane.b32.xlu0 %v1475, 32
        %v1530 = vpop.permute.xlu0 %1529
        %1533 = vrot.lane.b32.xlu0 %v1493, 48
        %v1534 = vpop.permute.xlu0 %1533
        %1537 = vrot.lane.b32.xlu0 %v1484, 64
        %v1538 = vpop.permute.xlu0 %1537
        %1541 = vrot.lane.b32.xlu0 %v1494, 80
        %v1542 = vpop.permute.xlu0 %1541
        %1545 = vrot.lane.b32.xlu0 %v1491, 96
        %v1546 = vpop.permute.xlu0 %1545
        %1549 = vrot.lane.b32.xlu0 %v1495, 112
        %v1550 = vpop.permute.xlu0 %1549
        %v1552 = vsel %vm625, %v1400, %v1498
        %v1553 = vsel %vm627, %v1552, %v1502
        %v1554 = vsel %vm629, %v1553, %v1506
        %v1555 = vsel %vm631, %v1554, %v1510
        %v1556 = vsel %vm633, %v1555, %v1514
        %v1557 = vsel %vm635, %v1556, %v1518
        %v1558 = vsel %vm637, %v1557, %v1522
        %v1559 = vsel %vm625, %v1468, %v1526
        %v1560 = vsel %vm627, %v1559, %v1530
        %v1561 = vsel %vm629, %v1560, %v1534
        %v1562 = vsel %vm631, %v1561, %v1538
        %v1563 = vsel %vm633, %v1562, %v1542
        %v1564 = vsel %vm635, %v1563, %v1546
        %v1565 = vsel %vm637, %v1564, %v1550
        %1566 = vrot.lane.b32.xlu0 %v1114, 126
        %v1567 = vpop.permute.xlu0 %1566
        %1568 = vrot.lane.b32.xlu0 %v1115, 126
        %v1569 = vpop.permute.xlu0 %1568
        %1570 = vrot.lane.b32.xlu0 %v1116, 126
        %v1571 = vpop.permute.xlu0 %1570
        %1572 = vrot.lane.b32.xlu0 %v1117, 126
        %v1573 = vpop.permute.xlu0 %1572
        %1574 = vrot.lane.b32.xlu0 %v1118, 126
        %v1575 = vpop.permute.xlu0 %1574
        %1576 = vrot.lane.b32.xlu0 %v1119, 126
        %v1577 = vpop.permute.xlu0 %1576
        %1578 = vrot.lane.b32.xlu0 %v1120, 126
        %v1579 = vpop.permute.xlu0 %1578
        %1580 = vrot.lane.b32.xlu0 %v1121, 126
        %v1581 = vpop.permute.xlu0 %1580
        %v1590 = vcombine.low %v1567, %v1575
        %v1591 = vcombine.high %v1567, %v1575
        %v1593 = vunpack.c.l.s4 1983009808
        %v1594 = vunpack.c.0.s8 %v1593
        %v1595 = vlaneseq
        %v1596 = vshrl.u32 %v1595, 7
        %v1597 = vsub.s32 %v1594, %v1596
        %v1598 = vrot.slane %v1590, %v1597
        %v1600 = vunpack.c.l.s4 1983009808
        %v1601 = vunpack.c.0.s8 %v1600
        %v1602 = vlaneseq
        %v1603 = vshrl.u32 %v1602, 7
        %v1604 = vsub.s32 %v1601, %v1603
        %v1605 = vrot.slane %v1591, %v1604
        %v1606 = vcombine.low %v1571, %v1579
        %v1607 = vcombine.high %v1571, %v1579
        %v1609 = vunpack.c.l.s4 1983009808
        %v1610 = vunpack.c.0.s8 %v1609
        %v1611 = vlaneseq
        %v1612 = vshrl.u32 %v1611, 7
        %v1613 = vsub.s32 %v1610, %v1612
        %v1614 = vrot.slane %v1606, %v1613
        %v1616 = vunpack.c.l.s4 1983009808
        %v1617 = vunpack.c.0.s8 %v1616
        %v1618 = vlaneseq
        %v1619 = vshrl.u32 %v1618, 7
        %v1620 = vsub.s32 %v1617, %v1619
        %v1621 = vrot.slane %v1607, %v1620
        %v1622 = vcombine.low %v1598, %v1614
        %v1623 = vcombine.high %v1598, %v1614
        %v1625 = vunpack.c.l.s4 1934713408
        %v1626 = vunpack.c.0.s8 %v1625
        %v1627 = vlaneseq
        %v1628 = vshrl.u32 %v1627, 7
        %v1629 = vsub.s32 %v1626, %v1628
        %v1630 = vrot.slane %v1622, %v1629
        %v1632 = vunpack.c.l.s4 1934713408
        %v1633 = vunpack.c.0.s8 %v1632
        %v1634 = vlaneseq
        %v1635 = vshrl.u32 %v1634, 7
        %v1636 = vsub.s32 %v1633, %v1635
        %v1637 = vrot.slane %v1623, %v1636
        %v1638 = vcombine.low %v1605, %v1621
        %v1639 = vcombine.high %v1605, %v1621
        %v1641 = vunpack.c.l.s4 1934713408
        %v1642 = vunpack.c.0.s8 %v1641
        %v1643 = vlaneseq
        %v1644 = vshrl.u32 %v1643, 7
        %v1645 = vsub.s32 %v1642, %v1644
        %v1646 = vrot.slane %v1638, %v1645
        %v1648 = vunpack.c.l.s4 1934713408
        %v1649 = vunpack.c.0.s8 %v1648
        %v1650 = vlaneseq
        %v1651 = vshrl.u32 %v1650, 7
        %v1652 = vsub.s32 %v1649, %v1651
        %v1653 = vrot.slane %v1639, %v1652
        %v1654 = vcombine.high %v1630, 0.0
        %v1655 = vcombine.high %v1637, 0.0
        %v1656 = vcombine.high %v1646, 0.0
        %v1657 = vcombine.high %v1653, 0.0
        %v1658 = vcombine.low %v1569, %v1577
        %v1659 = vcombine.high %v1569, %v1577
        %v1661 = vunpack.c.l.s4 1983009808
        %v1662 = vunpack.c.0.s8 %v1661
        %v1663 = vlaneseq
        %v1664 = vshrl.u32 %v1663, 7
        %v1665 = vsub.s32 %v1662, %v1664
        %v1666 = vrot.slane %v1658, %v1665
        %v1668 = vunpack.c.l.s4 1983009808
        %v1669 = vunpack.c.0.s8 %v1668
        %v1670 = vlaneseq
        %v1671 = vshrl.u32 %v1670, 7
        %v1672 = vsub.s32 %v1669, %v1671
        %v1673 = vrot.slane %v1659, %v1672
        %v1674 = vcombine.low %v1573, %v1581
        %v1675 = vcombine.high %v1573, %v1581
        %v1677 = vunpack.c.l.s4 1983009808
        %v1678 = vunpack.c.0.s8 %v1677
        %v1679 = vlaneseq
        %v1680 = vshrl.u32 %v1679, 7
        %v1681 = vsub.s32 %v1678, %v1680
        %v1682 = vrot.slane %v1674, %v1681
        %v1684 = vunpack.c.l.s4 1983009808
        %v1685 = vunpack.c.0.s8 %v1684
        %v1686 = vlaneseq
        %v1687 = vshrl.u32 %v1686, 7
        %v1688 = vsub.s32 %v1685, %v1687
        %v1689 = vrot.slane %v1675, %v1688
        %v1690 = vcombine.low %v1666, %v1682
        %v1691 = vcombine.high %v1666, %v1682
        %v1693 = vunpack.c.l.s4 1934713408
        %v1694 = vunpack.c.0.s8 %v1693
        %v1695 = vlaneseq
        %v1696 = vshrl.u32 %v1695, 7
        %v1697 = vsub.s32 %v1694, %v1696
        %v1698 = vrot.slane %v1690, %v1697
        %v1700 = vunpack.c.l.s4 1934713408
        %v1701 = vunpack.c.0.s8 %v1700
        %v1702 = vlaneseq
        %v1703 = vshrl.u32 %v1702, 7
        %v1704 = vsub.s32 %v1701, %v1703
        %v1705 = vrot.slane %v1691, %v1704
        %v1706 = vcombine.low %v1673, %v1689
        %v1707 = vcombine.high %v1673, %v1689
        %v1709 = vunpack.c.l.s4 1934713408
        %v1710 = vunpack.c.0.s8 %v1709
        %v1711 = vlaneseq
        %v1712 = vshrl.u32 %v1711, 7
        %v1713 = vsub.s32 %v1710, %v1712
        %v1714 = vrot.slane %v1706, %v1713
        %v1716 = vunpack.c.l.s4 1934713408
        %v1717 = vunpack.c.0.s8 %v1716
        %v1718 = vlaneseq
        %v1719 = vshrl.u32 %v1718, 7
        %v1720 = vsub.s32 %v1717, %v1719
        %v1721 = vrot.slane %v1707, %v1720
        %v1722 = vcombine.high %v1698, 0.0
        %v1723 = vcombine.high %v1705, 0.0
        %v1724 = vcombine.high %v1714, 0.0
        %v1725 = vcombine.high %v1721, 0.0
        %1727 = vrot.lane.b32.xlu0 %v1654, 16
        %v1728 = vpop.permute.xlu0 %1727
        %1731 = vrot.lane.b32.xlu0 %v1637, 32
        %v1732 = vpop.permute.xlu0 %1731
        %1735 = vrot.lane.b32.xlu0 %v1655, 48
        %v1736 = vpop.permute.xlu0 %1735
        %1739 = vrot.lane.b32.xlu0 %v1646, 64
        %v1740 = vpop.permute.xlu0 %1739
        %1743 = vrot.lane.b32.xlu0 %v1656, 80
        %v1744 = vpop.permute.xlu0 %1743
        %1747 = vrot.lane.b32.xlu0 %v1653, 96
        %v1748 = vpop.permute.xlu0 %1747
        %1751 = vrot.lane.b32.xlu0 %v1657, 112
        %v1752 = vpop.permute.xlu0 %1751
        %1755 = vrot.lane.b32.xlu0 %v1722, 16
        %v1756 = vpop.permute.xlu0 %1755
        %1759 = vrot.lane.b32.xlu0 %v1705, 32
        %v1760 = vpop.permute.xlu0 %1759
        %1763 = vrot.lane.b32.xlu0 %v1723, 48
        %v1764 = vpop.permute.xlu0 %1763
        %1767 = vrot.lane.b32.xlu0 %v1714, 64
        %v1768 = vpop.permute.xlu0 %1767
        %1771 = vrot.lane.b32.xlu0 %v1724, 80
        %v1772 = vpop.permute.xlu0 %1771
        %1775 = vrot.lane.b32.xlu0 %v1721, 96
        %v1776 = vpop.permute.xlu0 %1775
        %1779 = vrot.lane.b32.xlu0 %v1725, 112
        %v1780 = vpop.permute.xlu0 %1779
        %v1782 = vsel %vm625, %v1630, %v1728
        %v1783 = vsel %vm627, %v1782, %v1732
        %v1784 = vsel %vm629, %v1783, %v1736
        %v1785 = vsel %vm631, %v1784, %v1740
        %v1786 = vsel %vm633, %v1785, %v1744
        %v1787 = vsel %vm635, %v1786, %v1748
        %v1788 = vsel %vm637, %v1787, %v1752
        %v1789 = vsel %vm625, %v1698, %v1756
        %v1790 = vsel %vm627, %v1789, %v1760
        %v1791 = vsel %vm629, %v1790, %v1764
        %v1792 = vsel %vm631, %v1791, %v1768
        %v1793 = vsel %vm633, %v1792, %v1772
        %v1794 = vsel %vm635, %v1793, %v1776
        %v1795 = vsel %vm637, %v1794, %v1780
        %v1796 = vld [vmem:[#allocation2 + $0x2] sm:$0xff]
        %v1797 = vld [vmem:[#allocation2 + $0xa] sm:$0xff]
        %v1798 = vld [vmem:[#allocation2 + $0x1a] sm:$0xff]
        %v1799 = vld [vmem:[#allocation2 + $0x22] sm:$0xff]
        %v1800 = vld [vmem:[#allocation2 + $0x32] sm:$0xff]
        %v1801 = vld [vmem:[#allocation2 + $0x3a] sm:$0xff]
        %v1802 = vld [vmem:[#allocation2 + $0x4a] sm:$0xff]
        %v1803 = vld [vmem:[#allocation2 + $0x52] sm:$0xff]
        %v1804 = vcombine.low %v1796, %v1800
        %v1805 = vcombine.high %v1796, %v1800
        %v1807 = vunpack.c.l.s4 1983009808
        %v1808 = vunpack.c.0.s8 %v1807
        %v1809 = vlaneseq
        %v1810 = vshrl.u32 %v1809, 7
        %v1811 = vsub.s32 %v1808, %v1810
        %v1812 = vrot.slane %v1804, %v1811
        %v1814 = vunpack.c.l.s4 1983009808
        %v1815 = vunpack.c.0.s8 %v1814
        %v1816 = vlaneseq
        %v1817 = vshrl.u32 %v1816, 7
        %v1818 = vsub.s32 %v1815, %v1817
        %v1819 = vrot.slane %v1805, %v1818
        %v1820 = vcombine.low %v1798, %v1802
        %v1821 = vcombine.high %v1798, %v1802
        %v1823 = vunpack.c.l.s4 1983009808
        %v1824 = vunpack.c.0.s8 %v1823
        %v1825 = vlaneseq
        %v1826 = vshrl.u32 %v1825, 7
        %v1827 = vsub.s32 %v1824, %v1826
        %v1828 = vrot.slane %v1820, %v1827
        %v1830 = vunpack.c.l.s4 1983009808
        %v1831 = vunpack.c.0.s8 %v1830
        %v1832 = vlaneseq
        %v1833 = vshrl.u32 %v1832, 7
        %v1834 = vsub.s32 %v1831, %v1833
        %v1835 = vrot.slane %v1821, %v1834
        %v1836 = vcombine.low %v1812, %v1828
        %v1837 = vcombine.high %v1812, %v1828
        %v1839 = vunpack.c.l.s4 1934713408
        %v1840 = vunpack.c.0.s8 %v1839
        %v1841 = vlaneseq
        %v1842 = vshrl.u32 %v1841, 7
        %v1843 = vsub.s32 %v1840, %v1842
        %v1844 = vrot.slane %v1836, %v1843
        %v1846 = vunpack.c.l.s4 1934713408
        %v1847 = vunpack.c.0.s8 %v1846
        %v1848 = vlaneseq
        %v1849 = vshrl.u32 %v1848, 7
        %v1850 = vsub.s32 %v1847, %v1849
        %v1851 = vrot.slane %v1837, %v1850
        %v1852 = vcombine.low %v1819, %v1835
        %v1853 = vcombine.high %v1819, %v1835
        %v1855 = vunpack.c.l.s4 1934713408
        %v1856 = vunpack.c.0.s8 %v1855
        %v1857 = vlaneseq
        %v1858 = vshrl.u32 %v1857, 7
        %v1859 = vsub.s32 %v1856, %v1858
        %v1860 = vrot.slane %v1852, %v1859
        %v1862 = vunpack.c.l.s4 1934713408
        %v1863 = vunpack.c.0.s8 %v1862
        %v1864 = vlaneseq
        %v1865 = vshrl.u32 %v1864, 7
        %v1866 = vsub.s32 %v1863, %v1865
        %v1867 = vrot.slane %v1853, %v1866
        %v1868 = vcombine.high %v1844, 0.0
        %v1869 = vcombine.high %v1851, 0.0
        %v1870 = vcombine.high %v1860, 0.0
        %v1871 = vcombine.high %v1867, 0.0
        %v1872 = vcombine.low %v1797, %v1801
        %v1873 = vcombine.high %v1797, %v1801
        %v1875 = vunpack.c.l.s4 1983009808
        %v1876 = vunpack.c.0.s8 %v1875
        %v1877 = vlaneseq
        %v1878 = vshrl.u32 %v1877, 7
        %v1879 = vsub.s32 %v1876, %v1878
        %v1880 = vrot.slane %v1872, %v1879
        %v1882 = vunpack.c.l.s4 1983009808
        %v1883 = vunpack.c.0.s8 %v1882
        %v1884 = vlaneseq
        %v1885 = vshrl.u32 %v1884, 7
        %v1886 = vsub.s32 %v1883, %v1885
        %v1887 = vrot.slane %v1873, %v1886
        %v1888 = vcombine.low %v1799, %v1803
        %v1889 = vcombine.high %v1799, %v1803
        %v1891 = vunpack.c.l.s4 1983009808
        %v1892 = vunpack.c.0.s8 %v1891
        %v1893 = vlaneseq
        %v1894 = vshrl.u32 %v1893, 7
        %v1895 = vsub.s32 %v1892, %v1894
        %v1896 = vrot.slane %v1888, %v1895
        %v1898 = vunpack.c.l.s4 1983009808
        %v1899 = vunpack.c.0.s8 %v1898
        %v1900 = vlaneseq
        %v1901 = vshrl.u32 %v1900, 7
        %v1902 = vsub.s32 %v1899, %v1901
        %v1903 = vrot.slane %v1889, %v1902
        %v1904 = vcombine.low %v1880, %v1896
        %v1905 = vcombine.high %v1880, %v1896
        %v1907 = vunpack.c.l.s4 1934713408
        %v1908 = vunpack.c.0.s8 %v1907
        %v1909 = vlaneseq
        %v1910 = vshrl.u32 %v1909, 7
        %v1911 = vsub.s32 %v1908, %v1910
        %v1912 = vrot.slane %v1904, %v1911
        %v1914 = vunpack.c.l.s4 1934713408
        %v1915 = vunpack.c.0.s8 %v1914
        %v1916 = vlaneseq
        %v1917 = vshrl.u32 %v1916, 7
        %v1918 = vsub.s32 %v1915, %v1917
        %v1919 = vrot.slane %v1905, %v1918
        %v1920 = vcombine.low %v1887, %v1903
        %v1921 = vcombine.high %v1887, %v1903
        %v1923 = vunpack.c.l.s4 1934713408
        %v1924 = vunpack.c.0.s8 %v1923
        %v1925 = vlaneseq
        %v1926 = vshrl.u32 %v1925, 7
        %v1927 = vsub.s32 %v1924, %v1926
        %v1928 = vrot.slane %v1920, %v1927
        %v1930 = vunpack.c.l.s4 1934713408
        %v1931 = vunpack.c.0.s8 %v1930
        %v1932 = vlaneseq
        %v1933 = vshrl.u32 %v1932, 7
        %v1934 = vsub.s32 %v1931, %v1933
        %v1935 = vrot.slane %v1921, %v1934
        %v1936 = vcombine.high %v1912, 0.0
        %v1937 = vcombine.high %v1919, 0.0
        %v1938 = vcombine.high %v1928, 0.0
        %v1939 = vcombine.high %v1935, 0.0
        %1941 = vrot.lane.b32.xlu0 %v1868, 16
        %v1942 = vpop.permute.xlu0 %1941
        %1945 = vrot.lane.b32.xlu0 %v1851, 32
        %v1946 = vpop.permute.xlu0 %1945
        %1949 = vrot.lane.b32.xlu0 %v1869, 48
        %v1950 = vpop.permute.xlu0 %1949
        %1953 = vrot.lane.b32.xlu0 %v1860, 64
        %v1954 = vpop.permute.xlu0 %1953
        %1957 = vrot.lane.b32.xlu0 %v1870, 80
        %v1958 = vpop.permute.xlu0 %1957
        %1961 = vrot.lane.b32.xlu0 %v1867, 96
        %v1962 = vpop.permute.xlu0 %1961
        %1965 = vrot.lane.b32.xlu0 %v1871, 112
        %v1966 = vpop.permute.xlu0 %1965
        %1969 = vrot.lane.b32.xlu0 %v1936, 16
        %v1970 = vpop.permute.xlu0 %1969
        %1973 = vrot.lane.b32.xlu0 %v1919, 32
        %v1974 = vpop.permute.xlu0 %1973
        %1977 = vrot.lane.b32.xlu0 %v1937, 48
        %v1978 = vpop.permute.xlu0 %1977
        %1981 = vrot.lane.b32.xlu0 %v1928, 64
        %v1982 = vpop.permute.xlu0 %1981
        %1985 = vrot.lane.b32.xlu0 %v1938, 80
        %v1986 = vpop.permute.xlu0 %1985
        %1989 = vrot.lane.b32.xlu0 %v1935, 96
        %v1990 = vpop.permute.xlu0 %1989
        %1993 = vrot.lane.b32.xlu0 %v1939, 112
        %v1994 = vpop.permute.xlu0 %1993
        %v1996 = vsel %vm625, %v1844, %v1942
        %v1997 = vsel %vm627, %v1996, %v1946
        %v1998 = vsel %vm629, %v1997, %v1950
        %v1999 = vsel %vm631, %v1998, %v1954
        %v2000 = vsel %vm633, %v1999, %v1958
        %v2001 = vsel %vm635, %v2000, %v1962
        %v2002 = vsel %vm637, %v2001, %v1966
        %v2003 = vsel %vm625, %v1912, %v1970
        %v2004 = vsel %vm627, %v2003, %v1974
        %v2005 = vsel %vm629, %v2004, %v1978
        %v2006 = vsel %vm631, %v2005, %v1982
        %v2007 = vsel %vm633, %v2006, %v1986
        %v2008 = vsel %vm635, %v2007, %v1990
        %v2009 = vsel %vm637, %v2008, %v1994
        %2018 = vrot.lane.b32.xlu0 %v1796, 127
        %v2019 = vpop.permute.xlu0 %2018
        %2020 = vrot.lane.b32.xlu0 %v1797, 127
        %v2021 = vpop.permute.xlu0 %2020
        %2022 = vrot.lane.b32.xlu0 %v1798, 127
        %v2023 = vpop.permute.xlu0 %2022
        %2024 = vrot.lane.b32.xlu0 %v1799, 127
        %v2025 = vpop.permute.xlu0 %2024
        %2026 = vrot.lane.b32.xlu0 %v1800, 127
        %v2027 = vpop.permute.xlu0 %2026
        %2028 = vrot.lane.b32.xlu0 %v1801, 127
        %v2029 = vpop.permute.xlu0 %2028
        %2030 = vrot.lane.b32.xlu0 %v1802, 127
        %v2031 = vpop.permute.xlu0 %2030
        %2032 = vrot.lane.b32.xlu0 %v1803, 127
        %v2033 = vpop.permute.xlu0 %2032
        %v2042 = vcombine.low %v2019, %v2027
        %v2043 = vcombine.high %v2019, %v2027
        %v2045 = vunpack.c.l.s4 1983009808
        %v2046 = vunpack.c.0.s8 %v2045
        %v2047 = vlaneseq
        %v2048 = vshrl.u32 %v2047, 7
        %v2049 = vsub.s32 %v2046, %v2048
        %v2050 = vrot.slane %v2042, %v2049
        %v2052 = vunpack.c.l.s4 1983009808
        %v2053 = vunpack.c.0.s8 %v2052
        %v2054 = vlaneseq
        %v2055 = vshrl.u32 %v2054, 7
        %v2056 = vsub.s32 %v2053, %v2055
        %v2057 = vrot.slane %v2043, %v2056
        %v2058 = vcombine.low %v2023, %v2031
        %v2059 = vcombine.high %v2023, %v2031
        %v2061 = vunpack.c.l.s4 1983009808
        %v2062 = vunpack.c.0.s8 %v2061
        %v2063 = vlaneseq
        %v2064 = vshrl.u32 %v2063, 7
        %v2065 = vsub.s32 %v2062, %v2064
        %v2066 = vrot.slane %v2058, %v2065
        %v2068 = vunpack.c.l.s4 1983009808
        %v2069 = vunpack.c.0.s8 %v2068
        %v2070 = vlaneseq
        %v2071 = vshrl.u32 %v2070, 7
        %v2072 = vsub.s32 %v2069, %v2071
        %v2073 = vrot.slane %v2059, %v2072
        %v2074 = vcombine.low %v2050, %v2066
        %v2075 = vcombine.high %v2050, %v2066
        %v2077 = vunpack.c.l.s4 1934713408
        %v2078 = vunpack.c.0.s8 %v2077
        %v2079 = vlaneseq
        %v2080 = vshrl.u32 %v2079, 7
        %v2081 = vsub.s32 %v2078, %v2080
        %v2082 = vrot.slane %v2074, %v2081
        %v2084 = vunpack.c.l.s4 1934713408
        %v2085 = vunpack.c.0.s8 %v2084
        %v2086 = vlaneseq
        %v2087 = vshrl.u32 %v2086, 7
        %v2088 = vsub.s32 %v2085, %v2087
        %v2089 = vrot.slane %v2075, %v2088
        %v2090 = vcombine.low %v2057, %v2073
        %v2091 = vcombine.high %v2057, %v2073
        %v2093 = vunpack.c.l.s4 1934713408
        %v2094 = vunpack.c.0.s8 %v2093
        %v2095 = vlaneseq
        %v2096 = vshrl.u32 %v2095, 7
        %v2097 = vsub.s32 %v2094, %v2096
        %v2098 = vrot.slane %v2090, %v2097
        %v2100 = vunpack.c.l.s4 1934713408
        %v2101 = vunpack.c.0.s8 %v2100
        %v2102 = vlaneseq
        %v2103 = vshrl.u32 %v2102, 7
        %v2104 = vsub.s32 %v2101, %v2103
        %v2105 = vrot.slane %v2091, %v2104
        %v2106 = vcombine.high %v2082, 0.0
        %v2107 = vcombine.high %v2089, 0.0
        %v2108 = vcombine.high %v2098, 0.0
        %v2109 = vcombine.high %v2105, 0.0
        %v2110 = vcombine.low %v2021, %v2029
        %v2111 = vcombine.high %v2021, %v2029
        %v2113 = vunpack.c.l.s4 1983009808
        %v2114 = vunpack.c.0.s8 %v2113
        %v2115 = vlaneseq
        %v2116 = vshrl.u32 %v2115, 7
        %v2117 = vsub.s32 %v2114, %v2116
        %v2118 = vrot.slane %v2110, %v2117
        %v2120 = vunpack.c.l.s4 1983009808
        %v2121 = vunpack.c.0.s8 %v2120
        %v2122 = vlaneseq
        %v2123 = vshrl.u32 %v2122, 7
        %v2124 = vsub.s32 %v2121, %v2123
        %v2125 = vrot.slane %v2111, %v2124
        %v2126 = vcombine.low %v2025, %v2033
        %v2127 = vcombine.high %v2025, %v2033
        %v2129 = vunpack.c.l.s4 1983009808
        %v2130 = vunpack.c.0.s8 %v2129
        %v2131 = vlaneseq
        %v2132 = vshrl.u32 %v2131, 7
        %v2133 = vsub.s32 %v2130, %v2132
        %v2134 = vrot.slane %v2126, %v2133
        %v2136 = vunpack.c.l.s4 1983009808
        %v2137 = vunpack.c.0.s8 %v2136
        %v2138 = vlaneseq
        %v2139 = vshrl.u32 %v2138, 7
        %v2140 = vsub.s32 %v2137, %v2139
        %v2141 = vrot.slane %v2127, %v2140
        %v2142 = vcombine.low %v2118, %v2134
        %v2143 = vcombine.high %v2118, %v2134
        %v2145 = vunpack.c.l.s4 1934713408
        %v2146 = vunpack.c.0.s8 %v2145
        %v2147 = vlaneseq
        %v2148 = vshrl.u32 %v2147, 7
        %v2149 = vsub.s32 %v2146, %v2148
        %v2150 = vrot.slane %v2142, %v2149
        %v2152 = vunpack.c.l.s4 1934713408
        %v2153 = vunpack.c.0.s8 %v2152
        %v2154 = vlaneseq
        %v2155 = vshrl.u32 %v2154, 7
        %v2156 = vsub.s32 %v2153, %v2155
        %v2157 = vrot.slane %v2143, %v2156
        %v2158 = vcombine.low %v2125, %v2141
        %v2159 = vcombine.high %v2125, %v2141
        %v2161 = vunpack.c.l.s4 1934713408
        %v2162 = vunpack.c.0.s8 %v2161
        %v2163 = vlaneseq
        %v2164 = vshrl.u32 %v2163, 7
        %v2165 = vsub.s32 %v2162, %v2164
        %v2166 = vrot.slane %v2158, %v2165
        %v2168 = vunpack.c.l.s4 1934713408
        %v2169 = vunpack.c.0.s8 %v2168
        %v2170 = vlaneseq
        %v2171 = vshrl.u32 %v2170, 7
        %v2172 = vsub.s32 %v2169, %v2171
        %v2173 = vrot.slane %v2159, %v2172
        %v2174 = vcombine.high %v2150, 0.0
        %v2175 = vcombine.high %v2157, 0.0
        %v2176 = vcombine.high %v2166, 0.0
        %v2177 = vcombine.high %v2173, 0.0
        %2179 = vrot.lane.b32.xlu0 %v2106, 16
        %v2180 = vpop.permute.xlu0 %2179
        %2183 = vrot.lane.b32.xlu0 %v2089, 32
        %v2184 = vpop.permute.xlu0 %2183
        %2187 = vrot.lane.b32.xlu0 %v2107, 48
        %v2188 = vpop.permute.xlu0 %2187
        %2191 = vrot.lane.b32.xlu0 %v2098, 64
        %v2192 = vpop.permute.xlu0 %2191
        %2195 = vrot.lane.b32.xlu0 %v2108, 80
        %v2196 = vpop.permute.xlu0 %2195
        %2199 = vrot.lane.b32.xlu0 %v2105, 96
        %v2200 = vpop.permute.xlu0 %2199
        %2203 = vrot.lane.b32.xlu0 %v2109, 112
        %v2204 = vpop.permute.xlu0 %2203
        %2207 = vrot.lane.b32.xlu0 %v2174, 16
        %v2208 = vpop.permute.xlu0 %2207
        %2211 = vrot.lane.b32.xlu0 %v2157, 32
        %v2212 = vpop.permute.xlu0 %2211
        %2215 = vrot.lane.b32.xlu0 %v2175, 48
        %v2216 = vpop.permute.xlu0 %2215
        %2219 = vrot.lane.b32.xlu0 %v2166, 64
        %v2220 = vpop.permute.xlu0 %2219
        %2223 = vrot.lane.b32.xlu0 %v2176, 80
        %v2224 = vpop.permute.xlu0 %2223
        %2227 = vrot.lane.b32.xlu0 %v2173, 96
        %v2228 = vpop.permute.xlu0 %2227
        %2231 = vrot.lane.b32.xlu0 %v2177, 112
        %v2232 = vpop.permute.xlu0 %2231
        %v2234 = vsel %vm625, %v2082, %v2180
        %v2235 = vsel %vm627, %v2234, %v2184
        %v2236 = vsel %vm629, %v2235, %v2188
        %v2237 = vsel %vm631, %v2236, %v2192
        %v2238 = vsel %vm633, %v2237, %v2196
        %v2239 = vsel %vm635, %v2238, %v2200
        %v2240 = vsel %vm637, %v2239, %v2204
        %v2241 = vsel %vm625, %v2150, %v2208
        %v2242 = vsel %vm627, %v2241, %v2212
        %v2243 = vsel %vm629, %v2242, %v2216
        %v2244 = vsel %vm631, %v2243, %v2220
        %v2245 = vsel %vm633, %v2244, %v2224
        %v2246 = vsel %vm635, %v2245, %v2228
        %v2247 = vsel %vm637, %v2246, %v2232
        %2248 = vrot.lane.b32.xlu0 %v1796, 126
        %v2249 = vpop.permute.xlu0 %2248
        %2250 = vrot.lane.b32.xlu0 %v1797, 126
        %v2251 = vpop.permute.xlu0 %2250
        %2252 = vrot.lane.b32.xlu0 %v1798, 126
        %v2253 = vpop.permute.xlu0 %2252
        %2254 = vrot.lane.b32.xlu0 %v1799, 126
        %v2255 = vpop.permute.xlu0 %2254
        %2256 = vrot.lane.b32.xlu0 %v1800, 126
        %v2257 = vpop.permute.xlu0 %2256
        %2258 = vrot.lane.b32.xlu0 %v1801, 126
        %v2259 = vpop.permute.xlu0 %2258
        %2260 = vrot.lane.b32.xlu0 %v1802, 126
        %v2261 = vpop.permute.xlu0 %2260
        %2262 = vrot.lane.b32.xlu0 %v1803, 126
        %v2263 = vpop.permute.xlu0 %2262
        %v2272 = vcombine.low %v2249, %v2257
        %v2273 = vcombine.high %v2249, %v2257
        %v2275 = vunpack.c.l.s4 1983009808
        %v2276 = vunpack.c.0.s8 %v2275
        %v2277 = vlaneseq
        %v2278 = vshrl.u32 %v2277, 7
        %v2279 = vsub.s32 %v2276, %v2278
        %v2280 = vrot.slane %v2272, %v2279
        %v2282 = vunpack.c.l.s4 1983009808
        %v2283 = vunpack.c.0.s8 %v2282
        %v2284 = vlaneseq
        %v2285 = vshrl.u32 %v2284, 7
        %v2286 = vsub.s32 %v2283, %v2285
        %v2287 = vrot.slane %v2273, %v2286
        %v2288 = vcombine.low %v2253, %v2261
        %v2289 = vcombine.high %v2253, %v2261
        %v2291 = vunpack.c.l.s4 1983009808
        %v2292 = vunpack.c.0.s8 %v2291
        %v2293 = vlaneseq
        %v2294 = vshrl.u32 %v2293, 7
        %v2295 = vsub.s32 %v2292, %v2294
        %v2296 = vrot.slane %v2288, %v2295
        %v2298 = vunpack.c.l.s4 1983009808
        %v2299 = vunpack.c.0.s8 %v2298
        %v2300 = vlaneseq
        %v2301 = vshrl.u32 %v2300, 7
        %v2302 = vsub.s32 %v2299, %v2301
        %v2303 = vrot.slane %v2289, %v2302
        %v2304 = vcombine.low %v2280, %v2296
        %v2305 = vcombine.high %v2280, %v2296
        %v2307 = vunpack.c.l.s4 1934713408
        %v2308 = vunpack.c.0.s8 %v2307
        %v2309 = vlaneseq
        %v2310 = vshrl.u32 %v2309, 7
        %v2311 = vsub.s32 %v2308, %v2310
        %v2312 = vrot.slane %v2304, %v2311
        %v2314 = vunpack.c.l.s4 1934713408
        %v2315 = vunpack.c.0.s8 %v2314
        %v2316 = vlaneseq
        %v2317 = vshrl.u32 %v2316, 7
        %v2318 = vsub.s32 %v2315, %v2317
        %v2319 = vrot.slane %v2305, %v2318
        %v2320 = vcombine.low %v2287, %v2303
        %v2321 = vcombine.high %v2287, %v2303
        %v2323 = vunpack.c.l.s4 1934713408
        %v2324 = vunpack.c.0.s8 %v2323
        %v2325 = vlaneseq
        %v2326 = vshrl.u32 %v2325, 7
        %v2327 = vsub.s32 %v2324, %v2326
        %v2328 = vrot.slane %v2320, %v2327
        %v2330 = vunpack.c.l.s4 1934713408
        %v2331 = vunpack.c.0.s8 %v2330
        %v2332 = vlaneseq
        %v2333 = vshrl.u32 %v2332, 7
        %v2334 = vsub.s32 %v2331, %v2333
        %v2335 = vrot.slane %v2321, %v2334
        %v2336 = vcombine.high %v2312, 0.0
        %v2337 = vcombine.high %v2319, 0.0
        %v2338 = vcombine.high %v2328, 0.0
        %v2339 = vcombine.high %v2335, 0.0
        %v2340 = vcombine.low %v2251, %v2259
        %v2341 = vcombine.high %v2251, %v2259
        %v2343 = vunpack.c.l.s4 1983009808
        %v2344 = vunpack.c.0.s8 %v2343
        %v2345 = vlaneseq
        %v2346 = vshrl.u32 %v2345, 7
        %v2347 = vsub.s32 %v2344, %v2346
        %v2348 = vrot.slane %v2340, %v2347
        %v2350 = vunpack.c.l.s4 1983009808
        %v2351 = vunpack.c.0.s8 %v2350
        %v2352 = vlaneseq
        %v2353 = vshrl.u32 %v2352, 7
        %v2354 = vsub.s32 %v2351, %v2353
        %v2355 = vrot.slane %v2341, %v2354
        %v2356 = vcombine.low %v2255, %v2263
        %v2357 = vcombine.high %v2255, %v2263
        %v2359 = vunpack.c.l.s4 1983009808
        %v2360 = vunpack.c.0.s8 %v2359
        %v2361 = vlaneseq
        %v2362 = vshrl.u32 %v2361, 7
        %v2363 = vsub.s32 %v2360, %v2362
        %v2364 = vrot.slane %v2356, %v2363
        %v2366 = vunpack.c.l.s4 1983009808
        %v2367 = vunpack.c.0.s8 %v2366
        %v2368 = vlaneseq
        %v2369 = vshrl.u32 %v2368, 7
        %v2370 = vsub.s32 %v2367, %v2369
        %v2371 = vrot.slane %v2357, %v2370
        %v2372 = vcombine.low %v2348, %v2364
        %v2373 = vcombine.high %v2348, %v2364
        %v2375 = vunpack.c.l.s4 1934713408
        %v2376 = vunpack.c.0.s8 %v2375
        %v2377 = vlaneseq
        %v2378 = vshrl.u32 %v2377, 7
        %v2379 = vsub.s32 %v2376, %v2378
        %v2380 = vrot.slane %v2372, %v2379
        %v2382 = vunpack.c.l.s4 1934713408
        %v2383 = vunpack.c.0.s8 %v2382
        %v2384 = vlaneseq
        %v2385 = vshrl.u32 %v2384, 7
        %v2386 = vsub.s32 %v2383, %v2385
        %v2387 = vrot.slane %v2373, %v2386
        %v2388 = vcombine.low %v2355, %v2371
        %v2389 = vcombine.high %v2355, %v2371
        %v2391 = vunpack.c.l.s4 1934713408
        %v2392 = vunpack.c.0.s8 %v2391
        %v2393 = vlaneseq
        %v2394 = vshrl.u32 %v2393, 7
        %v2395 = vsub.s32 %v2392, %v2394
        %v2396 = vrot.slane %v2388, %v2395
        %v2398 = vunpack.c.l.s4 1934713408
        %v2399 = vunpack.c.0.s8 %v2398
        %v2400 = vlaneseq
        %v2401 = vshrl.u32 %v2400, 7
        %v2402 = vsub.s32 %v2399, %v2401
        %v2403 = vrot.slane %v2389, %v2402
        %v2404 = vcombine.high %v2380, 0.0
        %v2405 = vcombine.high %v2387, 0.0
        %v2406 = vcombine.high %v2396, 0.0
        %v2407 = vcombine.high %v2403, 0.0
        %2409 = vrot.lane.b32.xlu0 %v2336, 16
        %v2410 = vpop.permute.xlu0 %2409
        %2413 = vrot.lane.b32.xlu0 %v2319, 32
        %v2414 = vpop.permute.xlu0 %2413
        %2417 = vrot.lane.b32.xlu0 %v2337, 48
        %v2418 = vpop.permute.xlu0 %2417
        %2421 = vrot.lane.b32.xlu0 %v2328, 64
        %v2422 = vpop.permute.xlu0 %2421
        %2425 = vrot.lane.b32.xlu0 %v2338, 80
        %v2426 = vpop.permute.xlu0 %2425
        %2429 = vrot.lane.b32.xlu0 %v2335, 96
        %v2430 = vpop.permute.xlu0 %2429
        %2433 = vrot.lane.b32.xlu0 %v2339, 112
        %v2434 = vpop.permute.xlu0 %2433
        %2437 = vrot.lane.b32.xlu0 %v2404, 16
        %v2438 = vpop.permute.xlu0 %2437
        %2441 = vrot.lane.b32.xlu0 %v2387, 32
        %v2442 = vpop.permute.xlu0 %2441
        %2445 = vrot.lane.b32.xlu0 %v2405, 48
        %v2446 = vpop.permute.xlu0 %2445
        %2449 = vrot.lane.b32.xlu0 %v2396, 64
        %v2450 = vpop.permute.xlu0 %2449
        %2453 = vrot.lane.b32.xlu0 %v2406, 80
        %v2454 = vpop.permute.xlu0 %2453
        %2457 = vrot.lane.b32.xlu0 %v2403, 96
        %v2458 = vpop.permute.xlu0 %2457
        %2461 = vrot.lane.b32.xlu0 %v2407, 112
        %v2462 = vpop.permute.xlu0 %2461
        %v2464 = vsel %vm625, %v2312, %v2410
        %v2465 = vsel %vm627, %v2464, %v2414
        %v2466 = vsel %vm629, %v2465, %v2418
        %v2467 = vsel %vm631, %v2466, %v2422
        %v2468 = vsel %vm633, %v2467, %v2426
        %v2469 = vsel %vm635, %v2468, %v2430
        %v2470 = vsel %vm637, %v2469, %v2434
        %v2471 = vsel %vm625, %v2380, %v2438
        %v2472 = vsel %vm627, %v2471, %v2442
        %v2473 = vsel %vm629, %v2472, %v2446
        %v2474 = vsel %vm631, %v2473, %v2450
        %v2475 = vsel %vm633, %v2474, %v2454
        %v2476 = vsel %vm635, %v2475, %v2458
        %v2477 = vsel %vm637, %v2476, %v2462
        %s2478 = sld [smem:[#allocation7]]
        %v2479 = vstv %s2478
        %v2480 = vadd.f32 %v2479, 0.0
        %s2481 = sld [smem:[#allocation6]]
        %v2482 = vstv %s2481
        %v2483 = vmul.f32 %v2482, %v638
        %v2484 = vmul.f32 %v2482, %v645
        %v2485 = vadd.f32 %v2480, %v2483
        %v2486 = vadd.f32 %v2480, %v2484
        %s2487 = sld [smem:[#allocation6 + $0x9]]
        %v2488 = vstv %s2487
        %v2489 = vmul.f32 %v2488, %v638
        %v2490 = vmul.f32 %v2488, %v645
        %v2493 = vrot.slane %v2489, 1
        %v2494 = vrot.slane %v2490, 1
        %v2497 = vadd.f32 %v2485, %v2493
        %v2498 = vadd.f32 %v2486, %v2494
        %s2499 = sld [smem:[#allocation6 + $0x12]]
        %v2500 = vstv %s2499
        %v2501 = vmul.f32 %v2500, %v638
        %v2502 = vmul.f32 %v2500, %v645
        %v2505 = vrot.slane %v2501, 2
        %v2506 = vrot.slane %v2502, 2
        %v2509 = vadd.f32 %v2497, %v2505
        %v2510 = vadd.f32 %v2498, %v2506
        %s2511 = sld [smem:[#allocation6 + $0x1b]]
        %v2512 = vstv %s2511
        %v2513 = vmul.f32 %v2512, %v638
        %v2514 = vmul.f32 %v2512, %v645
        %v2517 = vrot.slane %v2513, 3
        %v2518 = vrot.slane %v2514, 3
        %v2521 = vadd.f32 %v2509, %v2517
        %v2522 = vadd.f32 %v2510, %v2518
        %s2523 = sld [smem:[#allocation6 + $0x1]]
        %v2524 = vstv %s2523
        %v2525 = vmul.f32 %v2524, %v876
        %v2526 = vmul.f32 %v2524, %v883
        %v2527 = vadd.f32 %v2521, %v2525
        %v2528 = vadd.f32 %v2522, %v2526
        %s2529 = sld [smem:[#allocation6 + $0xa]]
        %v2530 = vstv %s2529
        %v2531 = vmul.f32 %v2530, %v876
        %v2532 = vmul.f32 %v2530, %v883
        %v2535 = vrot.slane %v2531, 1
        %v2536 = vrot.slane %v2532, 1
        %v2539 = vadd.f32 %v2527, %v2535
        %v2540 = vadd.f32 %v2528, %v2536
        %s2541 = sld [smem:[#allocation6 + $0x13]]
        %v2542 = vstv %s2541
        %v2543 = vmul.f32 %v2542, %v876
        %v2544 = vmul.f32 %v2542, %v883
        %v2547 = vrot.slane %v2543, 2
        %v2548 = vrot.slane %v2544, 2
        %v2551 = vadd.f32 %v2539, %v2547
        %v2552 = vadd.f32 %v2540, %v2548
        %s2553 = sld [smem:[#allocation6 + $0x1c]]
        %v2554 = vstv %s2553
        %v2555 = vmul.f32 %v2554, %v876
        %v2556 = vmul.f32 %v2554, %v883
        %v2559 = vrot.slane %v2555, 3
        %v2560 = vrot.slane %v2556, 3
        %v2563 = vadd.f32 %v2551, %v2559
        %v2564 = vadd.f32 %v2552, %v2560
        %s2565 = sld [smem:[#allocation6 + $0x2]]
        %v2566 = vstv %s2565
        %v2567 = vmul.f32 %v2566, %v1106
        %v2568 = vmul.f32 %v2566, %v1113
        %v2569 = vadd.f32 %v2563, %v2567
        %v2570 = vadd.f32 %v2564, %v2568
        %s2571 = sld [smem:[#allocation6 + $0xb]]
        %v2572 = vstv %s2571
        %v2573 = vmul.f32 %v2572, %v1106
        %v2574 = vmul.f32 %v2572, %v1113
        %v2577 = vrot.slane %v2573, 1
        %v2578 = vrot.slane %v2574, 1
        %v2581 = vadd.f32 %v2569, %v2577
        %v2582 = vadd.f32 %v2570, %v2578
        %s2583 = sld [smem:[#allocation6 + $0x14]]
        %v2584 = vstv %s2583
        %v2585 = vmul.f32 %v2584, %v1106
        %v2586 = vmul.f32 %v2584, %v1113
        %v2589 = vrot.slane %v2585, 2
        %v2590 = vrot.slane %v2586, 2
        %v2593 = vadd.f32 %v2581, %v2589
        %v2594 = vadd.f32 %v2582, %v2590
        %s2595 = sld [smem:[#allocation6 + $0x1d]]
        %v2596 = vstv %s2595
        %v2597 = vmul.f32 %v2596, %v1106
        %v2598 = vmul.f32 %v2596, %v1113
        %v2601 = vrot.slane %v2597, 3
        %v2602 = vrot.slane %v2598, 3
        %v2605 = vadd.f32 %v2593, %v2601
        %v2606 = vadd.f32 %v2594, %v2602
        %s2607 = sld [smem:[#allocation6 + $0x3]]
        %v2608 = vstv %s2607
        %v2609 = vmul.f32 %v2608, %v1320
        %v2610 = vmul.f32 %v2608, %v1327
        %v2611 = vadd.f32 %v2605, %v2609
        %v2612 = vadd.f32 %v2606, %v2610
        %s2613 = sld [smem:[#allocation6 + $0xc]]
        %v2614 = vstv %s2613
        %v2615 = vmul.f32 %v2614, %v1320
        %v2616 = vmul.f32 %v2614, %v1327
        %v2619 = vrot.slane %v2615, 1
        %v2620 = vrot.slane %v2616, 1
        %v2623 = vadd.f32 %v2611, %v2619
        %v2624 = vadd.f32 %v2612, %v2620
        %s2625 = sld [smem:[#allocation6 + $0x15]]
        %v2626 = vstv %s2625
        %v2627 = vmul.f32 %v2626, %v1320
        %v2628 = vmul.f32 %v2626, %v1327
        %v2631 = vrot.slane %v2627, 2
        %v2632 = vrot.slane %v2628, 2
        %v2635 = vadd.f32 %v2623, %v2631
        %v2636 = vadd.f32 %v2624, %v2632
        %s2637 = sld [smem:[#allocation6 + $0x1e]]
        %v2638 = vstv %s2637
        %v2639 = vmul.f32 %v2638, %v1320
        %v2640 = vmul.f32 %v2638, %v1327
        %v2643 = vrot.slane %v2639, 3
        %v2644 = vrot.slane %v2640, 3
        %v2647 = vadd.f32 %v2635, %v2643
        %v2648 = vadd.f32 %v2636, %v2644
        %s2649 = sld [smem:[#allocation6 + $0x4]]
        %v2650 = vstv %s2649
        %v2651 = vmul.f32 %v2650, %v1558
        %v2652 = vmul.f32 %v2650, %v1565
        %v2653 = vadd.f32 %v2647, %v2651
        %v2654 = vadd.f32 %v2648, %v2652
        %s2655 = sld [smem:[#allocation6 + $0xd]]
        %v2656 = vstv %s2655
        %v2657 = vmul.f32 %v2656, %v1558
        %v2658 = vmul.f32 %v2656, %v1565
        %v2661 = vrot.slane %v2657, 1
        %v2662 = vrot.slane %v2658, 1
        %v2665 = vadd.f32 %v2653, %v2661
        %v2666 = vadd.f32 %v2654, %v2662
        %s2667 = sld [smem:[#allocation6 + $0x16]]
        %v2668 = vstv %s2667
        %v2669 = vmul.f32 %v2668, %v1558
        %v2670 = vmul.f32 %v2668, %v1565
        %v2673 = vrot.slane %v2669, 2
        %v2674 = vrot.slane %v2670, 2
        %v2677 = vadd.f32 %v2665, %v2673
        %v2678 = vadd.f32 %v2666, %v2674
        %s2679 = sld [smem:[#allocation6 + $0x1f]]
        %v2680 = vstv %s2679
        %v2681 = vmul.f32 %v2680, %v1558
        %v2682 = vmul.f32 %v2680, %v1565
        %v2685 = vrot.slane %v2681, 3
        %v2686 = vrot.slane %v2682, 3
        %v2689 = vadd.f32 %v2677, %v2685
        %v2690 = vadd.f32 %v2678, %v2686
        %s2691 = sld [smem:[#allocation6 + $0x5]]
        %v2692 = vstv %s2691
        %v2693 = vmul.f32 %v2692, %v1788
        %v2694 = vmul.f32 %v2692, %v1795
        %v2695 = vadd.f32 %v2689, %v2693
        %v2696 = vadd.f32 %v2690, %v2694
        %s2697 = sld [smem:[#allocation6 + $0xe]]
        %v2698 = vstv %s2697
        %v2699 = vmul.f32 %v2698, %v1788
        %v2700 = vmul.f32 %v2698, %v1795
        %v2703 = vrot.slane %v2699, 1
        %v2704 = vrot.slane %v2700, 1
        %v2707 = vadd.f32 %v2695, %v2703
        %v2708 = vadd.f32 %v2696, %v2704
        %s2709 = sld [smem:[#allocation6 + $0x17]]
        %v2710 = vstv %s2709
        %v2711 = vmul.f32 %v2710, %v1788
        %v2712 = vmul.f32 %v2710, %v1795
        %v2715 = vrot.slane %v2711, 2
        %v2716 = vrot.slane %v2712, 2
        %v2719 = vadd.f32 %v2707, %v2715
        %v2720 = vadd.f32 %v2708, %v2716
        %s2721 = sld [smem:[#allocation6 + $0x20]]
        %v2722 = vstv %s2721
        %v2723 = vmul.f32 %v2722, %v1788
        %v2724 = vmul.f32 %v2722, %v1795
        %v2727 = vrot.slane %v2723, 3
        %v2728 = vrot.slane %v2724, 3
        %v2731 = vadd.f32 %v2719, %v2727
        %v2732 = vadd.f32 %v2720, %v2728
        %s2733 = sld [smem:[#allocation6 + $0x6]]
        %v2734 = vstv %s2733
        %v2735 = vmul.f32 %v2734, %v2002
        %v2736 = vmul.f32 %v2734, %v2009
        %v2737 = vadd.f32 %v2731, %v2735
        %v2738 = vadd.f32 %v2732, %v2736
        %s2739 = sld [smem:[#allocation6 + $0xf]]
        %v2740 = vstv %s2739
        %v2741 = vmul.f32 %v2740, %v2002
        %v2742 = vmul.f32 %v2740, %v2009
        %v2745 = vrot.slane %v2741, 1
        %v2746 = vrot.slane %v2742, 1
        %v2749 = vadd.f32 %v2737, %v2745
        %v2750 = vadd.f32 %v2738, %v2746
        %s2751 = sld [smem:[#allocation6 + $0x18]]
        %v2752 = vstv %s2751
        %v2753 = vmul.f32 %v2752, %v2002
        %v2754 = vmul.f32 %v2752, %v2009
        %v2757 = vrot.slane %v2753, 2
        %v2758 = vrot.slane %v2754, 2
        %v2761 = vadd.f32 %v2749, %v2757
        %v2762 = vadd.f32 %v2750, %v2758
        %s2763 = sld [smem:[#allocation6 + $0x21]]
        %v2764 = vstv %s2763
        %v2765 = vmul.f32 %v2764, %v2002
        %v2766 = vmul.f32 %v2764, %v2009
        %v2769 = vrot.slane %v2765, 3
        %v2770 = vrot.slane %v2766, 3
        %v2773 = vadd.f32 %v2761, %v2769
        %v2774 = vadd.f32 %v2762, %v2770
        %s2775 = sld [smem:[#allocation6 + $0x7]]
        %v2776 = vstv %s2775
        %v2777 = vmul.f32 %v2776, %v2240
        %v2778 = vmul.f32 %v2776, %v2247
        %v2779 = vadd.f32 %v2773, %v2777
        %v2780 = vadd.f32 %v2774, %v2778
        %s2781 = sld [smem:[#allocation6 + $0x10]]
        %v2782 = vstv %s2781
        %v2783 = vmul.f32 %v2782, %v2240
        %v2784 = vmul.f32 %v2782, %v2247
        %v2787 = vrot.slane %v2783, 1
        %v2788 = vrot.slane %v2784, 1
        %v2791 = vadd.f32 %v2779, %v2787
        %v2792 = vadd.f32 %v2780, %v2788
        %s2793 = sld [smem:[#allocation6 + $0x19]]
        %v2794 = vstv %s2793
        %v2795 = vmul.f32 %v2794, %v2240
        %v2796 = vmul.f32 %v2794, %v2247
        %v2799 = vrot.slane %v2795, 2
        %v2800 = vrot.slane %v2796, 2
        %v2803 = vadd.f32 %v2791, %v2799
        %v2804 = vadd.f32 %v2792, %v2800
        %s2805 = sld [smem:[#allocation6 + $0x22]]
        %v2806 = vstv %s2805
        %v2807 = vmul.f32 %v2806, %v2240
        %v2808 = vmul.f32 %v2806, %v2247
        %v2811 = vrot.slane %v2807, 3
        %v2812 = vrot.slane %v2808, 3
        %v2815 = vadd.f32 %v2803, %v2811
        %v2816 = vadd.f32 %v2804, %v2812
        %s2817 = sld [smem:[#allocation6 + $0x8]]
        %v2818 = vstv %s2817
        %v2819 = vmul.f32 %v2818, %v2470
        %v2820 = vmul.f32 %v2818, %v2477
        %v2821 = vadd.f32 %v2815, %v2819
        %v2822 = vadd.f32 %v2816, %v2820
        %s2823 = sld [smem:[#allocation6 + $0x11]]
        %v2824 = vstv %s2823
        %v2825 = vmul.f32 %v2824, %v2470
        %v2826 = vmul.f32 %v2824, %v2477
        %v2829 = vrot.slane %v2825, 1
        %v2830 = vrot.slane %v2826, 1
        %v2833 = vadd.f32 %v2821, %v2829
        %v2834 = vadd.f32 %v2822, %v2830
        %s2835 = sld [smem:[#allocation6 + $0x1a]]
        %v2836 = vstv %s2835
        %v2837 = vmul.f32 %v2836, %v2470
        %v2838 = vmul.f32 %v2836, %v2477
        %v2841 = vrot.slane %v2837, 2
        %v2842 = vrot.slane %v2838, 2
        %v2845 = vadd.f32 %v2833, %v2841
        %v2846 = vadd.f32 %v2834, %v2842
        %s2847 = sld [smem:[#allocation6 + $0x23]]
        %v2848 = vstv %s2847
        %v2849 = vmul.f32 %v2848, %v2470
        %v2850 = vmul.f32 %v2848, %v2477
        %v2853 = vrot.slane %v2849, 3
        %v2854 = vrot.slane %v2850, 3
        %v2857 = vadd.f32 %v2845, %v2853
        %v2858 = vadd.f32 %v2846, %v2854
        %v2859 = vtanh.pop %v2857
        %v2860 = vtanh.pop %v2858
        %v2863 = vcombine.low %v2859, %v2860
        %v2865 = vunpack.c.l.s4 1966171168
        %v2866 = vunpack.c.0.s8 %v2865
        %v2867 = vlaneseq
        %v2868 = vshrl.u32 %v2867, 7
        %v2869 = vsub.s32 %v2866, %v2868
        %v2870 = vrot.slane %v2863, %v2869
        %v2872 = vunpack.c.l.s4 1966171168
        %v2873 = vunpack.c.0.s8 %v2872
        %v2874 = vlaneseq
        %v2875 = vshrl.u32 %v2874, 7
        %v2876 = vsub.s32 %v2873, %v2875
        %v2877 = vrot.slane %v2870, %v2876
        %v2879 = vlaneseq
        %vm2880 = vcmp.ge.s32.totalorder %v2879, 0
        %vm2881 = vcmp.lt.s32.totalorder %v2879, 256
        %vm2882 = vmand %vm2880, %vm2881
        %2883 = vst.msk [vmem:[%s217] ss:$4 sm:$0x3] %vm2882, %v2877
        %s2884 = sld [smem:[#allocation7 + $0x1]]
        %v2885 = vstv %s2884
        %v2886 = vadd.f32 %v2885, 0.0
        %s2887 = sld [smem:[#allocation6 + $0x24]]
        %v2888 = vstv %s2887
        %v2889 = vmul.f32 %v2888, %v638
        %v2890 = vmul.f32 %v2888, %v645
        %v2891 = vadd.f32 %v2886, %v2889
        %v2892 = vadd.f32 %v2886, %v2890
        %s2893 = sld [smem:[#allocation6 + $0x2d]]
        %v2894 = vstv %s2893
        %v2895 = vmul.f32 %v2894, %v638
        %v2896 = vmul.f32 %v2894, %v645
        %v2899 = vrot.slane %v2895, 1
        %v2900 = vrot.slane %v2896, 1
        %v2903 = vadd.f32 %v2891, %v2899
        %v2904 = vadd.f32 %v2892, %v2900
        %s2905 = sld [smem:[#allocation6 + $0x36]]
        %v2906 = vstv %s2905
        %v2907 = vmul.f32 %v2906, %v638
        %v2908 = vmul.f32 %v2906, %v645
        %v2911 = vrot.slane %v2907, 2
        %v2912 = vrot.slane %v2908, 2
        %v2915 = vadd.f32 %v2903, %v2911
        %v2916 = vadd.f32 %v2904, %v2912
        %s2917 = sld [smem:[#allocation6 + $0x3f]]
        %v2918 = vstv %s2917
        %v2919 = vmul.f32 %v2918, %v638
        %v2920 = vmul.f32 %v2918, %v645
        %v2923 = vrot.slane %v2919, 3
        %v2924 = vrot.slane %v2920, 3
        %v2927 = vadd.f32 %v2915, %v2923
        %v2928 = vadd.f32 %v2916, %v2924
        %s2929 = sld [smem:[#allocation6 + $0x25]]
        %v2930 = vstv %s2929
        %v2931 = vmul.f32 %v2930, %v876
        %v2932 = vmul.f32 %v2930, %v883
        %v2933 = vadd.f32 %v2927, %v2931
        %v2934 = vadd.f32 %v2928, %v2932
        %s2935 = sld [smem:[#allocation6 + $0x2e]]
        %v2936 = vstv %s2935
        %v2937 = vmul.f32 %v2936, %v876
        %v2938 = vmul.f32 %v2936, %v883
        %v2941 = vrot.slane %v2937, 1
        %v2942 = vrot.slane %v2938, 1
        %v2945 = vadd.f32 %v2933, %v2941
        %v2946 = vadd.f32 %v2934, %v2942
        %s2947 = sld [smem:[#allocation6 + $0x37]]
        %v2948 = vstv %s2947
        %v2949 = vmul.f32 %v2948, %v876
        %v2950 = vmul.f32 %v2948, %v883
        %v2953 = vrot.slane %v2949, 2
        %v2954 = vrot.slane %v2950, 2
        %v2957 = vadd.f32 %v2945, %v2953
        %v2958 = vadd.f32 %v2946, %v2954
        %s2959 = sld [smem:[#allocation6 + $0x40]]
        %v2960 = vstv %s2959
        %v2961 = vmul.f32 %v2960, %v876
        %v2962 = vmul.f32 %v2960, %v883
        %v2965 = vrot.slane %v2961, 3
        %v2966 = vrot.slane %v2962, 3
        %v2969 = vadd.f32 %v2957, %v2965
        %v2970 = vadd.f32 %v2958, %v2966
        %s2971 = sld [smem:[#allocation6 + $0x26]]
        %v2972 = vstv %s2971
        %v2973 = vmul.f32 %v2972, %v1106
        %v2974 = vmul.f32 %v2972, %v1113
        %v2975 = vadd.f32 %v2969, %v2973
        %v2976 = vadd.f32 %v2970, %v2974
        %s2977 = sld [smem:[#allocation6 + $0x2f]]
        %v2978 = vstv %s2977
        %v2979 = vmul.f32 %v2978, %v1106
        %v2980 = vmul.f32 %v2978, %v1113
        %v2983 = vrot.slane %v2979, 1
        %v2984 = vrot.slane %v2980, 1
        %v2987 = vadd.f32 %v2975, %v2983
        %v2988 = vadd.f32 %v2976, %v2984
        %s2989 = sld [smem:[#allocation6 + $0x38]]
        %v2990 = vstv %s2989
        %v2991 = vmul.f32 %v2990, %v1106
        %v2992 = vmul.f32 %v2990, %v1113
        %v2995 = vrot.slane %v2991, 2
        %v2996 = vrot.slane %v2992, 2
        %v2999 = vadd.f32 %v2987, %v2995
        %v3000 = vadd.f32 %v2988, %v2996
        %s3001 = sld [smem:[#allocation6 + $0x41]]
        %v3002 = vstv %s3001
        %v3003 = vmul.f32 %v3002, %v1106
        %v3004 = vmul.f32 %v3002, %v1113
        %v3007 = vrot.slane %v3003, 3
        %v3008 = vrot.slane %v3004, 3
        %v3011 = vadd.f32 %v2999, %v3007
        %v3012 = vadd.f32 %v3000, %v3008
        %s3013 = sld [smem:[#allocation6 + $0x27]]
        %v3014 = vstv %s3013
        %v3015 = vmul.f32 %v3014, %v1320
        %v3016 = vmul.f32 %v3014, %v1327
        %v3017 = vadd.f32 %v3011, %v3015
        %v3018 = vadd.f32 %v3012, %v3016
        %s3019 = sld [smem:[#allocation6 + $0x30]]
        %v3020 = vstv %s3019
        %v3021 = vmul.f32 %v3020, %v1320
        %v3022 = vmul.f32 %v3020, %v1327
        %v3025 = vrot.slane %v3021, 1
        %v3026 = vrot.slane %v3022, 1
        %v3029 = vadd.f32 %v3017, %v3025
        %v3030 = vadd.f32 %v3018, %v3026
        %s3031 = sld [smem:[#allocation6 + $0x39]]
        %v3032 = vstv %s3031
        %v3033 = vmul.f32 %v3032, %v1320
        %v3034 = vmul.f32 %v3032, %v1327
        %v3037 = vrot.slane %v3033, 2
        %v3038 = vrot.slane %v3034, 2
        %v3041 = vadd.f32 %v3029, %v3037
        %v3042 = vadd.f32 %v3030, %v3038
        %s3043 = sld [smem:[#allocation6 + $0x42]]
        %v3044 = vstv %s3043
        %v3045 = vmul.f32 %v3044, %v1320
        %v3046 = vmul.f32 %v3044, %v1327
        %v3049 = vrot.slane %v3045, 3
        %v3050 = vrot.slane %v3046, 3
        %v3053 = vadd.f32 %v3041, %v3049
        %v3054 = vadd.f32 %v3042, %v3050
        %s3055 = sld [smem:[#allocation6 + $0x28]]
        %v3056 = vstv %s3055
        %v3057 = vmul.f32 %v3056, %v1558
        %v3058 = vmul.f32 %v3056, %v1565
        %v3059 = vadd.f32 %v3053, %v3057
        %v3060 = vadd.f32 %v3054, %v3058
        %s3061 = sld [smem:[#allocation6 + $0x31]]
        %v3062 = vstv %s3061
        %v3063 = vmul.f32 %v3062, %v1558
        %v3064 = vmul.f32 %v3062, %v1565
        %v3067 = vrot.slane %v3063, 1
        %v3068 = vrot.slane %v3064, 1
        %v3071 = vadd.f32 %v3059, %v3067
        %v3072 = vadd.f32 %v3060, %v3068
        %s3073 = sld [smem:[#allocation6 + $0x3a]]
        %v3074 = vstv %s3073
        %v3075 = vmul.f32 %v3074, %v1558
        %v3076 = vmul.f32 %v3074, %v1565
        %v3079 = vrot.slane %v3075, 2
        %v3080 = vrot.slane %v3076, 2
        %v3083 = vadd.f32 %v3071, %v3079
        %v3084 = vadd.f32 %v3072, %v3080
        %s3085 = sld [smem:[#allocation6 + $0x43]]
        %v3086 = vstv %s3085
        %v3087 = vmul.f32 %v3086, %v1558
        %v3088 = vmul.f32 %v3086, %v1565
        %v3091 = vrot.slane %v3087, 3
        %v3092 = vrot.slane %v3088, 3
        %v3095 = vadd.f32 %v3083, %v3091
        %v3096 = vadd.f32 %v3084, %v3092
        %s3097 = sld [smem:[#allocation6 + $0x29]]
        %v3098 = vstv %s3097
        %v3099 = vmul.f32 %v3098, %v1788
        %v3100 = vmul.f32 %v3098, %v1795
        %v3101 = vadd.f32 %v3095, %v3099
        %v3102 = vadd.f32 %v3096, %v3100
        %s3103 = sld [smem:[#allocation6 + $0x32]]
        %v3104 = vstv %s3103
        %v3105 = vmul.f32 %v3104, %v1788
        %v3106 = vmul.f32 %v3104, %v1795
        %v3109 = vrot.slane %v3105, 1
        %v3110 = vrot.slane %v3106, 1
        %v3113 = vadd.f32 %v3101, %v3109
        %v3114 = vadd.f32 %v3102, %v3110
        %s3115 = sld [smem:[#allocation6 + $0x3b]]
        %v3116 = vstv %s3115
        %v3117 = vmul.f32 %v3116, %v1788
        %v3118 = vmul.f32 %v3116, %v1795
        %v3121 = vrot.slane %v3117, 2
        %v3122 = vrot.slane %v3118, 2
        %v3125 = vadd.f32 %v3113, %v3121
        %v3126 = vadd.f32 %v3114, %v3122
        %s3127 = sld [smem:[#allocation6 + $0x44]]
        %v3128 = vstv %s3127
        %v3129 = vmul.f32 %v3128, %v1788
        %v3130 = vmul.f32 %v3128, %v1795
        %v3133 = vrot.slane %v3129, 3
        %v3134 = vrot.slane %v3130, 3
        %v3137 = vadd.f32 %v3125, %v3133
        %v3138 = vadd.f32 %v3126, %v3134
        %s3139 = sld [smem:[#allocation6 + $0x2a]]
        %v3140 = vstv %s3139
        %v3141 = vmul.f32 %v3140, %v2002
        %v3142 = vmul.f32 %v3140, %v2009
        %v3143 = vadd.f32 %v3137, %v3141
        %v3144 = vadd.f32 %v3138, %v3142
        %s3145 = sld [smem:[#allocation6 + $0x33]]
        %v3146 = vstv %s3145
        %v3147 = vmul.f32 %v3146, %v2002
        %v3148 = vmul.f32 %v3146, %v2009
        %v3151 = vrot.slane %v3147, 1
        %v3152 = vrot.slane %v3148, 1
        %v3155 = vadd.f32 %v3143, %v3151
        %v3156 = vadd.f32 %v3144, %v3152
        %s3157 = sld [smem:[#allocation6 + $0x3c]]
        %v3158 = vstv %s3157
        %v3159 = vmul.f32 %v3158, %v2002
        %v3160 = vmul.f32 %v3158, %v2009
        %v3163 = vrot.slane %v3159, 2
        %v3164 = vrot.slane %v3160, 2
        %v3167 = vadd.f32 %v3155, %v3163
        %v3168 = vadd.f32 %v3156, %v3164
        %s3169 = sld [smem:[#allocation6 + $0x45]]
        %v3170 = vstv %s3169
        %v3171 = vmul.f32 %v3170, %v2002
        %v3172 = vmul.f32 %v3170, %v2009
        %v3175 = vrot.slane %v3171, 3
        %v3176 = vrot.slane %v3172, 3
        %v3179 = vadd.f32 %v3167, %v3175
        %v3180 = vadd.f32 %v3168, %v3176
        %s3181 = sld [smem:[#allocation6 + $0x2b]]
        %v3182 = vstv %s3181
        %v3183 = vmul.f32 %v3182, %v2240
        %v3184 = vmul.f32 %v3182, %v2247
        %v3185 = vadd.f32 %v3179, %v3183
        %v3186 = vadd.f32 %v3180, %v3184
        %s3187 = sld [smem:[#allocation6 + $0x34]]
        %v3188 = vstv %s3187
        %v3189 = vmul.f32 %v3188, %v2240
        %v3190 = vmul.f32 %v3188, %v2247
        %v3193 = vrot.slane %v3189, 1
        %v3194 = vrot.slane %v3190, 1
        %v3197 = vadd.f32 %v3185, %v3193
        %v3198 = vadd.f32 %v3186, %v3194
        %s3199 = sld [smem:[#allocation6 + $0x3d]]
        %v3200 = vstv %s3199
        %v3201 = vmul.f32 %v3200, %v2240
        %v3202 = vmul.f32 %v3200, %v2247
        %v3205 = vrot.slane %v3201, 2
        %v3206 = vrot.slane %v3202, 2
        %v3209 = vadd.f32 %v3197, %v3205
        %v3210 = vadd.f32 %v3198, %v3206
        %s3211 = sld [smem:[#allocation6 + $0x46]]
        %v3212 = vstv %s3211
        %v3213 = vmul.f32 %v3212, %v2240
        %v3214 = vmul.f32 %v3212, %v2247
        %v3217 = vrot.slane %v3213, 3
        %v3218 = vrot.slane %v3214, 3
        %v3221 = vadd.f32 %v3209, %v3217
        %v3222 = vadd.f32 %v3210, %v3218
        %s3223 = sld [smem:[#allocation6 + $0x2c]]
        %v3224 = vstv %s3223
        %v3225 = vmul.f32 %v3224, %v2470
        %v3226 = vmul.f32 %v3224, %v2477
        %v3227 = vadd.f32 %v3221, %v3225
        %v3228 = vadd.f32 %v3222, %v3226
        %s3229 = sld [smem:[#allocation6 + $0x35]]
        %v3230 = vstv %s3229
        %v3231 = vmul.f32 %v3230, %v2470
        %v3232 = vmul.f32 %v3230, %v2477
        %v3235 = vrot.slane %v3231, 1
        %v3236 = vrot.slane %v3232, 1
        %v3239 = vadd.f32 %v3227, %v3235
        %v3240 = vadd.f32 %v3228, %v3236
        %s3241 = sld [smem:[#allocation6 + $0x3e]]
        %v3242 = vstv %s3241
        %v3243 = vmul.f32 %v3242, %v2470
        %v3244 = vmul.f32 %v3242, %v2477
        %v3247 = vrot.slane %v3243, 2
        %v3248 = vrot.slane %v3244, 2
        %v3251 = vadd.f32 %v3239, %v3247
        %v3252 = vadd.f32 %v3240, %v3248
        %s3253 = sld [smem:[#allocation6 + $0x47]]
        %v3254 = vstv %s3253
        %v3255 = vmul.f32 %v3254, %v2470
        %v3256 = vmul.f32 %v3254, %v2477
        %v3259 = vrot.slane %v3255, 3
        %v3260 = vrot.slane %v3256, 3
        %v3263 = vadd.f32 %v3251, %v3259
        %v3264 = vadd.f32 %v3252, %v3260
        %v3265 = vtanh.pop %v3263
        %v3266 = vtanh.pop %v3264
        %v3269 = vcombine.low %v3265, %v3266
        %v3271 = vunpack.c.l.s4 1966171168
        %v3272 = vunpack.c.0.s8 %v3271
        %v3273 = vlaneseq
        %v3274 = vshrl.u32 %v3273, 7
        %v3275 = vsub.s32 %v3272, %v3274
        %v3276 = vrot.slane %v3269, %v3275
        %v3278 = vunpack.c.l.s4 1966171168
        %v3279 = vunpack.c.0.s8 %v3278
        %v3280 = vlaneseq
        %v3281 = vshrl.u32 %v3280, 7
        %v3282 = vsub.s32 %v3279, %v3281
        %v3283 = vrot.slane %v3276, %v3282
        %s3285 = scalar_lea.vmem %s217, 1
        %3286 = vst.msk [vmem:[%s3285] ss:$4 sm:$0x3] %vm2882, %v3283
        %s3287 = sld [smem:[#allocation7 + $0x2]]
        %v3288 = vstv %s3287
        %v3289 = vadd.f32 %v3288, 0.0
        %s3290 = sld [smem:[#allocation6 + $0x48]]
        %v3291 = vstv %s3290
        %v3292 = vmul.f32 %v3291, %v638
        %v3293 = vmul.f32 %v3291, %v645
        %v3294 = vadd.f32 %v3289, %v3292
        %v3295 = vadd.f32 %v3289, %v3293
        %s3296 = sld [smem:[#allocation6 + $0x51]]
        %v3297 = vstv %s3296
        %v3298 = vmul.f32 %v3297, %v638
        %v3299 = vmul.f32 %v3297, %v645
        %v3302 = vrot.slane %v3298, 1
        %v3303 = vrot.slane %v3299, 1
        %v3306 = vadd.f32 %v3294, %v3302
        %v3307 = vadd.f32 %v3295, %v3303
        %s3308 = sld [smem:[#allocation6 + $0x5a]]
        %v3309 = vstv %s3308
        %v3310 = vmul.f32 %v3309, %v638
        %v3311 = vmul.f32 %v3309, %v645
        %v3314 = vrot.slane %v3310, 2
        %v3315 = vrot.slane %v3311, 2
        %v3318 = vadd.f32 %v3306, %v3314
        %v3319 = vadd.f32 %v3307, %v3315
        %s3320 = sld [smem:[#allocation6 + $0x63]]
        %v3321 = vstv %s3320
        %v3322 = vmul.f32 %v3321, %v638
        %v3323 = vmul.f32 %v3321, %v645
        %v3326 = vrot.slane %v3322, 3
        %v3327 = vrot.slane %v3323, 3
        %v3330 = vadd.f32 %v3318, %v3326
        %v3331 = vadd.f32 %v3319, %v3327
        %s3332 = sld [smem:[#allocation6 + $0x49]]
        %v3333 = vstv %s3332
        %v3334 = vmul.f32 %v3333, %v876
        %v3335 = vmul.f32 %v3333, %v883
        %v3336 = vadd.f32 %v3330, %v3334
        %v3337 = vadd.f32 %v3331, %v3335
        %s3338 = sld [smem:[#allocation6 + $0x52]]
        %v3339 = vstv %s3338
        %v3340 = vmul.f32 %v3339, %v876
        %v3341 = vmul.f32 %v3339, %v883
        %v3344 = vrot.slane %v3340, 1
        %v3345 = vrot.slane %v3341, 1
        %v3348 = vadd.f32 %v3336, %v3344
        %v3349 = vadd.f32 %v3337, %v3345
        %s3350 = sld [smem:[#allocation6 + $0x5b]]
        %v3351 = vstv %s3350
        %v3352 = vmul.f32 %v3351, %v876
        %v3353 = vmul.f32 %v3351, %v883
        %v3356 = vrot.slane %v3352, 2
        %v3357 = vrot.slane %v3353, 2
        %v3360 = vadd.f32 %v3348, %v3356
        %v3361 = vadd.f32 %v3349, %v3357
        %s3362 = sld [smem:[#allocation6 + $0x64]]
        %v3363 = vstv %s3362
        %v3364 = vmul.f32 %v3363, %v876
        %v3365 = vmul.f32 %v3363, %v883
        %v3368 = vrot.slane %v3364, 3
        %v3369 = vrot.slane %v3365, 3
        %v3372 = vadd.f32 %v3360, %v3368
        %v3373 = vadd.f32 %v3361, %v3369
        %s3374 = sld [smem:[#allocation6 + $0x4a]]
        %v3375 = vstv %s3374
        %v3376 = vmul.f32 %v3375, %v1106
        %v3377 = vmul.f32 %v3375, %v1113
        %v3378 = vadd.f32 %v3372, %v3376
        %v3379 = vadd.f32 %v3373, %v3377
        %s3380 = sld [smem:[#allocation6 + $0x53]]
        %v3381 = vstv %s3380
        %v3382 = vmul.f32 %v3381, %v1106
        %v3383 = vmul.f32 %v3381, %v1113
        %v3386 = vrot.slane %v3382, 1
        %v3387 = vrot.slane %v3383, 1
        %v3390 = vadd.f32 %v3378, %v3386
        %v3391 = vadd.f32 %v3379, %v3387
        %s3392 = sld [smem:[#allocation6 + $0x5c]]
        %v3393 = vstv %s3392
        %v3394 = vmul.f32 %v3393, %v1106
        %v3395 = vmul.f32 %v3393, %v1113
        %v3398 = vrot.slane %v3394, 2
        %v3399 = vrot.slane %v3395, 2
        %v3402 = vadd.f32 %v3390, %v3398
        %v3403 = vadd.f32 %v3391, %v3399
        %s3404 = sld [smem:[#allocation6 + $0x65]]
        %v3405 = vstv %s3404
        %v3406 = vmul.f32 %v3405, %v1106
        %v3407 = vmul.f32 %v3405, %v1113
        %v3410 = vrot.slane %v3406, 3
        %v3411 = vrot.slane %v3407, 3
        %v3414 = vadd.f32 %v3402, %v3410
        %v3415 = vadd.f32 %v3403, %v3411
        %s3416 = sld [smem:[#allocation6 + $0x4b]]
        %v3417 = vstv %s3416
        %v3418 = vmul.f32 %v3417, %v1320
        %v3419 = vmul.f32 %v3417, %v1327
        %v3420 = vadd.f32 %v3414, %v3418
        %v3421 = vadd.f32 %v3415, %v3419
        %s3422 = sld [smem:[#allocation6 + $0x54]]
        %v3423 = vstv %s3422
        %v3424 = vmul.f32 %v3423, %v1320
        %v3425 = vmul.f32 %v3423, %v1327
        %v3428 = vrot.slane %v3424, 1
        %v3429 = vrot.slane %v3425, 1
        %v3432 = vadd.f32 %v3420, %v3428
        %v3433 = vadd.f32 %v3421, %v3429
        %s3434 = sld [smem:[#allocation6 + $0x5d]]
        %v3435 = vstv %s3434
        %v3436 = vmul.f32 %v3435, %v1320
        %v3437 = vmul.f32 %v3435, %v1327
        %v3440 = vrot.slane %v3436, 2
        %v3441 = vrot.slane %v3437, 2
        %v3444 = vadd.f32 %v3432, %v3440
        %v3445 = vadd.f32 %v3433, %v3441
        %s3446 = sld [smem:[#allocation6 + $0x66]]
        %v3447 = vstv %s3446
        %v3448 = vmul.f32 %v3447, %v1320
        %v3449 = vmul.f32 %v3447, %v1327
        %v3452 = vrot.slane %v3448, 3
        %v3453 = vrot.slane %v3449, 3
        %v3456 = vadd.f32 %v3444, %v3452
        %v3457 = vadd.f32 %v3445, %v3453
        %s3458 = sld [smem:[#allocation6 + $0x4c]]
        %v3459 = vstv %s3458
        %v3460 = vmul.f32 %v3459, %v1558
        %v3461 = vmul.f32 %v3459, %v1565
        %v3462 = vadd.f32 %v3456, %v3460
        %v3463 = vadd.f32 %v3457, %v3461
        %s3464 = sld [smem:[#allocation6 + $0x55]]
        %v3465 = vstv %s3464
        %v3466 = vmul.f32 %v3465, %v1558
        %v3467 = vmul.f32 %v3465, %v1565
        %v3470 = vrot.slane %v3466, 1
        %v3471 = vrot.slane %v3467, 1
        %v3474 = vadd.f32 %v3462, %v3470
        %v3475 = vadd.f32 %v3463, %v3471
        %s3476 = sld [smem:[#allocation6 + $0x5e]]
        %v3477 = vstv %s3476
        %v3478 = vmul.f32 %v3477, %v1558
        %v3479 = vmul.f32 %v3477, %v1565
        %v3482 = vrot.slane %v3478, 2
        %v3483 = vrot.slane %v3479, 2
        %v3486 = vadd.f32 %v3474, %v3482
        %v3487 = vadd.f32 %v3475, %v3483
        %s3488 = sld [smem:[#allocation6 + $0x67]]
        %v3489 = vstv %s3488
        %v3490 = vmul.f32 %v3489, %v1558
        %v3491 = vmul.f32 %v3489, %v1565
        %v3494 = vrot.slane %v3490, 3
        %v3495 = vrot.slane %v3491, 3
        %v3498 = vadd.f32 %v3486, %v3494
        %v3499 = vadd.f32 %v3487, %v3495
        %s3500 = sld [smem:[#allocation6 + $0x4d]]
        %v3501 = vstv %s3500
        %v3502 = vmul.f32 %v3501, %v1788
        %v3503 = vmul.f32 %v3501, %v1795
        %v3504 = vadd.f32 %v3498, %v3502
        %v3505 = vadd.f32 %v3499, %v3503
        %s3506 = sld [smem:[#allocation6 + $0x56]]
        %v3507 = vstv %s3506
        %v3508 = vmul.f32 %v3507, %v1788
        %v3509 = vmul.f32 %v3507, %v1795
        %v3512 = vrot.slane %v3508, 1
        %v3513 = vrot.slane %v3509, 1
        %v3516 = vadd.f32 %v3504, %v3512
        %v3517 = vadd.f32 %v3505, %v3513
        %s3518 = sld [smem:[#allocation6 + $0x5f]]
        %v3519 = vstv %s3518
        %v3520 = vmul.f32 %v3519, %v1788
        %v3521 = vmul.f32 %v3519, %v1795
        %v3524 = vrot.slane %v3520, 2
        %v3525 = vrot.slane %v3521, 2
        %v3528 = vadd.f32 %v3516, %v3524
        %v3529 = vadd.f32 %v3517, %v3525
        %s3530 = sld [smem:[#allocation6 + $0x68]]
        %v3531 = vstv %s3530
        %v3532 = vmul.f32 %v3531, %v1788
        %v3533 = vmul.f32 %v3531, %v1795
        %v3536 = vrot.slane %v3532, 3
        %v3537 = vrot.slane %v3533, 3
        %v3540 = vadd.f32 %v3528, %v3536
        %v3541 = vadd.f32 %v3529, %v3537
        %s3542 = sld [smem:[#allocation6 + $0x4e]]
        %v3543 = vstv %s3542
        %v3544 = vmul.f32 %v3543, %v2002
        %v3545 = vmul.f32 %v3543, %v2009
        %v3546 = vadd.f32 %v3540, %v3544
        %v3547 = vadd.f32 %v3541, %v3545
        %s3548 = sld [smem:[#allocation6 + $0x57]]
        %v3549 = vstv %s3548
        %v3550 = vmul.f32 %v3549, %v2002
        %v3551 = vmul.f32 %v3549, %v2009
        %v3554 = vrot.slane %v3550, 1
        %v3555 = vrot.slane %v3551, 1
        %v3558 = vadd.f32 %v3546, %v3554
        %v3559 = vadd.f32 %v3547, %v3555
        %s3560 = sld [smem:[#allocation6 + $0x60]]
        %v3561 = vstv %s3560
        %v3562 = vmul.f32 %v3561, %v2002
        %v3563 = vmul.f32 %v3561, %v2009
        %v3566 = vrot.slane %v3562, 2
        %v3567 = vrot.slane %v3563, 2
        %v3570 = vadd.f32 %v3558, %v3566
        %v3571 = vadd.f32 %v3559, %v3567
        %s3572 = sld [smem:[#allocation6 + $0x69]]
        %v3573 = vstv %s3572
        %v3574 = vmul.f32 %v3573, %v2002
        %v3575 = vmul.f32 %v3573, %v2009
        %v3578 = vrot.slane %v3574, 3
        %v3579 = vrot.slane %v3575, 3
        %v3582 = vadd.f32 %v3570, %v3578
        %v3583 = vadd.f32 %v3571, %v3579
        %s3584 = sld [smem:[#allocation6 + $0x4f]]
        %v3585 = vstv %s3584
        %v3586 = vmul.f32 %v3585, %v2240
        %v3587 = vmul.f32 %v3585, %v2247
        %v3588 = vadd.f32 %v3582, %v3586
        %v3589 = vadd.f32 %v3583, %v3587
        %s3590 = sld [smem:[#allocation6 + $0x58]]
        %v3591 = vstv %s3590
        %v3592 = vmul.f32 %v3591, %v2240
        %v3593 = vmul.f32 %v3591, %v2247
        %v3596 = vrot.slane %v3592, 1
        %v3597 = vrot.slane %v3593, 1
        %v3600 = vadd.f32 %v3588, %v3596
        %v3601 = vadd.f32 %v3589, %v3597
        %s3602 = sld [smem:[#allocation6 + $0x61]]
        %v3603 = vstv %s3602
        %v3604 = vmul.f32 %v3603, %v2240
        %v3605 = vmul.f32 %v3603, %v2247
        %v3608 = vrot.slane %v3604, 2
        %v3609 = vrot.slane %v3605, 2
        %v3612 = vadd.f32 %v3600, %v3608
        %v3613 = vadd.f32 %v3601, %v3609
        %s3614 = sld [smem:[#allocation6 + $0x6a]]
        %v3615 = vstv %s3614
        %v3616 = vmul.f32 %v3615, %v2240
        %v3617 = vmul.f32 %v3615, %v2247
        %v3620 = vrot.slane %v3616, 3
        %v3621 = vrot.slane %v3617, 3
        %v3624 = vadd.f32 %v3612, %v3620
        %v3625 = vadd.f32 %v3613, %v3621
        %s3626 = sld [smem:[#allocation6 + $0x50]]
        %v3627 = vstv %s3626
        %v3628 = vmul.f32 %v3627, %v2470
        %v3629 = vmul.f32 %v3627, %v2477
        %v3630 = vadd.f32 %v3624, %v3628
        %v3631 = vadd.f32 %v3625, %v3629
        %s3632 = sld [smem:[#allocation6 + $0x59]]
        %v3633 = vstv %s3632
        %v3634 = vmul.f32 %v3633, %v2470
        %v3635 = vmul.f32 %v3633, %v2477
        %v3638 = vrot.slane %v3634, 1
        %v3639 = vrot.slane %v3635, 1
        %v3642 = vadd.f32 %v3630, %v3638
        %v3643 = vadd.f32 %v3631, %v3639
        %s3644 = sld [smem:[#allocation6 + $0x62]]
        %v3645 = vstv %s3644
        %v3646 = vmul.f32 %v3645, %v2470
        %v3647 = vmul.f32 %v3645, %v2477
        %v3650 = vrot.slane %v3646, 2
        %v3651 = vrot.slane %v3647, 2
        %v3654 = vadd.f32 %v3642, %v3650
        %v3655 = vadd.f32 %v3643, %v3651
        %s3656 = sld [smem:[#allocation6 + $0x6b]]
        %v3657 = vstv %s3656
        %v3658 = vmul.f32 %v3657, %v2470
        %v3659 = vmul.f32 %v3657, %v2477
        %v3662 = vrot.slane %v3658, 3
        %v3663 = vrot.slane %v3659, 3
        %v3666 = vadd.f32 %v3654, %v3662
        %v3667 = vadd.f32 %v3655, %v3663
        %v3668 = vtanh.pop %v3666
        %v3669 = vtanh.pop %v3667
        %v3672 = vcombine.low %v3668, %v3669
        %v3674 = vunpack.c.l.s4 1966171168
        %v3675 = vunpack.c.0.s8 %v3674
        %v3676 = vlaneseq
        %v3677 = vshrl.u32 %v3676, 7
        %v3678 = vsub.s32 %v3675, %v3677
        %v3679 = vrot.slane %v3672, %v3678
        %v3681 = vunpack.c.l.s4 1966171168
        %v3682 = vunpack.c.0.s8 %v3681
        %v3683 = vlaneseq
        %v3684 = vshrl.u32 %v3683, 7
        %v3685 = vsub.s32 %v3682, %v3684
        %v3686 = vrot.slane %v3679, %v3685
        %s3688 = scalar_lea.vmem %s217, 2
        %3689 = vst.msk [vmem:[%s3688] ss:$4 sm:$0x3] %vm2882, %v3686
        %p3690 = scmp.lt.s32.totalorder %s19, 1
        %s3691 = scalar_select %p3690, %s19, 1
        %s3692 = smul.addr %s3691, 2
        %s3693 = smul.addr %s3692, 4
        %s3694 = scalar_lea.vmem %s3, %s3693
        // Predicated region
        $region45: #{tpu_custom_call.1} parent=31 // pred_check
          %p3695 = pneg %p105
        $region46: #{tpu_custom_call.1} parent=31 // pred_check_branch
          %3697 = sbr.rel (%p3695) target = $region48
        $region47: #{tpu_custom_call.1} parent=31 // pred_region
          _
        $region48: #{tpu_custom_call.1} parent=31 // pred_fallthru
          _
      $region32: #{tpu_custom_call.1} parent=5 // pred_fallthru
        _
      %p3698 = scmp.le.s32.totalorder 2, %s14
      // Predicated region
      $region49: #{tpu_custom_call.1} parent=5 // pred_check
        %p3699 = pneg %p3698
      $region50: #{tpu_custom_call.1} parent=5 // pred_check_branch
        %3701 = sbr.rel (%p3699) target = $region52
      $region51: #{tpu_custom_call.1} parent=5 // pred_region
        %s3702 = ssub.s32 %s14, 2
        // Predicated region
        $region53: #{tpu_custom_call.1} parent=51 // pred_check
          %p3703 = pneg %p111
        $region54: #{tpu_custom_call.1} parent=51 // pred_check_branch
          %3705 = sbr.rel (%p3703) target = $region56
        $region55: #{tpu_custom_call.1} parent=51 // pred_region
          %p3706 = scmp.lt.s32.totalorder %s20, 1
          %s3707 = scalar_select %p3706, %s20, 1
          %s3708 = smul.addr %s3707, 2
          %s3709 = smul.addr %s3708, 4
          %s3710 = scalar_lea.vmem %s3, %s3709
        $region56: #{tpu_custom_call.1} parent=51 // pred_fallthru
          _
      $region52: #{tpu_custom_call.1} parent=5 // pred_fallthru
        _
    $region6: #{tpu_custom_call.1} parent=1 // loop_footer
      %s18 = sadd.s32 1, %s14
    $region7: #{tpu_custom_call.1} parent=1 // loop_footer_branch
      %13 = sbr.rel target = $region3
    $region8: #{tpu_custom_call.1} parent=1 // loop_exit
      _
    %3711 = vsyncpa [#allocation4], 1
    %s3712 = scalar_lea.sflag [#allocation4], 1
    %3713 = vsyncpa %s3712, 1
    %3714 = vsyncpa [#allocation5], 1
    %s3715 = scalar_lea.sflag [#allocation5], 1
    %3716 = vsyncpa %s3715, 1
    %3717 = vsyncpa [#allocation8], 1

</llo_original>
